<compile_context>
chip_gen: v6e
topology: v6e:2x2x1
jax: 0.10.0
libtpu: 0.0.40
codegen_flags: <defaults>
</compile_context>

<pallas_src>
import jax
import jax.numpy as jnp
from jax.experimental import pallas as pl
from jax.experimental.pallas import tpu as pltpu


# ----------------------------------------------------------------------------
# Glue: per-ROI separable bilinear interpolation matrices (plain JAX).
# ----------------------------------------------------------------------------
def _interp_matrix(start, roi_len, pooled, sampling_ratio, length):
    """A[r, p, h] = averaged bilinear weight of source row/col h for output bin
    p of ROI r (sample count folded in; matches CUDA roi_align, aligned=False)."""
    S = int(sampling_ratio)
    bin_size = roi_len / float(pooled)                                   # (R,)
    p = jnp.arange(pooled, dtype=jnp.float32)                            # (P,)
    i = jnp.arange(S, dtype=jnp.float32)                                 # (S,)
    # sample coordinate y = start + p*bin + (i+0.5)*bin/S   -> (R, P, S)
    y = (start[:, None, None]
         + p[None, :, None] * bin_size[:, None, None]
         + (i[None, None, :] + 0.5) * bin_size[:, None, None] / float(S))

    valid = (y >= -1.0) & (y <= float(length))
    yc = jnp.maximum(y, 0.0)
    y_low = jnp.floor(yc).astype(jnp.int32)
    at_edge = y_low >= (length - 1)
    y_low = jnp.where(at_edge, length - 1, y_low)
    y_high = jnp.where(at_edge, length - 1, y_low + 1)
    yc = jnp.where(at_edge, y_low.astype(jnp.float32), yc)
    ly = yc - y_low.astype(jnp.float32)
    hy = 1.0 - ly

    h = jnp.arange(length, dtype=jnp.int32)                              # (L,)
    w = (hy[..., None] * (h[None, None, None, :] == y_low[..., None])
         + ly[..., None] * (h[None, None, None, :] == y_high[..., None]))
    w = jnp.where(valid[..., None], w, 0.0)
    return w.sum(axis=2) / float(S)                                      # (R,P,L)


# ----------------------------------------------------------------------------
# Pallas kernel: one group of G same-image ROIs per grid step.
# ----------------------------------------------------------------------------
def _roi_align_kernel(gbidx_ref, feat_ref, ay_ref, ax_ref, out_ref):
    f = feat_ref[0]              # (H, W, C)    channels-last, C on lanes
    ay = ay_ref[0]               # (G*PH, H)    stacked row-interp matrices
    ax = ax_ref[0]               # (G, PW, W)   per-ROI col-interp matrices
    g, pw, _ = ax.shape
    ph = ay.shape[0] // g

    # Stage 1: one wide MXU matmul (M = G*PH rows) against the shared feature
    # map.  Output stays in the compute dtype (MXU accumulates f32 internally),
    # so there is no separate astype pass over the (G*PH, W, C) intermediate.
    t = jnp.einsum('mh,hwc->mwc', ay, f)             # (G*PH, W, C)
    t = t.reshape(g, ph, t.shape[1], t.shape[2])     # (G, PH, W, C)

    # Stage 2: per output row p, a batched (PW, W) @ (W, C) matmul over the G
    # ROIs of the group.  t[:, p] is a major-axis slice (no relayout) and its
    # (W, C) minor layout is already the natural MXU RHS layout.
    for p in range(ph):
        r = jnp.einsum('gqw,gwc->gqc', ax, t[:, p],
                       preferred_element_type=jnp.float32)   # (G, PW, C)
        out_ref[0, :, p] = r.astype(out_ref.dtype)


def roi_align(feats, rois, output_size, spatial_scale, sampling_ratio,
              compute_dtype=jnp.float32, group_size=None):
    """ROIAlign forward.

    feats: (N, C, H, W) float32
    rois : (R, 5) float32 rows [batch_idx, x1, y1, x2, y2]
    returns (R, C, pooled_h, pooled_w) float32
    """
    N, C, H, W = feats.shape
    R = rois.shape[0]
    if isinstance(output_size, (tuple, list)):
        ph, pw = int(output_size[0]), int(output_size[1])
    else:
        ph = pw = int(output_size)
    # TODO(synk): sampling_ratio <= 0 (torchvision's adaptive default -1) and
    # aligned=True semantics are not implemented; this matches the
    # maskrcnn-benchmark CUDA kernel with a fixed positive sampling_ratio.
    assert sampling_ratio > 0, "only static sampling_ratio > 0 is supported"

    batch_idx = rois[:, 0].astype(jnp.int32)
    x1 = rois[:, 1] * spatial_scale
    y1 = rois[:, 2] * spatial_scale
    x2 = rois[:, 3] * spatial_scale
    y2 = rois[:, 4] * spatial_scale
    roi_w = jnp.maximum(x2 - x1, 1.0)
    roi_h = jnp.maximum(y2 - y1, 1.0)

    a_y = _interp_matrix(y1, roi_h, ph, sampling_ratio, H)   # (R, PH, H) f32
    a_x = _interp_matrix(x1, roi_w, pw, sampling_ratio, W)   # (R, PW, W) f32

    # Lane-dense channels: pad C to a multiple of 128 only when cheap
    # (C >= 128); for tiny C the padding overhead would dominate.
    if C >= 128 and C % 128 != 0:
        Cp = ((C + 127) // 128) * 128
    else:
        Cp = C
    item = jnp.dtype(compute_dtype).itemsize

    # Group size: target >= ~256 MXU rows (G*PH) for v6e/v7x (also fine on
    # v5e), but cap so the stage-1 (G*PH, W, C) temp stays ~16 MiB.
    if group_size is None:
        g_rows = -(-256 // ph)
        g_vmem = max(1, (16 << 20) // max(1, ph * W * Cp * item))
        group_size = max(1, min(g_rows, g_vmem))
    G = int(max(1, min(group_size, R)))

    # Sort ROIs by image and pack them into groups of G from the same image
    # (last group per image zero-padded).  All index math is static-shape.
    order = jnp.argsort(batch_idx)
    inv_order = jnp.argsort(order)
    b_sorted = batch_idx[order]
    a_y_s = a_y[order].astype(compute_dtype)
    a_x_s = a_x[order].astype(compute_dtype)

    first_idx = jnp.searchsorted(b_sorted, b_sorted, side='left').astype(jnp.int32)
    rank = jnp.arange(R, dtype=jnp.int32) - first_idx        # rank within image
    slot = rank % G
    local_group = rank // G
    counts = jnp.bincount(b_sorted, length=N).astype(jnp.int32)
    groups_per_image = (counts + G - 1) // G
    group_start = jnp.concatenate(
        [jnp.zeros((1,), jnp.int32),
         jnp.cumsum(groups_per_image)[:-1].astype(jnp.int32)])
    group_id = group_start[b_sorted] + local_group

    NG = R // G + N            # static upper bound on the number of groups

    # Padding groups get image N-1 (same block as the tail -> no extra DMA).
    group_bidx = jnp.full((NG,), N - 1, jnp.int32).at[group_id].set(b_sorted)
    ay_g = jnp.zeros((NG, G, ph, H), compute_dtype).at[group_id, slot].set(a_y_s)
    ax_g = jnp.zeros((NG, G, pw, W), compute_dtype).at[group_id, slot].set(a_x_s)
    ay_g = ay_g.reshape(NG, G * ph, H)

    # TODO(synk): produce features in NHWC/compute_dtype upstream (fuse into
    # the producing conv) instead of materializing this transpose+cast here.
    feats_nhwc = jnp.transpose(feats, (0, 2, 3, 1)).astype(compute_dtype)
    if Cp != C:
        feats_nhwc = jnp.pad(feats_nhwc, ((0, 0), (0, 0), (0, 0), (0, Cp - C)))

    grid_spec = pltpu.PrefetchScalarGridSpec(
        num_scalar_prefetch=1,
        grid=(NG,),
        in_specs=[
            # Shared feature map of the group's image, selected via prefetched
            # per-group batch index (groups are image-sorted, so the block
            # index rarely changes and the redundant DMA is skipped).
            # TODO(synk): pipeline_mode=pl.Buffered(1) here (v7x VMEM) and
            # ROI-row-window DMA for very large FPN levels.
            pl.BlockSpec((1, H, W, Cp), lambda g, bidx: (bidx[g], 0, 0, 0)),
            pl.BlockSpec((1, G * ph, H), lambda g, bidx: (g, 0, 0)),
            pl.BlockSpec((1, G, pw, W), lambda g, bidx: (g, 0, 0, 0)),
        ],
        out_specs=pl.BlockSpec((1, G, ph, pw, Cp),
                               lambda g, bidx: (g, 0, 0, 0, 0)),
    )

    # VMEM budget from actual block sizes; clamp to 48 MiB so it is safe on
    # v7x (64 MiB/TC).  Raise toward ~100 MiB on v5e/v6e for bigger groups.
    feat_blk = H * W * Cp * item
    ay_blk = G * ph * H * item
    ax_blk = G * pw * W * item
    out_blk = G * ph * pw * Cp * 4
    t_tmp = G * ph * W * Cp * item
    needed = 2 * (feat_blk + ay_blk + ax_blk + out_blk) + t_tmp + (4 << 20)
    vmem_limit = int(min(max(needed, 32 << 20), 48 << 20))

    cost = pl.CostEstimate(
        flops=int(2 * NG * G * ph * W * Cp * (H + pw)),
        transcendentals=0,
        bytes_accessed=int(feats_nhwc.size * item + ay_g.size * item
                           + ax_g.size * item + NG * G * ph * pw * Cp * 4
                           + NG * 4))

    # NOTE: "parallel" shards groups across the 2 TCs on v7x; images whose
    # groups straddle the split re-DMA their feature map once per core.
    out_g = pl.pallas_call(
        _roi_align_kernel,
        out_shape=jax.ShapeDtypeStruct((NG, G, ph, pw, Cp), jnp.float32),
        grid_spec=grid_spec,
        compiler_params=pltpu.CompilerParams(
            dimension_semantics=("parallel",),
            vmem_limit_bytes=vmem_limit),
        cost_estimate=cost,
    )(group_bidx, feats_nhwc, ay_g, ax_g)

    # Gather per-ROI results, restore original ROI order, back to PyTorch
    # layout (R, C, PH, PW); drop channel padding if any.
    out_sorted = out_g[group_id, slot]                    # (R, PH, PW, Cp)
    out = out_sorted[inv_order]
    out = jnp.transpose(out, (0, 3, 1, 2))                # (R, Cp, PH, PW)
    return out[:, :C]


# Pure-JAX reference using the same separable formulation (sanity check).
def _roi_align_ref(feats, rois, output_size, spatial_scale, sampling_ratio):
    N, C, H, W = feats.shape
    ph = pw = int(output_size)
    batch_idx = rois[:, 0].astype(jnp.int32)
    x1 = rois[:, 1] * spatial_scale
    y1 = rois[:, 2] * spatial_scale
    x2 = rois[:, 3] * spatial_scale
    y2 = rois[:, 4] * spatial_scale
    roi_w = jnp.maximum(x2 - x1, 1.0)
    roi_h = jnp.maximum(y2 - y1, 1.0)
    a_y = _interp_matrix(y1, roi_h, ph, sampling_ratio, H)
    a_x = _interp_matrix(x1, roi_w, pw, sampling_ratio, W)
    f = feats[batch_idx]                                     # (R, C, H, W)
    return jnp.einsum('rph,rchw,rqw->rcpq', a_y, f, a_x)


if __name__ == "__main__":
    # Small deterministic example: batch=2, channels=4, spatial=16x16, 6 ROIs.
    N, C, H, W = 2, 4, 16, 16
    R = 6
    output_size = 7
    spatial_scale = 0.5        # ROIs live in a 32x32 image space
    sampling_ratio = 2

    key = jax.random.PRNGKey(0)
    k_feat, k_bidx, k_xy, k_wh = jax.random.split(key, 4)

    feats = jax.random.normal(k_feat, (N, C, H, W), dtype=jnp.float32)
    bidx = jax.random.randint(k_bidx, (R,), 0, N).astype(jnp.float32)
    xy = jax.random.uniform(k_xy, (R, 2), minval=0.0, maxval=18.0)
    wh = jax.random.uniform(k_wh, (R, 2), minval=4.0, maxval=12.0)
    x1y1 = xy
    x2y2 = xy + wh
    rois = jnp.concatenate(
        [bidx[:, None], x1y1[:, :1], x1y1[:, 1:], x2y2[:, :1], x2y2[:, 1:]],
        axis=1).astype(jnp.float32)

    ref = jax.block_until_ready(
        _roi_align_ref(feats, rois, output_size, spatial_scale, sampling_ratio))

    # Exact-precision path (f32 compute, auto group size) -> tight tolerance.
    out_f32 = jax.block_until_ready(
        roi_align(feats, rois, output_size, spatial_scale, sampling_ratio,
                  compute_dtype=jnp.float32))
    assert out_f32.shape == (R, C, output_size, output_size)
    assert jnp.allclose(out_f32, ref, atol=1e-5, rtol=1e-5)

    # Small explicit group size -> exercises multi-group-per-image + padding.
    out_g2 = jax.block_until_ready(
        roi_align(feats, rois, output_size, spatial_scale, sampling_ratio,
                  compute_dtype=jnp.float32, group_size=2))
    assert jnp.allclose(out_g2, ref, atol=1e-5, rtol=1e-5)

    # Fast path (bf16 inputs, f32 accumulation) -> loose tolerance.
    out_bf16 = jax.block_until_ready(
        roi_align(feats, rois, output_size, spatial_scale, sampling_ratio,
                  compute_dtype=jnp.bfloat16))
    assert out_bf16.shape == (R, C, output_size, output_size)
    assert jnp.allclose(out_bf16, ref, atol=1e-1, rtol=1e-1)

    print("KERNEL_OK")
</pallas_src>

<mosaic_0001>
module attributes {stable_mosaic.version = 11 : i64} {
  func.func @_roi_align_kernel(%arg0: i32, %arg1: memref<3xi32, #tpu.memory_space<smem>>, %arg2: memref<1x16x16x4xf32, #tpu.memory_space<vmem>>, %arg3: memref<1x42x16xf32, #tpu.memory_space<vmem>>, %arg4: memref<1x6x7x16xf32, #tpu.memory_space<vmem>>, %arg5: memref<1x6x7x7x4xf32, #tpu.memory_space<vmem>>) attributes {dimension_semantics = [#tpu.dimension_semantics<parallel>], iteration_bounds = array<i64: 3>, scalar_prefetch = 1 : i64, scratch_operands = 0 : i64, tpu.core_type = #tpu.core_type<tc>, window_params = [{transform_indices = @transform_0, window_bounds = array<i64: 1, 16, 16, 4>}, {transform_indices = @transform_1, window_bounds = array<i64: 1, 42, 16>}, {transform_indices = @transform_2, window_bounds = array<i64: 1, 6, 7, 16>}, {transform_indices = @transform_3, window_bounds = array<i64: 1, 6, 7, 7, 4>}]} {
    %c0 = arith.constant 0 : index
    %c0_0 = arith.constant 0 : index
    %c0_1 = arith.constant 0 : index
    %c0_2 = arith.constant 0 : index
    %0 = vector.load %arg2[%c0, %c0_0, %c0_1, %c0_2] : memref<1x16x16x4xf32, #tpu.memory_space<vmem>>, vector<1x16x16x4xf32>
    %1 = vector.shape_cast %0 : vector<1x16x16x4xf32> to vector<16x16x4xf32>
    %c0_3 = arith.constant 0 : index
    %c0_4 = arith.constant 0 : index
    %c0_5 = arith.constant 0 : index
    %2 = vector.load %arg3[%c0_3, %c0_4, %c0_5] : memref<1x42x16xf32, #tpu.memory_space<vmem>>, vector<1x42x16xf32>
    %3 = vector.shape_cast %2 : vector<1x42x16xf32> to vector<42x16xf32>
    %c0_6 = arith.constant 0 : index
    %c0_7 = arith.constant 0 : index
    %c0_8 = arith.constant 0 : index
    %c0_9 = arith.constant 0 : index
    %4 = vector.load %arg4[%c0_6, %c0_7, %c0_8, %c0_9] : memref<1x6x7x16xf32, #tpu.memory_space<vmem>>, vector<1x6x7x16xf32>
    %5 = vector.shape_cast %4 : vector<1x6x7x16xf32> to vector<6x7x16xf32>
    "tpu.trace_start"() <{level = 10 : i32, message = "mh,hwc->mwc"}> : () -> ()
    %cst = arith.constant dense<0.000000e+00> : vector<42x16x4xf32>
    %6 = tpu.matmul %3, %1, %cst {dimension_numbers = #tpu.dot_dimension_numbers<[1], [0], [0], [1, 2], [0, 0, 1, 1, 1, 2], [], []>} : vector<42x16xf32>, vector<16x16x4xf32>, vector<42x16x4xf32> -> vector<42x16x4xf32>
    "tpu.trace_stop"() : () -> ()
    %7 = vector.shape_cast %6 : vector<42x16x4xf32> to vector<6x7x16x4xf32>
    %8 = vector.extract_strided_slice %7 {offsets = [0, 0, 0, 0], sizes = [6, 1, 16, 4], strides = [1, 1, 1, 1]} : vector<6x7x16x4xf32> to vector<6x1x16x4xf32>
    %9 = vector.shape_cast %8 : vector<6x1x16x4xf32> to vector<6x16x4xf32>
    "tpu.trace_start"() <{level = 10 : i32, message = "gqw,gwc->gqc"}> : () -> ()
    %cst_10 = arith.constant dense<0.000000e+00> : vector<6x7x4xf32>
    %10 = tpu.matmul %5, %9, %cst_10 {dimension_numbers = #tpu.dot_dimension_numbers<[2], [1], [1], [2], [0, 0, 0, 1, 1, 2], [0], [0]>} : vector<6x7x16xf32>, vector<6x16x4xf32>, vector<6x7x4xf32> -> vector<6x7x4xf32>
    "tpu.trace_stop"() : () -> ()
    %c0_11 = arith.constant 0 : index
    %c0_12 = arith.constant 0 : index
    %c0_13 = arith.constant 0 : index
    %c0_14 = arith.constant 0 : index
    %c0_15 = arith.constant 0 : index
    %11 = vector.load %arg5[%c0_11, %c0_12, %c0_13, %c0_14, %c0_15] : memref<1x6x7x7x4xf32, #tpu.memory_space<vmem>>, vector<1x6x1x7x4xf32>
    %12 = vector.shape_cast %11 : vector<1x6x1x7x4xf32> to vector<6x7x4xf32>
    %13 = vector.shape_cast %10 : vector<6x7x4xf32> to vector<1x6x1x7x4xf32>
    tpu.vector_store %arg5[%c0_11, %c0_12, %c0_13, %c0_14, %c0_15], %13 {strides = array<i32>} : memref<1x6x7x7x4xf32, #tpu.memory_space<vmem>>, vector<1x6x1x7x4xf32>,
    %14 = vector.extract_strided_slice %7 {offsets = [0, 1, 0, 0], sizes = [6, 1, 16, 4], strides = [1, 1, 1, 1]} : vector<6x7x16x4xf32> to vector<6x1x16x4xf32>
    %15 = vector.shape_cast %14 : vector<6x1x16x4xf32> to vector<6x16x4xf32>
    "tpu.trace_start"() <{level = 10 : i32, message = "gqw,gwc->gqc"}> : () -> ()
    %cst_16 = arith.constant dense<0.000000e+00> : vector<6x7x4xf32>
    %16 = tpu.matmul %5, %15, %cst_16 {dimension_numbers = #tpu.dot_dimension_numbers<[2], [1], [1], [2], [0, 0, 0, 1, 1, 2], [0], [0]>} : vector<6x7x16xf32>, vector<6x16x4xf32>, vector<6x7x4xf32> -> vector<6x7x4xf32>
    "tpu.trace_stop"() : () -> ()
    %c0_17 = arith.constant 0 : index
    %c0_18 = arith.constant 0 : index
    %c1 = arith.constant 1 : index
    %c0_19 = arith.constant 0 : index
    %c0_20 = arith.constant 0 : index
    %17 = vector.load %arg5[%c0_17, %c0_18, %c1, %c0_19, %c0_20] : memref<1x6x7x7x4xf32, #tpu.memory_space<vmem>>, vector<1x6x1x7x4xf32>
    %18 = vector.shape_cast %17 : vector<1x6x1x7x4xf32> to vector<6x7x4xf32>
    %19 = vector.shape_cast %16 : vector<6x7x4xf32> to vector<1x6x1x7x4xf32>
    tpu.vector_store %arg5[%c0_17, %c0_18, %c1, %c0_19, %c0_20], %19 {strides = array<i32>} : memref<1x6x7x7x4xf32, #tpu.memory_space<vmem>>, vector<1x6x1x7x4xf32>,
    %20 = vector.extract_strided_slice %7 {offsets = [0, 2, 0, 0], sizes = [6, 1, 16, 4], strides = [1, 1, 1, 1]} : vector<6x7x16x4xf32> to vector<6x1x16x4xf32>
    %21 = vector.shape_cast %20 : vector<6x1x16x4xf32> to vector<6x16x4xf32>
    "tpu.trace_start"() <{level = 10 : i32, message = "gqw,gwc->gqc"}> : () -> ()
    %cst_21 = arith.constant dense<0.000000e+00> : vector<6x7x4xf32>
    %22 = tpu.matmul %5, %21, %cst_21 {dimension_numbers = #tpu.dot_dimension_numbers<[2], [1], [1], [2], [0, 0, 0, 1, 1, 2], [0], [0]>} : vector<6x7x16xf32>, vector<6x16x4xf32>, vector<6x7x4xf32> -> vector<6x7x4xf32>
    "tpu.trace_stop"() : () -> ()
    %c0_22 = arith.constant 0 : index
    %c0_23 = arith.constant 0 : index
    %c2 = arith.constant 2 : index
    %c0_24 = arith.constant 0 : index
    %c0_25 = arith.constant 0 : index
    %23 = vector.load %arg5[%c0_22, %c0_23, %c2, %c0_24, %c0_25] : memref<1x6x7x7x4xf32, #tpu.memory_space<vmem>>, vector<1x6x1x7x4xf32>
    %24 = vector.shape_cast %23 : vector<1x6x1x7x4xf32> to vector<6x7x4xf32>
    %25 = vector.shape_cast %22 : vector<6x7x4xf32> to vector<1x6x1x7x4xf32>
    tpu.vector_store %arg5[%c0_22, %c0_23, %c2, %c0_24, %c0_25], %25 {strides = array<i32>} : memref<1x6x7x7x4xf32, #tpu.memory_space<vmem>>, vector<1x6x1x7x4xf32>,
    %26 = vector.extract_strided_slice %7 {offsets = [0, 3, 0, 0], sizes = [6, 1, 16, 4], strides = [1, 1, 1, 1]} : vector<6x7x16x4xf32> to vector<6x1x16x4xf32>
    %27 = vector.shape_cast %26 : vector<6x1x16x4xf32> to vector<6x16x4xf32>
    "tpu.trace_start"() <{level = 10 : i32, message = "gqw,gwc->gqc"}> : () -> ()
    %cst_26 = arith.constant dense<0.000000e+00> : vector<6x7x4xf32>
    %28 = tpu.matmul %5, %27, %cst_26 {dimension_numbers = #tpu.dot_dimension_numbers<[2], [1], [1], [2], [0, 0, 0, 1, 1, 2], [0], [0]>} : vector<6x7x16xf32>, vector<6x16x4xf32>, vector<6x7x4xf32> -> vector<6x7x4xf32>
    "tpu.trace_stop"() : () -> ()
    %c0_27 = arith.constant 0 : index
    %c0_28 = arith.constant 0 : index
    %c3 = arith.constant 3 : index
    %c0_29 = arith.constant 0 : index
    %c0_30 = arith.constant 0 : index
    %29 = vector.load %arg5[%c0_27, %c0_28, %c3, %c0_29, %c0_30] : memref<1x6x7x7x4xf32, #tpu.memory_space<vmem>>, vector<1x6x1x7x4xf32>
    %30 = vector.shape_cast %29 : vector<1x6x1x7x4xf32> to vector<6x7x4xf32>
    %31 = vector.shape_cast %28 : vector<6x7x4xf32> to vector<1x6x1x7x4xf32>
    tpu.vector_store %arg5[%c0_27, %c0_28, %c3, %c0_29, %c0_30], %31 {strides = array<i32>} : memref<1x6x7x7x4xf32, #tpu.memory_space<vmem>>, vector<1x6x1x7x4xf32>,
    %32 = vector.extract_strided_slice %7 {offsets = [0, 4, 0, 0], sizes = [6, 1, 16, 4], strides = [1, 1, 1, 1]} : vector<6x7x16x4xf32> to vector<6x1x16x4xf32>
    %33 = vector.shape_cast %32 : vector<6x1x16x4xf32> to vector<6x16x4xf32>
    "tpu.trace_start"() <{level = 10 : i32, message = "gqw,gwc->gqc"}> : () -> ()
    %cst_31 = arith.constant dense<0.000000e+00> : vector<6x7x4xf32>
    %34 = tpu.matmul %5, %33, %cst_31 {dimension_numbers = #tpu.dot_dimension_numbers<[2], [1], [1], [2], [0, 0, 0, 1, 1, 2], [0], [0]>} : vector<6x7x16xf32>, vector<6x16x4xf32>, vector<6x7x4xf32> -> vector<6x7x4xf32>
    "tpu.trace_stop"() : () -> ()
    %c0_32 = arith.constant 0 : index
    %c0_33 = arith.constant 0 : index
    %c4 = arith.constant 4 : index
    %c0_34 = arith.constant 0 : index
    %c0_35 = arith.constant 0 : index
    %35 = vector.load %arg5[%c0_32, %c0_33, %c4, %c0_34, %c0_35] : memref<1x6x7x7x4xf32, #tpu.memory_space<vmem>>, vector<1x6x1x7x4xf32>
    %36 = vector.shape_cast %35 : vector<1x6x1x7x4xf32> to vector<6x7x4xf32>
    %37 = vector.shape_cast %34 : vector<6x7x4xf32> to vector<1x6x1x7x4xf32>
    tpu.vector_store %arg5[%c0_32, %c0_33, %c4, %c0_34, %c0_35], %37 {strides = array<i32>} : memref<1x6x7x7x4xf32, #tpu.memory_space<vmem>>, vector<1x6x1x7x4xf32>,
    %38 = vector.extract_strided_slice %7 {offsets = [0, 5, 0, 0], sizes = [6, 1, 16, 4], strides = [1, 1, 1, 1]} : vector<6x7x16x4xf32> to vector<6x1x16x4xf32>
    %39 = vector.shape_cast %38 : vector<6x1x16x4xf32> to vector<6x16x4xf32>
    "tpu.trace_start"() <{level = 10 : i32, message = "gqw,gwc->gqc"}> : () -> ()
    %cst_36 = arith.constant dense<0.000000e+00> : vector<6x7x4xf32>
    %40 = tpu.matmul %5, %39, %cst_36 {dimension_numbers = #tpu.dot_dimension_numbers<[2], [1], [1], [2], [0, 0, 0, 1, 1, 2], [0], [0]>} : vector<6x7x16xf32>, vector<6x16x4xf32>, vector<6x7x4xf32> -> vector<6x7x4xf32>
    "tpu.trace_stop"() : () -> ()
    %c0_37 = arith.constant 0 : index
    %c0_38 = arith.constant 0 : index
    %c5 = arith.constant 5 : index
    %c0_39 = arith.constant 0 : index
    %c0_40 = arith.constant 0 : index
    %41 = vector.load %arg5[%c0_37, %c0_38, %c5, %c0_39, %c0_40] : memref<1x6x7x7x4xf32, #tpu.memory_space<vmem>>, vector<1x6x1x7x4xf32>
    %42 = vector.shape_cast %41 : vector<1x6x1x7x4xf32> to vector<6x7x4xf32>
    %43 = vector.shape_cast %40 : vector<6x7x4xf32> to vector<1x6x1x7x4xf32>
    tpu.vector_store %arg5[%c0_37, %c0_38, %c5, %c0_39, %c0_40], %43 {strides = array<i32>} : memref<1x6x7x7x4xf32, #tpu.memory_space<vmem>>, vector<1x6x1x7x4xf32>,
    %44 = vector.extract_strided_slice %7 {offsets = [0, 6, 0, 0], sizes = [6, 1, 16, 4], strides = [1, 1, 1, 1]} : vector<6x7x16x4xf32> to vector<6x1x16x4xf32>
    %45 = vector.shape_cast %44 : vector<6x1x16x4xf32> to vector<6x16x4xf32>
    "tpu.trace_start"() <{level = 10 : i32, message = "gqw,gwc->gqc"}> : () -> ()
    %cst_41 = arith.constant dense<0.000000e+00> : vector<6x7x4xf32>
    %46 = tpu.matmul %5, %45, %cst_41 {dimension_numbers = #tpu.dot_dimension_numbers<[2], [1], [1], [2], [0, 0, 0, 1, 1, 2], [0], [0]>} : vector<6x7x16xf32>, vector<6x16x4xf32>, vector<6x7x4xf32> -> vector<6x7x4xf32>
    "tpu.trace_stop"() : () -> ()
    %c0_42 = arith.constant 0 : index
    %c0_43 = arith.constant 0 : index
    %c6 = arith.constant 6 : index
    %c0_44 = arith.constant 0 : index
    %c0_45 = arith.constant 0 : index
    %47 = vector.load %arg5[%c0_42, %c0_43, %c6, %c0_44, %c0_45] : memref<1x6x7x7x4xf32, #tpu.memory_space<vmem>>, vector<1x6x1x7x4xf32>
    %48 = vector.shape_cast %47 : vector<1x6x1x7x4xf32> to vector<6x7x4xf32>
    %49 = vector.shape_cast %46 : vector<6x7x4xf32> to vector<1x6x1x7x4xf32>
    tpu.vector_store %arg5[%c0_42, %c0_43, %c6, %c0_44, %c0_45], %49 {strides = array<i32>} : memref<1x6x7x7x4xf32, #tpu.memory_space<vmem>>, vector<1x6x1x7x4xf32>,
    return
  }
  func.func @transform_0(%arg0: i32, %arg1: memref<3xi32, #tpu.memory_space<smem>>) -> (i32, i32, i32, i32) {
    %0 = arith.index_cast %arg0 : i32 to index
    %1 = memref.load %arg1[%0] : memref<3xi32, #tpu.memory_space<smem>>
    %c0_i32 = arith.constant 0 : i32
    %c0_i32_0 = arith.constant 0 : i32
    %c0_i32_1 = arith.constant 0 : i32
    %c0_i32_2 = arith.constant 0 : i32
    return %1, %c0_i32, %c0_i32_0, %c0_i32_1 : i32, i32, i32, i32
  }
  func.func @transform_1(%arg0: i32, %arg1: memref<3xi32, #tpu.memory_space<smem>>) -> (i32, i32, i32) {
    %c0_i32 = arith.constant 0 : i32
    %c0_i32_0 = arith.constant 0 : i32
    %c0_i32_1 = arith.constant 0 : i32
    return %arg0, %c0_i32, %c0_i32_0 : i32, i32, i32
  }
  func.func @transform_2(%arg0: i32, %arg1: memref<3xi32, #tpu.memory_space<smem>>) -> (i32, i32, i32, i32) {
    %c0_i32 = arith.constant 0 : i32
    %c0_i32_0 = arith.constant 0 : i32
    %c0_i32_1 = arith.constant 0 : i32
    %c0_i32_2 = arith.constant 0 : i32
    return %arg0, %c0_i32, %c0_i32_0, %c0_i32_1 : i32, i32, i32, i32
  }
  func.func @transform_3(%arg0: i32, %arg1: memref<3xi32, #tpu.memory_space<smem>>) -> (i32, i32, i32, i32, i32) {
    %c0_i32 = arith.constant 0 : i32
    %c0_i32_0 = arith.constant 0 : i32
    %c0_i32_1 = arith.constant 0 : i32
    %c0_i32_2 = arith.constant 0 : i32
    %c0_i32_3 = arith.constant 0 : i32
    return %arg0, %c0_i32, %c0_i32_0, %c0_i32_1, %c0_i32_2 : i32, i32, i32, i32, i32
  }
}

</mosaic_0001>

<llo_original>
// kernel: tpu_custom_call.1
$region0: #{tpu_custom_call.1}
  #allocation0 [shape = 'u32[]', space=smem, size = 0x4, offset = 0x4, fixed_abs, tag = 'smem constant byte address 0x4 - core index']
  #allocation1 [shape = 'u32[144,128]{1,0:T(1,128)}', space=vmem, size = 0x12000, scoped, tag = 'internal scratch']
  #allocation2 [shape = 's32[1]{0}', space=sflag, size = 0x4, scoped, tag = 'scoped memory for tpu_custom_call.1']
  #allocation3 [shape = 'u8[512]{0}', space=smem, size = 0x200, scoped, tag = 'prefetched SMEM operand 0']
  %s0 = inlined_call_operand.vmem [shape: s32[3], index: 0, kind: input, shape index: {}]
  %s1 = inlined_call_operand.vmem [shape: f32[2,16,16,4], index: 1, kind: input, shape index: {}]
  %s2 = inlined_call_operand.vmem [shape: f32[3,42,16], index: 2, kind: input, shape index: {}]
  %s3 = inlined_call_operand.vmem [shape: f32[3,6,7,16], index: 3, kind: input, shape index: {}]
  %s4 = inlined_call_operand.vmem [shape: f32[3,6,7,7,4], index: 4, kind: output, shape index: {}]
  %s5 = sld [smem:[#allocation0]]
  $region45: #{tpu_custom_call.1} parent=0
    _
  %s7 = ssub.s32 1, %s5
  %s8 = scalar_select 0, %s7, %s5
  %s9 = sshll.u32 %s0, 4
  %s10 = int_to_ptr.vmem [resolvable:$true] %s9
  %12 = dma.vmem_to_smem %s10, 16, [#allocation3], [#allocation2]
  %13 = dma.done [#allocation2], 16
  %14 = sfence
  loop: start=0, step=1, limit=5
  $region2: #{tpu_custom_call.1} parent=0 // loop_pre_header
    _
  $region3: #{tpu_custom_call.1} parent=0 // loop_header
    %s16 = sphi 0, %s20
    %p17 = scmp.ge.s32.totalorder %s16, 5
    %s28 = sphi 0, %s30
    %s31 = sphi 0, %s28
    %s32 = sphi 0, %s31
    %s48 = sphi 0, %s32
    %s54 = sphi 0, %s56
    %s57 = sphi 0, %s54
    %s58 = sphi 0, %s57
    %s74 = sphi 0, %s58
    %s80 = sphi 0, %s82
    %s83 = sphi 0, %s80
    %s84 = sphi 0, %s83
    %s100 = sphi 0, %s84
    %s106 = sphi 0, %s108
    %s109 = sphi 0, %s106
    %s110 = sphi 0, %s109
    %s126 = sphi 0, %s110
  $region4: #{tpu_custom_call.1} parent=0 // loop_header_branch
    %19 = sbr.rel (%p17) target = $region8
  $region5: #{tpu_custom_call.1} parent=0 // loop_body
    %s21 = ssub.s32 %s16, 1
    %s22 = ssub.s32 %s16, 2
    %s23 = sadd.s32 %s16, 1
    %s24 = sld [smem:[#allocation3 + %s16]]
    %s25 = sld [smem:[#allocation3 + %s23]]
    %s26 = ssub.s32 %s24, %s25
    %p27 = scmp.eq.s32.totalorder %s26, 0
    %s29 = sadd.s32 %s28, 1
    %s30 = scalar_select %p27, %s28, %s29
    %p33 = pneg %p27
    %p34 = scmp.eq.s32.totalorder %s16, 2
    %p35 = por %p33, %p34
    %p36 = scmp.ne.s32.totalorder %s28, %s31
    %p37 = scmp.eq.s32.totalorder %s16, 0
    %p38 = por %p36, %p37
    %p39 = scmp.ne.s32.totalorder %s28, %s31
    %p40 = scmp.eq.s32.totalorder %s21, 2
    %p41 = por %p39, %p40
    %p42 = scmp.ne.s32.totalorder %s31, %s32
    %p43 = scmp.eq.s32.totalorder %s21, 0
    %p44 = por %p42, %p43
    %p45 = scmp.ne.s32.totalorder %s31, %s32
    %p46 = scmp.eq.s32.totalorder %s22, 2
    %p47 = por %p45, %p46
    %p49 = scmp.ne.s32.totalorder %s32, %s48
    %p50 = scmp.eq.s32.totalorder %s22, 0
    %p51 = por %p49, %p50
    %s52 = ssub.s32 %s16, %s23
    %p53 = scmp.eq.s32.totalorder %s52, 0
    %s55 = sadd.s32 %s54, 1
    %s56 = scalar_select %p53, %s54, %s55
    %p59 = pneg %p53
    %p60 = scmp.eq.s32.totalorder %s16, 2
    %p61 = por %p59, %p60
    %p62 = scmp.ne.s32.totalorder %s54, %s57
    %p63 = scmp.eq.s32.totalorder %s16, 0
    %p64 = por %p62, %p63
    %p65 = scmp.ne.s32.totalorder %s54, %s57
    %p66 = scmp.eq.s32.totalorder %s21, 2
    %p67 = por %p65, %p66
    %p68 = scmp.ne.s32.totalorder %s57, %s58
    %p69 = scmp.eq.s32.totalorder %s21, 0
    %p70 = por %p68, %p69
    %p71 = scmp.ne.s32.totalorder %s57, %s58
    %p72 = scmp.eq.s32.totalorder %s22, 2
    %p73 = por %p71, %p72
    %p75 = scmp.ne.s32.totalorder %s58, %s74
    %p76 = scmp.eq.s32.totalorder %s22, 0
    %p77 = por %p75, %p76
    %s78 = ssub.s32 %s16, %s23
    %p79 = scmp.eq.s32.totalorder %s78, 0
    %s81 = sadd.s32 %s80, 1
    %s82 = scalar_select %p79, %s80, %s81
    %p85 = pneg %p79
    %p86 = scmp.eq.s32.totalorder %s16, 2
    %p87 = por %p85, %p86
    %p88 = scmp.ne.s32.totalorder %s80, %s83
    %p89 = scmp.eq.s32.totalorder %s16, 0
    %p90 = por %p88, %p89
    %p91 = scmp.ne.s32.totalorder %s80, %s83
    %p92 = scmp.eq.s32.totalorder %s21, 2
    %p93 = por %p91, %p92
    %p94 = scmp.ne.s32.totalorder %s83, %s84
    %p95 = scmp.eq.s32.totalorder %s21, 0
    %p96 = por %p94, %p95
    %p97 = scmp.ne.s32.totalorder %s83, %s84
    %p98 = scmp.eq.s32.totalorder %s22, 2
    %p99 = por %p97, %p98
    %p101 = scmp.ne.s32.totalorder %s84, %s100
    %p102 = scmp.eq.s32.totalorder %s22, 0
    %p103 = por %p101, %p102
    %s104 = ssub.s32 %s16, %s23
    %p105 = scmp.eq.s32.totalorder %s104, 0
    %s107 = sadd.s32 %s106, 1
    %s108 = scalar_select %p105, %s106, %s107
    %p111 = pneg %p105
    %p112 = scmp.eq.s32.totalorder %s16, 2
    %p113 = por %p111, %p112
    %p114 = scmp.ne.s32.totalorder %s106, %s109
    %p115 = scmp.eq.s32.totalorder %s16, 0
    %p116 = por %p114, %p115
    %p117 = scmp.ne.s32.totalorder %s106, %s109
    %p118 = scmp.eq.s32.totalorder %s21, 2
    %p119 = por %p117, %p118
    %p120 = scmp.ne.s32.totalorder %s109, %s110
    %p121 = scmp.eq.s32.totalorder %s21, 0
    %p122 = por %p120, %p121
    %p123 = scmp.ne.s32.totalorder %s109, %s110
    %p124 = scmp.eq.s32.totalorder %s22, 2
    %p125 = por %p123, %p124
    %p127 = scmp.ne.s32.totalorder %s110, %s126
    %p128 = scmp.eq.s32.totalorder %s22, 0
    %p129 = por %p127, %p128
    %p130 = scmp.le.s32.totalorder 1, %s16
    %p131 = scmp.lt.s32.totalorder %s16, 4
    %p132 = pnand %p130, %p131
    %p133 = pneg %p132
    // Predicated region
    $region9: #{tpu_custom_call.1} parent=5 // pred_check
      _
    $region10: #{tpu_custom_call.1} parent=5 // pred_check_branch
      %135 = sbr.rel (%p132) target = $region12
    $region11: #{tpu_custom_call.1} parent=5 // pred_region
      %s136 = ssub.s32 %s16, 1
    $region12: #{tpu_custom_call.1} parent=5 // pred_fallthru
      _
    %p137 = scmp.lt.s32.totalorder %s16, 3
    // Predicated region
    $region13: #{tpu_custom_call.1} parent=5 // pred_check
      %p138 = pneg %p137
    $region14: #{tpu_custom_call.1} parent=5 // pred_check_branch
      %140 = sbr.rel (%p138) target = $region16
    $region15: #{tpu_custom_call.1} parent=5 // pred_region
      // Predicated region
      $region17: #{tpu_custom_call.1} parent=15 // pred_check
        %p141 = pneg %p38
      $region18: #{tpu_custom_call.1} parent=15 // pred_check_branch
        %143 = sbr.rel (%p141) target = $region20
      $region19: #{tpu_custom_call.1} parent=15 // pred_region
        %s144 = sld [smem:[#allocation3 + %s16]]
        %p145 = scmp.lt.s32.totalorder %s144, 1
        %s146 = scalar_select %p145, %s144, 1
        %s147 = smul.addr %s146, 32
        %s148 = smul.addr %s147, 8
        %s149 = scalar_lea.vmem %s1, %s148
        %s150 = sld [smem:[#allocation3 + %s16]]
      $region20: #{tpu_custom_call.1} parent=15 // pred_fallthru
        _
      // Predicated region
      $region21: #{tpu_custom_call.1} parent=15 // pred_check
        %p151 = pneg %p64
      $region22: #{tpu_custom_call.1} parent=15 // pred_check_branch
        %153 = sbr.rel (%p151) target = $region24
      $region23: #{tpu_custom_call.1} parent=15 // pred_region
        %p154 = scmp.lt.s32.totalorder %s16, 2
        %s155 = scalar_select %p154, %s16, 2
        %s156 = smul.addr %s155, 6
        %s157 = smul.addr %s156, 8
        %s158 = scalar_lea.vmem %s2, %s157
      $region24: #{tpu_custom_call.1} parent=15 // pred_fallthru
        _
      // Predicated region
      $region25: #{tpu_custom_call.1} parent=15 // pred_check
        %p159 = pneg %p90
      $region26: #{tpu_custom_call.1} parent=15 // pred_check_branch
        %161 = sbr.rel (%p159) target = $region28
      $region27: #{tpu_custom_call.1} parent=15 // pred_region
        %p162 = scmp.lt.s32.totalorder %s16, 2
        %s163 = scalar_select %p162, %s16, 2
        %s164 = smul.addr %s163, 6
        %s165 = smul.addr %s164, 8
        %s166 = scalar_lea.vmem %s3, %s165
      $region28: #{tpu_custom_call.1} parent=15 // pred_fallthru
        _
    $region16: #{tpu_custom_call.1} parent=5 // pred_fallthru
      _
    %p167 = scmp.le.s32.totalorder 1, %s16
    %p168 = scmp.lt.s32.totalorder %s16, 4
    %p169 = pnand %p167, %p168
    %p170 = pneg %p169
    // Predicated region
    $region29: #{tpu_custom_call.1} parent=5 // pred_check
      _
    $region30: #{tpu_custom_call.1} parent=5 // pred_check_branch
      %172 = sbr.rel (%p169) target = $region32
    $region31: #{tpu_custom_call.1} parent=5 // pred_region
      %s173 = ssub.s32 %s16, 1
      %s174 = sld [smem:[#allocation3 + %s21]]
      %p175 = scmp.lt.s32.totalorder %s174, 1
      %s176 = scalar_select %p175, %s174, 1
      %s177 = smul.addr %s176, 32
      %s178 = smul.addr %s177, 8
      %s179 = scalar_lea.vmem %s1, %s178
      %p180 = pneg %p44
      %p181 = pneg %p41
      %p182 = scmp.lt.s32.totalorder %s21, 2
      %s183 = scalar_select %p182, %s21, 2
      %s184 = smul.addr %s183, 6
      %s185 = smul.addr %s184, 8
      %s186 = scalar_lea.vmem %s2, %s185
      %p187 = pneg %p70
      %p188 = pneg %p67
      %p189 = scmp.lt.s32.totalorder %s21, 2
      %s190 = scalar_select %p189, %s21, 2
      %s191 = smul.addr %s190, 6
      %s192 = smul.addr %s191, 8
      %s193 = scalar_lea.vmem %s3, %s192
      %p194 = pneg %p96
      %p195 = pneg %p93
      %p196 = pneg %p122
      %p197 = pneg %p119
      %p198 = scmp.lt.s32.totalorder %s21, 2
      %s199 = scalar_select %p198, %s21, 2
      %s200 = smul.addr %s199, 42
      %s201 = smul.addr %s200, 8
      %s202 = scalar_lea.vmem %s4, %s201
      %s203 = sld [smem:[#allocation3 + %s21]]
      %p204 = scmp.lt.s32.totalorder %s203, 1
      %s205 = scalar_select %p204, %s203, 1
      %s206 = smul.addr %s205, 32
      %s207 = smul.addr %s206, 8
      %s208 = scalar_lea.vmem %s1, %s207
      %s209 = sld [smem:[#allocation3 + %s21]]
      %p210 = scmp.lt.s32.totalorder %s21, 2
      %s211 = scalar_select %p210, %s21, 2
      %s212 = smul.addr %s211, 6
      %s213 = smul.addr %s212, 8
      %s214 = scalar_lea.vmem %s2, %s213
      %p215 = scmp.lt.s32.totalorder %s21, 2
      %s216 = scalar_select %p215, %s21, 2
      %s217 = smul.addr %s216, 6
      %s218 = smul.addr %s217, 8
      %s219 = scalar_lea.vmem %s3, %s218
      %p220 = scmp.lt.s32.totalorder %s21, 2
      %s221 = scalar_select %p220, %s21, 2
      %s222 = smul.addr %s221, 42
      %s223 = smul.addr %s222, 8
      %s224 = scalar_lea.vmem %s4, %s223
      %v225 = vld [vmem:[%s208] sm:$0xff]
      %v226 = vld [vmem:[%s208 + $0x8] sm:$0xff]
      %v227 = vld [vmem:[%s208 + $0x10] sm:$0xff]
      %v228 = vld [vmem:[%s208 + $0x18] sm:$0xff]
      %v229 = vld [vmem:[%s208 + $0x20] sm:$0xff]
      %v230 = vld [vmem:[%s208 + $0x28] sm:$0xff]
      %v231 = vld [vmem:[%s208 + $0x30] sm:$0xff]
      %v232 = vld [vmem:[%s208 + $0x38] sm:$0xff]
      %v233 = vld [vmem:[%s208 + $0x40] sm:$0xff]
      %v234 = vld [vmem:[%s208 + $0x48] sm:$0xff]
      %v235 = vld [vmem:[%s208 + $0x50] sm:$0xff]
      %v236 = vld [vmem:[%s208 + $0x58] sm:$0xff]
      %v237 = vld [vmem:[%s208 + $0x60] sm:$0xff]
      %v238 = vld [vmem:[%s208 + $0x68] sm:$0xff]
      %v239 = vld [vmem:[%s208 + $0x70] sm:$0xff]
      %v240 = vld [vmem:[%s208 + $0x78] sm:$0xff]
      %v241 = vld [vmem:[%s208 + $0x80] sm:$0xff]
      %v242 = vld [vmem:[%s208 + $0x88] sm:$0xff]
      %v243 = vld [vmem:[%s208 + $0x90] sm:$0xff]
      %v244 = vld [vmem:[%s208 + $0x98] sm:$0xff]
      %v245 = vld [vmem:[%s208 + $0xa0] sm:$0xff]
      %v246 = vld [vmem:[%s208 + $0xa8] sm:$0xff]
      %v247 = vld [vmem:[%s208 + $0xb0] sm:$0xff]
      %v248 = vld [vmem:[%s208 + $0xb8] sm:$0xff]
      %v249 = vld [vmem:[%s208 + $0xc0] sm:$0xff]
      %v250 = vld [vmem:[%s208 + $0xc8] sm:$0xff]
      %v251 = vld [vmem:[%s208 + $0xd0] sm:$0xff]
      %v252 = vld [vmem:[%s208 + $0xd8] sm:$0xff]
      %v253 = vld [vmem:[%s208 + $0xe0] sm:$0xff]
      %v254 = vld [vmem:[%s208 + $0xe8] sm:$0xff]
      %v255 = vld [vmem:[%s208 + $0xf0] sm:$0xff]
      %v256 = vld [vmem:[%s208 + $0xf8] sm:$0xff]
      %v257 = vld [vmem:[%s214] sm:$0xff]
      %v258 = vld [vmem:[%s214 + $0x8] sm:$0xff]
      %v259 = vld [vmem:[%s214 + $0x10] sm:$0xff]
      %v260 = vld [vmem:[%s214 + $0x18] sm:$0xff]
      %v261 = vld [vmem:[%s214 + $0x20] sm:$0xff]
      %v262 = vld [vmem:[%s214 + $0x28] sm:$0x3]
      %v263 = vld [vmem:[%s219] sm:$0x7f]
      %v264 = vld [vmem:[%s219 + $0x8] sm:$0x7f]
      %v265 = vld [vmem:[%s219 + $0x10] sm:$0x7f]
      %v266 = vld [vmem:[%s219 + $0x18] sm:$0x7f]
      %v267 = vld [vmem:[%s219 + $0x20] sm:$0x7f]
      %v268 = vld [vmem:[%s219 + $0x28] sm:$0x7f]
      %v269 = vcombine.low %v225, %v229
      %v270 = vcombine.high %v225, %v229
      %v272 = vunpack.c.l.s4 1983009808
      %v273 = vunpack.c.0.s8 %v272
      %v274 = vlaneseq
      %v275 = vshrl.u32 %v274, 7
      %v276 = vsub.s32 %v273, %v275
      %v277 = vrot.slane %v269, %v276
      %v279 = vunpack.c.l.s4 1983009808
      %v280 = vunpack.c.0.s8 %v279
      %v281 = vlaneseq
      %v282 = vshrl.u32 %v281, 7
      %v283 = vsub.s32 %v280, %v282
      %v284 = vrot.slane %v270, %v283
      %v285 = vcombine.low %v227, %v231
      %v286 = vcombine.high %v227, %v231
      %v288 = vunpack.c.l.s4 1983009808
      %v289 = vunpack.c.0.s8 %v288
      %v290 = vlaneseq
      %v291 = vshrl.u32 %v290, 7
      %v292 = vsub.s32 %v289, %v291
      %v293 = vrot.slane %v285, %v292
      %v295 = vunpack.c.l.s4 1983009808
      %v296 = vunpack.c.0.s8 %v295
      %v297 = vlaneseq
      %v298 = vshrl.u32 %v297, 7
      %v299 = vsub.s32 %v296, %v298
      %v300 = vrot.slane %v286, %v299
      %v301 = vcombine.low %v233, %v237
      %v302 = vcombine.high %v233, %v237
      %v304 = vunpack.c.l.s4 1983009808
      %v305 = vunpack.c.0.s8 %v304
      %v306 = vlaneseq
      %v307 = vshrl.u32 %v306, 7
      %v308 = vsub.s32 %v305, %v307
      %v309 = vrot.slane %v301, %v308
      %v311 = vunpack.c.l.s4 1983009808
      %v312 = vunpack.c.0.s8 %v311
      %v313 = vlaneseq
      %v314 = vshrl.u32 %v313, 7
      %v315 = vsub.s32 %v312, %v314
      %v316 = vrot.slane %v302, %v315
      %v317 = vcombine.low %v235, %v239
      %v318 = vcombine.high %v235, %v239
      %v320 = vunpack.c.l.s4 1983009808
      %v321 = vunpack.c.0.s8 %v320
      %v322 = vlaneseq
      %v323 = vshrl.u32 %v322, 7
      %v324 = vsub.s32 %v321, %v323
      %v325 = vrot.slane %v317, %v324
      %v327 = vunpack.c.l.s4 1983009808
      %v328 = vunpack.c.0.s8 %v327
      %v329 = vlaneseq
      %v330 = vshrl.u32 %v329, 7
      %v331 = vsub.s32 %v328, %v330
      %v332 = vrot.slane %v318, %v331
      %v333 = vcombine.low %v277, %v293
      %v334 = vcombine.high %v277, %v293
      %v336 = vunpack.c.l.s4 1934713408
      %v337 = vunpack.c.0.s8 %v336
      %v338 = vlaneseq
      %v339 = vshrl.u32 %v338, 7
      %v340 = vsub.s32 %v337, %v339
      %v341 = vrot.slane %v333, %v340
      %v343 = vunpack.c.l.s4 1934713408
      %v344 = vunpack.c.0.s8 %v343
      %v345 = vlaneseq
      %v346 = vshrl.u32 %v345, 7
      %v347 = vsub.s32 %v344, %v346
      %v348 = vrot.slane %v334, %v347
      %v349 = vcombine.low %v284, %v300
      %v350 = vcombine.high %v284, %v300
      %v352 = vunpack.c.l.s4 1934713408
      %v353 = vunpack.c.0.s8 %v352
      %v354 = vlaneseq
      %v355 = vshrl.u32 %v354, 7
      %v356 = vsub.s32 %v353, %v355
      %v357 = vrot.slane %v349, %v356
      %v359 = vunpack.c.l.s4 1934713408
      %v360 = vunpack.c.0.s8 %v359
      %v361 = vlaneseq
      %v362 = vshrl.u32 %v361, 7
      %v363 = vsub.s32 %v360, %v362
      %v364 = vrot.slane %v350, %v363
      %v365 = vcombine.low %v309, %v325
      %v366 = vcombine.high %v309, %v325
      %v368 = vunpack.c.l.s4 1934713408
      %v369 = vunpack.c.0.s8 %v368
      %v370 = vlaneseq
      %v371 = vshrl.u32 %v370, 7
      %v372 = vsub.s32 %v369, %v371
      %v373 = vrot.slane %v365, %v372
      %v375 = vunpack.c.l.s4 1934713408
      %v376 = vunpack.c.0.s8 %v375
      %v377 = vlaneseq
      %v378 = vshrl.u32 %v377, 7
      %v379 = vsub.s32 %v376, %v378
      %v380 = vrot.slane %v366, %v379
      %v381 = vcombine.low %v316, %v332
      %v382 = vcombine.high %v316, %v332
      %v384 = vunpack.c.l.s4 1934713408
      %v385 = vunpack.c.0.s8 %v384
      %v386 = vlaneseq
      %v387 = vshrl.u32 %v386, 7
      %v388 = vsub.s32 %v385, %v387
      %v389 = vrot.slane %v381, %v388
      %v391 = vunpack.c.l.s4 1934713408
      %v392 = vunpack.c.0.s8 %v391
      %v393 = vlaneseq
      %v394 = vshrl.u32 %v393, 7
      %v395 = vsub.s32 %v392, %v394
      %v396 = vrot.slane %v382, %v395
      %v397 = vcombine.low %v341, %v373
      %v398 = vcombine.high %v341, %v373
      %v399 = vcombine.low %v348, %v380
      %v400 = vcombine.high %v348, %v380
      %v401 = vcombine.low %v357, %v389
      %v402 = vcombine.high %v357, %v389
      %v403 = vcombine.low %v364, %v396
      %v404 = vcombine.high %v364, %v396
      %v405 = vcombine.low %v241, %v245
      %v406 = vcombine.high %v241, %v245
      %v408 = vunpack.c.l.s4 1983009808
      %v409 = vunpack.c.0.s8 %v408
      %v410 = vlaneseq
      %v411 = vshrl.u32 %v410, 7
      %v412 = vsub.s32 %v409, %v411
      %v413 = vrot.slane %v405, %v412
      %v415 = vunpack.c.l.s4 1983009808
      %v416 = vunpack.c.0.s8 %v415
      %v417 = vlaneseq
      %v418 = vshrl.u32 %v417, 7
      %v419 = vsub.s32 %v416, %v418
      %v420 = vrot.slane %v406, %v419
      %v421 = vcombine.low %v243, %v247
      %v422 = vcombine.high %v243, %v247
      %v424 = vunpack.c.l.s4 1983009808
      %v425 = vunpack.c.0.s8 %v424
      %v426 = vlaneseq
      %v427 = vshrl.u32 %v426, 7
      %v428 = vsub.s32 %v425, %v427
      %v429 = vrot.slane %v421, %v428
      %v431 = vunpack.c.l.s4 1983009808
      %v432 = vunpack.c.0.s8 %v431
      %v433 = vlaneseq
      %v434 = vshrl.u32 %v433, 7
      %v435 = vsub.s32 %v432, %v434
      %v436 = vrot.slane %v422, %v435
      %v437 = vcombine.low %v249, %v253
      %v438 = vcombine.high %v249, %v253
      %v440 = vunpack.c.l.s4 1983009808
      %v441 = vunpack.c.0.s8 %v440
      %v442 = vlaneseq
      %v443 = vshrl.u32 %v442, 7
      %v444 = vsub.s32 %v441, %v443
      %v445 = vrot.slane %v437, %v444
      %v447 = vunpack.c.l.s4 1983009808
      %v448 = vunpack.c.0.s8 %v447
      %v449 = vlaneseq
      %v450 = vshrl.u32 %v449, 7
      %v451 = vsub.s32 %v448, %v450
      %v452 = vrot.slane %v438, %v451
      %v453 = vcombine.low %v251, %v255
      %v454 = vcombine.high %v251, %v255
      %v456 = vunpack.c.l.s4 1983009808
      %v457 = vunpack.c.0.s8 %v456
      %v458 = vlaneseq
      %v459 = vshrl.u32 %v458, 7
      %v460 = vsub.s32 %v457, %v459
      %v461 = vrot.slane %v453, %v460
      %v463 = vunpack.c.l.s4 1983009808
      %v464 = vunpack.c.0.s8 %v463
      %v465 = vlaneseq
      %v466 = vshrl.u32 %v465, 7
      %v467 = vsub.s32 %v464, %v466
      %v468 = vrot.slane %v454, %v467
      %v469 = vcombine.low %v413, %v429
      %v470 = vcombine.high %v413, %v429
      %v472 = vunpack.c.l.s4 1934713408
      %v473 = vunpack.c.0.s8 %v472
      %v474 = vlaneseq
      %v475 = vshrl.u32 %v474, 7
      %v476 = vsub.s32 %v473, %v475
      %v477 = vrot.slane %v469, %v476
      %v479 = vunpack.c.l.s4 1934713408
      %v480 = vunpack.c.0.s8 %v479
      %v481 = vlaneseq
      %v482 = vshrl.u32 %v481, 7
      %v483 = vsub.s32 %v480, %v482
      %v484 = vrot.slane %v470, %v483
      %v485 = vcombine.low %v420, %v436
      %v486 = vcombine.high %v420, %v436
      %v488 = vunpack.c.l.s4 1934713408
      %v489 = vunpack.c.0.s8 %v488
      %v490 = vlaneseq
      %v491 = vshrl.u32 %v490, 7
      %v492 = vsub.s32 %v489, %v491
      %v493 = vrot.slane %v485, %v492
      %v495 = vunpack.c.l.s4 1934713408
      %v496 = vunpack.c.0.s8 %v495
      %v497 = vlaneseq
      %v498 = vshrl.u32 %v497, 7
      %v499 = vsub.s32 %v496, %v498
      %v500 = vrot.slane %v486, %v499
      %v501 = vcombine.low %v445, %v461
      %v502 = vcombine.high %v445, %v461
      %v504 = vunpack.c.l.s4 1934713408
      %v505 = vunpack.c.0.s8 %v504
      %v506 = vlaneseq
      %v507 = vshrl.u32 %v506, 7
      %v508 = vsub.s32 %v505, %v507
      %v509 = vrot.slane %v501, %v508
      %v511 = vunpack.c.l.s4 1934713408
      %v512 = vunpack.c.0.s8 %v511
      %v513 = vlaneseq
      %v514 = vshrl.u32 %v513, 7
      %v515 = vsub.s32 %v512, %v514
      %v516 = vrot.slane %v502, %v515
      %v517 = vcombine.low %v452, %v468
      %v518 = vcombine.high %v452, %v468
      %v520 = vunpack.c.l.s4 1934713408
      %v521 = vunpack.c.0.s8 %v520
      %v522 = vlaneseq
      %v523 = vshrl.u32 %v522, 7
      %v524 = vsub.s32 %v521, %v523
      %v525 = vrot.slane %v517, %v524
      %v527 = vunpack.c.l.s4 1934713408
      %v528 = vunpack.c.0.s8 %v527
      %v529 = vlaneseq
      %v530 = vshrl.u32 %v529, 7
      %v531 = vsub.s32 %v528, %v530
      %v532 = vrot.slane %v518, %v531
      %v533 = vcombine.low %v477, %v509
      %v534 = vcombine.high %v477, %v509
      %v535 = vcombine.low %v484, %v516
      %v536 = vcombine.high %v484, %v516
      %v537 = vcombine.low %v493, %v525
      %v538 = vcombine.high %v493, %v525
      %v539 = vcombine.low %v500, %v532
      %v540 = vcombine.high %v500, %v532
      %v541 = vcombine.low %v226, %v230
      %v542 = vcombine.high %v226, %v230
      %v544 = vunpack.c.l.s4 1983009808
      %v545 = vunpack.c.0.s8 %v544
      %v546 = vlaneseq
      %v547 = vshrl.u32 %v546, 7
      %v548 = vsub.s32 %v545, %v547
      %v549 = vrot.slane %v541, %v548
      %v551 = vunpack.c.l.s4 1983009808
      %v552 = vunpack.c.0.s8 %v551
      %v553 = vlaneseq
      %v554 = vshrl.u32 %v553, 7
      %v555 = vsub.s32 %v552, %v554
      %v556 = vrot.slane %v542, %v555
      %v557 = vcombine.low %v228, %v232
      %v558 = vcombine.high %v228, %v232
      %v560 = vunpack.c.l.s4 1983009808
      %v561 = vunpack.c.0.s8 %v560
      %v562 = vlaneseq
      %v563 = vshrl.u32 %v562, 7
      %v564 = vsub.s32 %v561, %v563
      %v565 = vrot.slane %v557, %v564
      %v567 = vunpack.c.l.s4 1983009808
      %v568 = vunpack.c.0.s8 %v567
      %v569 = vlaneseq
      %v570 = vshrl.u32 %v569, 7
      %v571 = vsub.s32 %v568, %v570
      %v572 = vrot.slane %v558, %v571
      %v573 = vcombine.low %v234, %v238
      %v574 = vcombine.high %v234, %v238
      %v576 = vunpack.c.l.s4 1983009808
      %v577 = vunpack.c.0.s8 %v576
      %v578 = vlaneseq
      %v579 = vshrl.u32 %v578, 7
      %v580 = vsub.s32 %v577, %v579
      %v581 = vrot.slane %v573, %v580
      %v583 = vunpack.c.l.s4 1983009808
      %v584 = vunpack.c.0.s8 %v583
      %v585 = vlaneseq
      %v586 = vshrl.u32 %v585, 7
      %v587 = vsub.s32 %v584, %v586
      %v588 = vrot.slane %v574, %v587
      %v589 = vcombine.low %v236, %v240
      %v590 = vcombine.high %v236, %v240
      %v592 = vunpack.c.l.s4 1983009808
      %v593 = vunpack.c.0.s8 %v592
      %v594 = vlaneseq
      %v595 = vshrl.u32 %v594, 7
      %v596 = vsub.s32 %v593, %v595
      %v597 = vrot.slane %v589, %v596
      %v599 = vunpack.c.l.s4 1983009808
      %v600 = vunpack.c.0.s8 %v599
      %v601 = vlaneseq
      %v602 = vshrl.u32 %v601, 7
      %v603 = vsub.s32 %v600, %v602
      %v604 = vrot.slane %v590, %v603
      %v605 = vcombine.low %v549, %v565
      %v606 = vcombine.high %v549, %v565
      %v608 = vunpack.c.l.s4 1934713408
      %v609 = vunpack.c.0.s8 %v608
      %v610 = vlaneseq
      %v611 = vshrl.u32 %v610, 7
      %v612 = vsub.s32 %v609, %v611
      %v613 = vrot.slane %v605, %v612
      %v615 = vunpack.c.l.s4 1934713408
      %v616 = vunpack.c.0.s8 %v615
      %v617 = vlaneseq
      %v618 = vshrl.u32 %v617, 7
      %v619 = vsub.s32 %v616, %v618
      %v620 = vrot.slane %v606, %v619
      %v621 = vcombine.low %v556, %v572
      %v622 = vcombine.high %v556, %v572
      %v624 = vunpack.c.l.s4 1934713408
      %v625 = vunpack.c.0.s8 %v624
      %v626 = vlaneseq
      %v627 = vshrl.u32 %v626, 7
      %v628 = vsub.s32 %v625, %v627
      %v629 = vrot.slane %v621, %v628
      %v631 = vunpack.c.l.s4 1934713408
      %v632 = vunpack.c.0.s8 %v631
      %v633 = vlaneseq
      %v634 = vshrl.u32 %v633, 7
      %v635 = vsub.s32 %v632, %v634
      %v636 = vrot.slane %v622, %v635
      %v637 = vcombine.low %v581, %v597
      %v638 = vcombine.high %v581, %v597
      %v640 = vunpack.c.l.s4 1934713408
      %v641 = vunpack.c.0.s8 %v640
      %v642 = vlaneseq
      %v643 = vshrl.u32 %v642, 7
      %v644 = vsub.s32 %v641, %v643
      %v645 = vrot.slane %v637, %v644
      %v647 = vunpack.c.l.s4 1934713408
      %v648 = vunpack.c.0.s8 %v647
      %v649 = vlaneseq
      %v650 = vshrl.u32 %v649, 7
      %v651 = vsub.s32 %v648, %v650
      %v652 = vrot.slane %v638, %v651
      %v653 = vcombine.low %v588, %v604
      %v654 = vcombine.high %v588, %v604
      %v656 = vunpack.c.l.s4 1934713408
      %v657 = vunpack.c.0.s8 %v656
      %v658 = vlaneseq
      %v659 = vshrl.u32 %v658, 7
      %v660 = vsub.s32 %v657, %v659
      %v661 = vrot.slane %v653, %v660
      %v663 = vunpack.c.l.s4 1934713408
      %v664 = vunpack.c.0.s8 %v663
      %v665 = vlaneseq
      %v666 = vshrl.u32 %v665, 7
      %v667 = vsub.s32 %v664, %v666
      %v668 = vrot.slane %v654, %v667
      %v669 = vcombine.low %v613, %v645
      %v670 = vcombine.high %v613, %v645
      %v671 = vcombine.low %v620, %v652
      %v672 = vcombine.high %v620, %v652
      %v673 = vcombine.low %v629, %v661
      %v674 = vcombine.high %v629, %v661
      %v675 = vcombine.low %v636, %v668
      %v676 = vcombine.high %v636, %v668
      %v677 = vcombine.low %v242, %v246
      %v678 = vcombine.high %v242, %v246
      %v680 = vunpack.c.l.s4 1983009808
      %v681 = vunpack.c.0.s8 %v680
      %v682 = vlaneseq
      %v683 = vshrl.u32 %v682, 7
      %v684 = vsub.s32 %v681, %v683
      %v685 = vrot.slane %v677, %v684
      %v687 = vunpack.c.l.s4 1983009808
      %v688 = vunpack.c.0.s8 %v687
      %v689 = vlaneseq
      %v690 = vshrl.u32 %v689, 7
      %v691 = vsub.s32 %v688, %v690
      %v692 = vrot.slane %v678, %v691
      %v693 = vcombine.low %v244, %v248
      %v694 = vcombine.high %v244, %v248
      %v696 = vunpack.c.l.s4 1983009808
      %v697 = vunpack.c.0.s8 %v696
      %v698 = vlaneseq
      %v699 = vshrl.u32 %v698, 7
      %v700 = vsub.s32 %v697, %v699
      %v701 = vrot.slane %v693, %v700
      %v703 = vunpack.c.l.s4 1983009808
      %v704 = vunpack.c.0.s8 %v703
      %v705 = vlaneseq
      %v706 = vshrl.u32 %v705, 7
      %v707 = vsub.s32 %v704, %v706
      %v708 = vrot.slane %v694, %v707
      %v709 = vcombine.low %v250, %v254
      %v710 = vcombine.high %v250, %v254
      %v712 = vunpack.c.l.s4 1983009808
      %v713 = vunpack.c.0.s8 %v712
      %v714 = vlaneseq
      %v715 = vshrl.u32 %v714, 7
      %v716 = vsub.s32 %v713, %v715
      %v717 = vrot.slane %v709, %v716
      %v719 = vunpack.c.l.s4 1983009808
      %v720 = vunpack.c.0.s8 %v719
      %v721 = vlaneseq
      %v722 = vshrl.u32 %v721, 7
      %v723 = vsub.s32 %v720, %v722
      %v724 = vrot.slane %v710, %v723
      %v725 = vcombine.low %v252, %v256
      %v726 = vcombine.high %v252, %v256
      %v728 = vunpack.c.l.s4 1983009808
      %v729 = vunpack.c.0.s8 %v728
      %v730 = vlaneseq
      %v731 = vshrl.u32 %v730, 7
      %v732 = vsub.s32 %v729, %v731
      %v733 = vrot.slane %v725, %v732
      %v735 = vunpack.c.l.s4 1983009808
      %v736 = vunpack.c.0.s8 %v735
      %v737 = vlaneseq
      %v738 = vshrl.u32 %v737, 7
      %v739 = vsub.s32 %v736, %v738
      %v740 = vrot.slane %v726, %v739
      %v741 = vcombine.low %v685, %v701
      %v742 = vcombine.high %v685, %v701
      %v744 = vunpack.c.l.s4 1934713408
      %v745 = vunpack.c.0.s8 %v744
      %v746 = vlaneseq
      %v747 = vshrl.u32 %v746, 7
      %v748 = vsub.s32 %v745, %v747
      %v749 = vrot.slane %v741, %v748
      %v751 = vunpack.c.l.s4 1934713408
      %v752 = vunpack.c.0.s8 %v751
      %v753 = vlaneseq
      %v754 = vshrl.u32 %v753, 7
      %v755 = vsub.s32 %v752, %v754
      %v756 = vrot.slane %v742, %v755
      %v757 = vcombine.low %v692, %v708
      %v758 = vcombine.high %v692, %v708
      %v760 = vunpack.c.l.s4 1934713408
      %v761 = vunpack.c.0.s8 %v760
      %v762 = vlaneseq
      %v763 = vshrl.u32 %v762, 7
      %v764 = vsub.s32 %v761, %v763
      %v765 = vrot.slane %v757, %v764
      %v767 = vunpack.c.l.s4 1934713408
      %v768 = vunpack.c.0.s8 %v767
      %v769 = vlaneseq
      %v770 = vshrl.u32 %v769, 7
      %v771 = vsub.s32 %v768, %v770
      %v772 = vrot.slane %v758, %v771
      %v773 = vcombine.low %v717, %v733
      %v774 = vcombine.high %v717, %v733
      %v776 = vunpack.c.l.s4 1934713408
      %v777 = vunpack.c.0.s8 %v776
      %v778 = vlaneseq
      %v779 = vshrl.u32 %v778, 7
      %v780 = vsub.s32 %v777, %v779
      %v781 = vrot.slane %v773, %v780
      %v783 = vunpack.c.l.s4 1934713408
      %v784 = vunpack.c.0.s8 %v783
      %v785 = vlaneseq
      %v786 = vshrl.u32 %v785, 7
      %v787 = vsub.s32 %v784, %v786
      %v788 = vrot.slane %v774, %v787
      %v789 = vcombine.low %v724, %v740
      %v790 = vcombine.high %v724, %v740
      %v792 = vunpack.c.l.s4 1934713408
      %v793 = vunpack.c.0.s8 %v792
      %v794 = vlaneseq
      %v795 = vshrl.u32 %v794, 7
      %v796 = vsub.s32 %v793, %v795
      %v797 = vrot.slane %v789, %v796
      %v799 = vunpack.c.l.s4 1934713408
      %v800 = vunpack.c.0.s8 %v799
      %v801 = vlaneseq
      %v802 = vshrl.u32 %v801, 7
      %v803 = vsub.s32 %v800, %v802
      %v804 = vrot.slane %v790, %v803
      %v805 = vcombine.low %v749, %v781
      %v806 = vcombine.high %v749, %v781
      %v807 = vcombine.low %v756, %v788
      %v808 = vcombine.high %v756, %v788
      %v809 = vcombine.low %v765, %v797
      %v810 = vcombine.high %v765, %v797
      %v811 = vcombine.low %v772, %v804
      %v812 = vcombine.high %v772, %v804
      %815 = vrot.lane.b32.xlu0 %v398, 4
      %v816 = vpop.permute.xlu0 %815
      %817 = vrot.lane.b32.xlu0 %v534, 4
      %v818 = vpop.permute.xlu0 %817
      %823 = vrot.lane.b32.xlu0 %v399, 8
      %v824 = vpop.permute.xlu0 %823
      %825 = vrot.lane.b32.xlu0 %v535, 8
      %v826 = vpop.permute.xlu0 %825
      %831 = vrot.lane.b32.xlu0 %v400, 12
      %v832 = vpop.permute.xlu0 %831
      %833 = vrot.lane.b32.xlu0 %v536, 12
      %v834 = vpop.permute.xlu0 %833
      %839 = vrot.lane.b32.xlu0 %v401, 16
      %v840 = vpop.permute.xlu0 %839
      %841 = vrot.lane.b32.xlu0 %v537, 16
      %v842 = vpop.permute.xlu0 %841
      %847 = vrot.lane.b32.xlu0 %v402, 20
      %v848 = vpop.permute.xlu0 %847
      %849 = vrot.lane.b32.xlu0 %v538, 20
      %v850 = vpop.permute.xlu0 %849
      %855 = vrot.lane.b32.xlu0 %v403, 24
      %v856 = vpop.permute.xlu0 %855
      %857 = vrot.lane.b32.xlu0 %v539, 24
      %v858 = vpop.permute.xlu0 %857
      %863 = vrot.lane.b32.xlu0 %v404, 28
      %v864 = vpop.permute.xlu0 %863
      %865 = vrot.lane.b32.xlu0 %v540, 28
      %v866 = vpop.permute.xlu0 %865
      %871 = vrot.lane.b32.xlu0 %v669, 32
      %v872 = vpop.permute.xlu0 %871
      %873 = vrot.lane.b32.xlu0 %v805, 32
      %v874 = vpop.permute.xlu0 %873
      %879 = vrot.lane.b32.xlu0 %v670, 36
      %v880 = vpop.permute.xlu0 %879
      %881 = vrot.lane.b32.xlu0 %v806, 36
      %v882 = vpop.permute.xlu0 %881
      %887 = vrot.lane.b32.xlu0 %v671, 40
      %v888 = vpop.permute.xlu0 %887
      %889 = vrot.lane.b32.xlu0 %v807, 40
      %v890 = vpop.permute.xlu0 %889
      %895 = vrot.lane.b32.xlu0 %v672, 44
      %v896 = vpop.permute.xlu0 %895
      %897 = vrot.lane.b32.xlu0 %v808, 44
      %v898 = vpop.permute.xlu0 %897
      %903 = vrot.lane.b32.xlu0 %v673, 48
      %v904 = vpop.permute.xlu0 %903
      %905 = vrot.lane.b32.xlu0 %v809, 48
      %v906 = vpop.permute.xlu0 %905
      %911 = vrot.lane.b32.xlu0 %v674, 52
      %v912 = vpop.permute.xlu0 %911
      %913 = vrot.lane.b32.xlu0 %v810, 52
      %v914 = vpop.permute.xlu0 %913
      %919 = vrot.lane.b32.xlu0 %v675, 56
      %v920 = vpop.permute.xlu0 %919
      %921 = vrot.lane.b32.xlu0 %v811, 56
      %v922 = vpop.permute.xlu0 %921
      %927 = vrot.lane.b32.xlu0 %v676, 60
      %v928 = vpop.permute.xlu0 %927
      %929 = vrot.lane.b32.xlu0 %v812, 60
      %v930 = vpop.permute.xlu0 %929
      %vm933 = vcmask 31744
      %v934 = vsel %vm933, %v397, %v816
      %v935 = vsel %vm933, %v533, %v818
      %vm936 = vcmask 64512
      %v937 = vsel %vm936, %v934, %v824
      %v938 = vsel %vm936, %v935, %v826
      %vm939 = vcmask 97280
      %v940 = vsel %vm939, %v937, %v832
      %v941 = vsel %vm939, %v938, %v834
      %vm942 = vcmask 130048
      %v943 = vsel %vm942, %v940, %v840
      %v944 = vsel %vm942, %v941, %v842
      %vm945 = vcmask 162816
      %v946 = vsel %vm945, %v943, %v848
      %v947 = vsel %vm945, %v944, %v850
      %vm948 = vcmask 195584
      %v949 = vsel %vm948, %v946, %v856
      %v950 = vsel %vm948, %v947, %v858
      %vm951 = vcmask 228352
      %v952 = vsel %vm951, %v949, %v864
      %v953 = vsel %vm951, %v950, %v866
      %vm954 = vcmask 261120
      %v955 = vsel %vm954, %v952, %v872
      %v956 = vsel %vm954, %v953, %v874
      %vm957 = vcmask 293888
      %v958 = vsel %vm957, %v955, %v880
      %v959 = vsel %vm957, %v956, %v882
      %vm960 = vcmask 326656
      %v961 = vsel %vm960, %v958, %v888
      %v962 = vsel %vm960, %v959, %v890
      %vm963 = vcmask 359424
      %v964 = vsel %vm963, %v961, %v896
      %v965 = vsel %vm963, %v962, %v898
      %vm966 = vcmask 392192
      %v967 = vsel %vm966, %v964, %v904
      %v968 = vsel %vm966, %v965, %v906
      %vm969 = vcmask 424960
      %v970 = vsel %vm969, %v967, %v912
      %v971 = vsel %vm969, %v968, %v914
      %vm972 = vcmask 457728
      %v973 = vsel %vm972, %v970, %v920
      %v974 = vsel %vm972, %v971, %v922
      %vm975 = vcmask 490496
      %v976 = vsel %vm975, %v973, %v928
      %v977 = vsel %vm975, %v974, %v930
      %v978 = vcombine.low 0.0, 0.0
      %v979 = vcombine.high 0.0, 0.0
      %v981 = vunpack.c.l.s4 1983009808
      %v982 = vunpack.c.0.s8 %v981
      %v983 = vlaneseq
      %v984 = vshrl.u32 %v983, 7
      %v985 = vsub.s32 %v982, %v984
      %v986 = vrot.slane %v978, %v985
      %v988 = vunpack.c.l.s4 1983009808
      %v989 = vunpack.c.0.s8 %v988
      %v990 = vlaneseq
      %v991 = vshrl.u32 %v990, 7
      %v992 = vsub.s32 %v989, %v991
      %v993 = vrot.slane %v979, %v992
      %v994 = vcombine.low %v986, %v986
      %v995 = vcombine.high %v986, %v986
      %v997 = vunpack.c.l.s4 1934713408
      %v998 = vunpack.c.0.s8 %v997
      %v999 = vlaneseq
      %v1000 = vshrl.u32 %v999, 7
      %v1001 = vsub.s32 %v998, %v1000
      %v1002 = vrot.slane %v994, %v1001
      %v1004 = vunpack.c.l.s4 1934713408
      %v1005 = vunpack.c.0.s8 %v1004
      %v1006 = vlaneseq
      %v1007 = vshrl.u32 %v1006, 7
      %v1008 = vsub.s32 %v1005, %v1007
      %v1009 = vrot.slane %v995, %v1008
      %v1010 = vcombine.low %v993, %v993
      %v1011 = vcombine.high %v993, %v993
      %v1013 = vunpack.c.l.s4 1934713408
      %v1014 = vunpack.c.0.s8 %v1013
      %v1015 = vlaneseq
      %v1016 = vshrl.u32 %v1015, 7
      %v1017 = vsub.s32 %v1014, %v1016
      %v1018 = vrot.slane %v1010, %v1017
      %v1020 = vunpack.c.l.s4 1934713408
      %v1021 = vunpack.c.0.s8 %v1020
      %v1022 = vlaneseq
      %v1023 = vshrl.u32 %v1022, 7
      %v1024 = vsub.s32 %v1021, %v1023
      %v1025 = vrot.slane %v1011, %v1024
      %v1026 = vcombine.low %v1002, %v1002
      %v1027 = vcombine.high %v1002, %v1002
      %v1028 = vcombine.low %v1009, %v1009
      %v1029 = vcombine.high %v1009, %v1009
      %v1030 = vcombine.low %v1018, %v1018
      %v1031 = vcombine.high %v1018, %v1018
      %v1032 = vcombine.low %v1025, %v1025
      %v1033 = vcombine.high %v1025, %v1025
      %v1035 = vunpack.c.l.s4 1983009808
      %v1036 = vunpack.c.0.s8 %v1035
      %v1037 = vlaneseq
      %v1038 = vshrl.u32 %v1037, 7
      %v1039 = vsub.s32 %v1036, %v1038
      %v1040 = vcombine.low 0.0, 0.0
      %v1041 = vcombine.high 0.0, 0.0
      %v1043 = vunpack.c.l.s4 1934713408
      %v1044 = vunpack.c.0.s8 %v1043
      %v1045 = vlaneseq
      %v1046 = vshrl.u32 %v1045, 7
      %v1047 = vsub.s32 %v1044, %v1046
      %v1048 = vrot.slane %v1040, %v1047
      %v1050 = vunpack.c.l.s4 1934713408
      %v1051 = vunpack.c.0.s8 %v1050
      %v1052 = vlaneseq
      %v1053 = vshrl.u32 %v1052, 7
      %v1054 = vsub.s32 %v1051, %v1053
      %v1055 = vrot.slane %v1041, %v1054
      %v1056 = vcombine.high %v1048, 0.0
      %v1057 = vcombine.high %v1055, 0.0
      %v1058 = vcombine.high %v1018, 0.0
      %v1059 = vcombine.high %v1025, 0.0
      %1062 = vrot.lane.b32.xlu0 %v1027, 4
      %v1063 = vpop.permute.xlu0 %1062
      %1064 = vrot.lane.b32.xlu0 %v1056, 4
      %v1065 = vpop.permute.xlu0 %1064
      %1070 = vrot.lane.b32.xlu0 %v1028, 8
      %v1071 = vpop.permute.xlu0 %1070
      %1072 = vrot.lane.b32.xlu0 %v1055, 8
      %v1073 = vpop.permute.xlu0 %1072
      %1078 = vrot.lane.b32.xlu0 %v1029, 12
      %v1079 = vpop.permute.xlu0 %1078
      %1080 = vrot.lane.b32.xlu0 %v1057, 12
      %v1081 = vpop.permute.xlu0 %1080
      %1086 = vrot.lane.b32.xlu0 %v1030, 16
      %v1087 = vpop.permute.xlu0 %1086
      %1088 = vrot.lane.b32.xlu0 %v1018, 16
      %v1089 = vpop.permute.xlu0 %1088
      %1094 = vrot.lane.b32.xlu0 %v1031, 20
      %v1095 = vpop.permute.xlu0 %1094
      %1096 = vrot.lane.b32.xlu0 %v1058, 20
      %v1097 = vpop.permute.xlu0 %1096
      %1102 = vrot.lane.b32.xlu0 %v1032, 24
      %v1103 = vpop.permute.xlu0 %1102
      %1104 = vrot.lane.b32.xlu0 %v1025, 24
      %v1105 = vpop.permute.xlu0 %1104
      %1110 = vrot.lane.b32.xlu0 %v1033, 28
      %v1111 = vpop.permute.xlu0 %1110
      %1112 = vrot.lane.b32.xlu0 %v1059, 28
      %v1113 = vpop.permute.xlu0 %1112
      %1118 = vrot.lane.b32.xlu0 %v1026, 32
      %v1119 = vpop.permute.xlu0 %1118
      %1120 = vrot.lane.b32.xlu0 %v1048, 32
      %v1121 = vpop.permute.xlu0 %1120
      %1124 = vrot.lane.b32.xlu0 %v1027, 36
      %v1125 = vpop.permute.xlu0 %1124
      %1126 = vrot.lane.b32.xlu0 %v1056, 36
      %v1127 = vpop.permute.xlu0 %1126
      %1130 = vrot.lane.b32.xlu0 %v1028, 40
      %v1131 = vpop.permute.xlu0 %1130
      %1132 = vrot.lane.b32.xlu0 %v1055, 40
      %v1133 = vpop.permute.xlu0 %1132
      %1136 = vrot.lane.b32.xlu0 %v1029, 44
      %v1137 = vpop.permute.xlu0 %1136
      %1138 = vrot.lane.b32.xlu0 %v1057, 44
      %v1139 = vpop.permute.xlu0 %1138
      %1142 = vrot.lane.b32.xlu0 %v1030, 48
      %v1143 = vpop.permute.xlu0 %1142
      %1144 = vrot.lane.b32.xlu0 %v1018, 48
      %v1145 = vpop.permute.xlu0 %1144
      %1148 = vrot.lane.b32.xlu0 %v1031, 52
      %v1149 = vpop.permute.xlu0 %1148
      %1150 = vrot.lane.b32.xlu0 %v1058, 52
      %v1151 = vpop.permute.xlu0 %1150
      %1154 = vrot.lane.b32.xlu0 %v1032, 56
      %v1155 = vpop.permute.xlu0 %1154
      %1156 = vrot.lane.b32.xlu0 %v1025, 56
      %v1157 = vpop.permute.xlu0 %1156
      %1160 = vrot.lane.b32.xlu0 %v1033, 60
      %v1161 = vpop.permute.xlu0 %1160
      %1162 = vrot.lane.b32.xlu0 %v1059, 60
      %v1163 = vpop.permute.xlu0 %1162
      %v1166 = vsel %vm933, %v1026, %v1063
      %v1167 = vsel %vm933, %v1048, %v1065
      %v1168 = vsel %vm936, %v1166, %v1071
      %v1169 = vsel %vm936, %v1167, %v1073
      %v1170 = vsel %vm939, %v1168, %v1079
      %v1171 = vsel %vm939, %v1169, %v1081
      %v1172 = vsel %vm942, %v1170, %v1087
      %v1173 = vsel %vm942, %v1171, %v1089
      %v1174 = vsel %vm945, %v1172, %v1095
      %v1175 = vsel %vm945, %v1173, %v1097
      %v1176 = vsel %vm948, %v1174, %v1103
      %v1177 = vsel %vm948, %v1175, %v1105
      %v1178 = vsel %vm951, %v1176, %v1111
      %v1179 = vsel %vm951, %v1177, %v1113
      %v1180 = vsel %vm954, %v1178, %v1119
      %v1181 = vsel %vm954, %v1179, %v1121
      %v1182 = vsel %vm957, %v1180, %v1125
      %v1183 = vsel %vm957, %v1181, %v1127
      %v1184 = vsel %vm960, %v1182, %v1131
      %v1185 = vsel %vm960, %v1183, %v1133
      %v1186 = vsel %vm963, %v1184, %v1137
      %v1187 = vsel %vm963, %v1185, %v1139
      %v1188 = vsel %vm966, %v1186, %v1143
      %v1189 = vsel %vm966, %v1187, %v1145
      %v1190 = vsel %vm969, %v1188, %v1149
      %v1191 = vsel %vm969, %v1189, %v1151
      %v1192 = vsel %vm972, %v1190, %v1155
      %v1193 = vsel %vm972, %v1191, %v1157
      %v1194 = vsel %vm975, %v1192, %v1161
      %v1195 = vsel %vm975, %v1193, %v1163
      %v1197 = vsel %vm942, %v257, 0
      %v1200 = vsel %vm942, %v258, 0
      %v1203 = vsel %vm942, %v259, 0
      %v1206 = vsel %vm942, %v260, 0
      %v1209 = vsel %vm942, %v261, 0
      %v1212 = vsel %vm942, %v262, 0
      %1214 = vmatprep.subr.mxu0 0.0
      %1215 = vmatpush1.msra.mxu0 0.0
      %1216 = vmatprep.subr.mxu0 0.0
      %1217 = vmatpush1.msra.mxu0 0.0
      %1218 = vmatprep.subr.mxu0 0.0
      %1219 = vmatpush1.msra.mxu0 0.0
      %1220 = vmatprep.subr.mxu0 0.0
      %1221 = vmatpush1.msra.mxu0 0.0
      %1222 = vmatprep.subr.mxu0 0.0
      %1223 = vmatpush1.msra.mxu0 0.0
      %1224 = vmatprep.subr.mxu0 0.0
      %1225 = vmatpush1.msra.mxu0 0.0
      %1226 = vmatprep.subr.mxu0 0.0
      %1227 = vmatpush1.msra.mxu0 0.0
      %1228 = vmatprep.subr.mxu0 0.0
      %1229 = vmatpush1.msra.mxu0 0.0
      %1230 = vmatprep.subr.mxu0 0.0
      %1231 = vmatpush1.msra.mxu0 0.0
      %1232 = vmatprep.subr.mxu0 0.0
      %1233 = vmatpush1.msra.mxu0 0.0
      %1234 = vmatprep.subr.mxu0 0.0
      %1235 = vmatpush1.msra.mxu0 0.0
      %1236 = vmatprep.subr.mxu0 0.0
      %1237 = vmatpush1.msra.mxu0 0.0
      %1238 = vmatprep.subr.mxu0 0.0
      %1239 = vmatpush1.msra.mxu0 0.0
      %1240 = vmatprep.subr.mxu0 0.0
      %1241 = vmatpush1.msra.mxu0 0.0
      %1242 = vmatprep.subr.mxu0 0.0
      %1243 = vmatpush1.msra.mxu0 %v977
      %1244 = vmatprep.subr.mxu0 0.0
      %1245 = vmatpush1.msra.mxu0 %v976
      %1246 = vmatprep.subr.mxu0 0.0
      %1247 = vmatpush2.msra.mxu0 0.0
      %1248 = vmatprep.subr.mxu0 0.0
      %1249 = vmatpush2.msra.mxu0 0.0
      %1250 = vmatprep.subr.mxu0 0.0
      %1251 = vmatpush2.msra.mxu0 0.0
      %1252 = vmatprep.subr.mxu0 0.0
      %1253 = vmatpush2.msra.mxu0 0.0
      %1254 = vmatprep.subr.mxu0 0.0
      %1255 = vmatpush2.msra.mxu0 0.0
      %1256 = vmatprep.subr.mxu0 0.0
      %1257 = vmatpush2.msra.mxu0 0.0
      %1258 = vmatprep.subr.mxu0 0.0
      %1259 = vmatpush2.msra.mxu0 0.0
      %1260 = vmatprep.subr.mxu0 0.0
      %1261 = vmatpush2.msra.mxu0 0.0
      %1262 = vmatprep.subr.mxu0 0.0
      %1263 = vmatpush2.msra.mxu0 0.0
      %1264 = vmatprep.subr.mxu0 0.0
      %1265 = vmatpush2.msra.mxu0 0.0
      %1266 = vmatprep.subr.mxu0 0.0
      %1267 = vmatpush2.msra.mxu0 0.0
      %1268 = vmatprep.subr.mxu0 0.0
      %1269 = vmatpush2.msra.mxu0 0.0
      %1270 = vmatprep.subr.mxu0 0.0
      %1271 = vmatpush2.msra.mxu0 0.0
      %1272 = vmatprep.subr.mxu0 0.0
      %1273 = vmatpush2.msra.mxu0 0.0
      %1274 = vmatprep.subr.mxu0 0.0
      %1275 = vmatpush2.msra.mxu0 0.0
      %1276 = vmatprep.subr.mxu0 0.0
      %1277 = vmatpush2.msra.mxu0 0.0
      %1278 = vmatprep.mubr.f32.mxu0 0.0
      %1279 = vmatmul.mubr.f32.gmra.mxu0 %v1197
      %v1280 = vpop.f32.mrf.mxu0
      %v1281 = vadd.f32 %v1194, %v1280
      %v1282 = vpop.f32.mrf.mxu0
      %1283 = vmatprep.mubr.f32.mxu0 0.0
      %1284 = vmatmul.mubr.f32.gmra.mxu0 %v1200
      %v1285 = vpop.f32.mrf.mxu0
      %v1286 = vadd.f32 %v1194, %v1285
      %v1287 = vpop.f32.mrf.mxu0
      %1288 = vmatprep.mubr.f32.mxu0 0.0
      %1289 = vmatmul.mubr.f32.gmra.mxu0 %v1203
      %v1290 = vpop.f32.mrf.mxu0
      %v1291 = vadd.f32 %v1194, %v1290
      %v1292 = vpop.f32.mrf.mxu0
      %1293 = vmatprep.mubr.f32.mxu0 0.0
      %1294 = vmatmul.mubr.f32.gmra.mxu0 %v1206
      %v1295 = vpop.f32.mrf.mxu0
      %v1296 = vadd.f32 %v1194, %v1295
      %v1297 = vpop.f32.mrf.mxu0
      %1298 = vmatprep.mubr.f32.mxu0 0.0
      %1299 = vmatmul.mubr.f32.gmra.mxu0 %v1209
      %v1300 = vpop.f32.mrf.mxu0
      %v1301 = vadd.f32 %v1194, %v1300
      %v1302 = vpop.f32.mrf.mxu0
      %1303 = vmatprep.mubr.f32.mxu0 0.0
      %1304 = vmatmul.mubr.f32.gmra.mxu0 %v1212
      %v1305 = vpop.f32.mrf.mxu0
      %v1306 = vadd.f32 %v1195, %v1305
      %v1307 = vpop.f32.mrf.mxu0
      %1308 = vdwg.mxu0
      %1315 = vrot.lane.b32.xlu0 %v1281, 124
      %v1316 = vpop.permute.xlu0 %1315
      %1317 = vrot.lane.b32.xlu0 %v1286, 124
      %v1318 = vpop.permute.xlu0 %1317
      %1319 = vrot.lane.b32.xlu0 %v1291, 124
      %v1320 = vpop.permute.xlu0 %1319
      %1321 = vrot.lane.b32.xlu0 %v1296, 124
      %v1322 = vpop.permute.xlu0 %1321
      %1323 = vrot.lane.b32.xlu0 %v1301, 124
      %v1324 = vpop.permute.xlu0 %1323
      %1325 = vrot.lane.b32.xlu0 %v1306, 124
      %v1326 = vpop.permute.xlu0 %1325
      %1333 = vrot.lane.b32.xlu0 %v1281, 120
      %v1334 = vpop.permute.xlu0 %1333
      %1335 = vrot.lane.b32.xlu0 %v1286, 120
      %v1336 = vpop.permute.xlu0 %1335
      %1337 = vrot.lane.b32.xlu0 %v1291, 120
      %v1338 = vpop.permute.xlu0 %1337
      %1339 = vrot.lane.b32.xlu0 %v1296, 120
      %v1340 = vpop.permute.xlu0 %1339
      %1341 = vrot.lane.b32.xlu0 %v1301, 120
      %v1342 = vpop.permute.xlu0 %1341
      %1343 = vrot.lane.b32.xlu0 %v1306, 120
      %v1344 = vpop.permute.xlu0 %1343
      %1351 = vrot.lane.b32.xlu0 %v1281, 116
      %v1352 = vpop.permute.xlu0 %1351
      %1353 = vrot.lane.b32.xlu0 %v1286, 116
      %v1354 = vpop.permute.xlu0 %1353
      %1355 = vrot.lane.b32.xlu0 %v1291, 116
      %v1356 = vpop.permute.xlu0 %1355
      %1357 = vrot.lane.b32.xlu0 %v1296, 116
      %v1358 = vpop.permute.xlu0 %1357
      %1359 = vrot.lane.b32.xlu0 %v1301, 116
      %v1360 = vpop.permute.xlu0 %1359
      %1361 = vrot.lane.b32.xlu0 %v1306, 116
      %v1362 = vpop.permute.xlu0 %1361
      %1369 = vrot.lane.b32.xlu0 %v1281, 112
      %v1370 = vpop.permute.xlu0 %1369
      %1371 = vrot.lane.b32.xlu0 %v1286, 112
      %v1372 = vpop.permute.xlu0 %1371
      %1373 = vrot.lane.b32.xlu0 %v1291, 112
      %v1374 = vpop.permute.xlu0 %1373
      %1375 = vrot.lane.b32.xlu0 %v1296, 112
      %v1376 = vpop.permute.xlu0 %1375
      %1377 = vrot.lane.b32.xlu0 %v1301, 112
      %v1378 = vpop.permute.xlu0 %1377
      %1379 = vrot.lane.b32.xlu0 %v1306, 112
      %v1380 = vpop.permute.xlu0 %1379
      %1387 = vrot.lane.b32.xlu0 %v1281, 108
      %v1388 = vpop.permute.xlu0 %1387
      %1389 = vrot.lane.b32.xlu0 %v1286, 108
      %v1390 = vpop.permute.xlu0 %1389
      %1391 = vrot.lane.b32.xlu0 %v1291, 108
      %v1392 = vpop.permute.xlu0 %1391
      %1393 = vrot.lane.b32.xlu0 %v1296, 108
      %v1394 = vpop.permute.xlu0 %1393
      %1395 = vrot.lane.b32.xlu0 %v1301, 108
      %v1396 = vpop.permute.xlu0 %1395
      %1397 = vrot.lane.b32.xlu0 %v1306, 108
      %v1398 = vpop.permute.xlu0 %1397
      %1405 = vrot.lane.b32.xlu0 %v1281, 104
      %v1406 = vpop.permute.xlu0 %1405
      %1407 = vrot.lane.b32.xlu0 %v1286, 104
      %v1408 = vpop.permute.xlu0 %1407
      %1409 = vrot.lane.b32.xlu0 %v1291, 104
      %v1410 = vpop.permute.xlu0 %1409
      %1411 = vrot.lane.b32.xlu0 %v1296, 104
      %v1412 = vpop.permute.xlu0 %1411
      %1413 = vrot.lane.b32.xlu0 %v1301, 104
      %v1414 = vpop.permute.xlu0 %1413
      %1415 = vrot.lane.b32.xlu0 %v1306, 104
      %v1416 = vpop.permute.xlu0 %1415
      %1423 = vrot.lane.b32.xlu0 %v1281, 100
      %v1424 = vpop.permute.xlu0 %1423
      %1425 = vrot.lane.b32.xlu0 %v1286, 100
      %v1426 = vpop.permute.xlu0 %1425
      %1427 = vrot.lane.b32.xlu0 %v1291, 100
      %v1428 = vpop.permute.xlu0 %1427
      %1429 = vrot.lane.b32.xlu0 %v1296, 100
      %v1430 = vpop.permute.xlu0 %1429
      %1431 = vrot.lane.b32.xlu0 %v1301, 100
      %v1432 = vpop.permute.xlu0 %1431
      %1433 = vrot.lane.b32.xlu0 %v1306, 100
      %v1434 = vpop.permute.xlu0 %1433
      %1441 = vrot.lane.b32.xlu0 %v1281, 96
      %v1442 = vpop.permute.xlu0 %1441
      %1443 = vrot.lane.b32.xlu0 %v1286, 96
      %v1444 = vpop.permute.xlu0 %1443
      %1445 = vrot.lane.b32.xlu0 %v1291, 96
      %v1446 = vpop.permute.xlu0 %1445
      %1447 = vrot.lane.b32.xlu0 %v1296, 96
      %v1448 = vpop.permute.xlu0 %1447
      %1449 = vrot.lane.b32.xlu0 %v1301, 96
      %v1450 = vpop.permute.xlu0 %1449
      %1451 = vrot.lane.b32.xlu0 %v1306, 96
      %v1452 = vpop.permute.xlu0 %1451
      %1459 = vrot.lane.b32.xlu0 %v1281, 92
      %v1460 = vpop.permute.xlu0 %1459
      %1461 = vrot.lane.b32.xlu0 %v1286, 92
      %v1462 = vpop.permute.xlu0 %1461
      %1463 = vrot.lane.b32.xlu0 %v1291, 92
      %v1464 = vpop.permute.xlu0 %1463
      %1465 = vrot.lane.b32.xlu0 %v1296, 92
      %v1466 = vpop.permute.xlu0 %1465
      %1467 = vrot.lane.b32.xlu0 %v1301, 92
      %v1468 = vpop.permute.xlu0 %1467
      %1469 = vrot.lane.b32.xlu0 %v1306, 92
      %v1470 = vpop.permute.xlu0 %1469
      %1477 = vrot.lane.b32.xlu0 %v1281, 88
      %v1478 = vpop.permute.xlu0 %1477
      %1479 = vrot.lane.b32.xlu0 %v1286, 88
      %v1480 = vpop.permute.xlu0 %1479
      %1481 = vrot.lane.b32.xlu0 %v1291, 88
      %v1482 = vpop.permute.xlu0 %1481
      %1483 = vrot.lane.b32.xlu0 %v1296, 88
      %v1484 = vpop.permute.xlu0 %1483
      %1485 = vrot.lane.b32.xlu0 %v1301, 88
      %v1486 = vpop.permute.xlu0 %1485
      %1487 = vrot.lane.b32.xlu0 %v1306, 88
      %v1488 = vpop.permute.xlu0 %1487
      %1495 = vrot.lane.b32.xlu0 %v1281, 84
      %v1496 = vpop.permute.xlu0 %1495
      %1497 = vrot.lane.b32.xlu0 %v1286, 84
      %v1498 = vpop.permute.xlu0 %1497
      %1499 = vrot.lane.b32.xlu0 %v1291, 84
      %v1500 = vpop.permute.xlu0 %1499
      %1501 = vrot.lane.b32.xlu0 %v1296, 84
      %v1502 = vpop.permute.xlu0 %1501
      %1503 = vrot.lane.b32.xlu0 %v1301, 84
      %v1504 = vpop.permute.xlu0 %1503
      %1505 = vrot.lane.b32.xlu0 %v1306, 84
      %v1506 = vpop.permute.xlu0 %1505
      %1513 = vrot.lane.b32.xlu0 %v1281, 80
      %v1514 = vpop.permute.xlu0 %1513
      %1515 = vrot.lane.b32.xlu0 %v1286, 80
      %v1516 = vpop.permute.xlu0 %1515
      %1517 = vrot.lane.b32.xlu0 %v1291, 80
      %v1518 = vpop.permute.xlu0 %1517
      %1519 = vrot.lane.b32.xlu0 %v1296, 80
      %v1520 = vpop.permute.xlu0 %1519
      %1521 = vrot.lane.b32.xlu0 %v1301, 80
      %v1522 = vpop.permute.xlu0 %1521
      %1523 = vrot.lane.b32.xlu0 %v1306, 80
      %v1524 = vpop.permute.xlu0 %1523
      %1531 = vrot.lane.b32.xlu0 %v1281, 76
      %v1532 = vpop.permute.xlu0 %1531
      %1533 = vrot.lane.b32.xlu0 %v1286, 76
      %v1534 = vpop.permute.xlu0 %1533
      %1535 = vrot.lane.b32.xlu0 %v1291, 76
      %v1536 = vpop.permute.xlu0 %1535
      %1537 = vrot.lane.b32.xlu0 %v1296, 76
      %v1538 = vpop.permute.xlu0 %1537
      %1539 = vrot.lane.b32.xlu0 %v1301, 76
      %v1540 = vpop.permute.xlu0 %1539
      %1541 = vrot.lane.b32.xlu0 %v1306, 76
      %v1542 = vpop.permute.xlu0 %1541
      %1549 = vrot.lane.b32.xlu0 %v1281, 72
      %v1550 = vpop.permute.xlu0 %1549
      %1551 = vrot.lane.b32.xlu0 %v1286, 72
      %v1552 = vpop.permute.xlu0 %1551
      %1553 = vrot.lane.b32.xlu0 %v1291, 72
      %v1554 = vpop.permute.xlu0 %1553
      %1555 = vrot.lane.b32.xlu0 %v1296, 72
      %v1556 = vpop.permute.xlu0 %1555
      %1557 = vrot.lane.b32.xlu0 %v1301, 72
      %v1558 = vpop.permute.xlu0 %1557
      %1559 = vrot.lane.b32.xlu0 %v1306, 72
      %v1560 = vpop.permute.xlu0 %1559
      %1567 = vrot.lane.b32.xlu0 %v1281, 68
      %v1568 = vpop.permute.xlu0 %1567
      %1569 = vrot.lane.b32.xlu0 %v1286, 68
      %v1570 = vpop.permute.xlu0 %1569
      %1571 = vrot.lane.b32.xlu0 %v1291, 68
      %v1572 = vpop.permute.xlu0 %1571
      %1573 = vrot.lane.b32.xlu0 %v1296, 68
      %v1574 = vpop.permute.xlu0 %1573
      %1575 = vrot.lane.b32.xlu0 %v1301, 68
      %v1576 = vpop.permute.xlu0 %1575
      %1577 = vrot.lane.b32.xlu0 %v1306, 68
      %v1578 = vpop.permute.xlu0 %1577
      %v1585 = vcombine.low %v1281, %v1334
      %v1586 = vcombine.high %v1281, %v1334
      %v1588 = vunpack.c.l.s4 1983009808
      %v1589 = vunpack.c.0.s8 %v1588
      %v1590 = vlaneseq
      %v1591 = vshrl.u32 %v1590, 7
      %v1592 = vsub.s32 %v1589, %v1591
      %v1593 = vrot.slane %v1585, %v1592
      %v1595 = vunpack.c.l.s4 1983009808
      %v1596 = vunpack.c.0.s8 %v1595
      %v1597 = vlaneseq
      %v1598 = vshrl.u32 %v1597, 7
      %v1599 = vsub.s32 %v1596, %v1598
      %v1600 = vrot.slane %v1586, %v1599
      %v1601 = vcombine.low %v1316, %v1352
      %v1602 = vcombine.high %v1316, %v1352
      %v1604 = vunpack.c.l.s4 1983009808
      %v1605 = vunpack.c.0.s8 %v1604
      %v1606 = vlaneseq
      %v1607 = vshrl.u32 %v1606, 7
      %v1608 = vsub.s32 %v1605, %v1607
      %v1609 = vrot.slane %v1601, %v1608
      %v1611 = vunpack.c.l.s4 1983009808
      %v1612 = vunpack.c.0.s8 %v1611
      %v1613 = vlaneseq
      %v1614 = vshrl.u32 %v1613, 7
      %v1615 = vsub.s32 %v1612, %v1614
      %v1616 = vrot.slane %v1602, %v1615
      %v1617 = vcombine.low %v1370, %v1406
      %v1618 = vcombine.high %v1370, %v1406
      %v1620 = vunpack.c.l.s4 1983009808
      %v1621 = vunpack.c.0.s8 %v1620
      %v1622 = vlaneseq
      %v1623 = vshrl.u32 %v1622, 7
      %v1624 = vsub.s32 %v1621, %v1623
      %v1625 = vrot.slane %v1617, %v1624
      %v1627 = vunpack.c.l.s4 1983009808
      %v1628 = vunpack.c.0.s8 %v1627
      %v1629 = vlaneseq
      %v1630 = vshrl.u32 %v1629, 7
      %v1631 = vsub.s32 %v1628, %v1630
      %v1632 = vrot.slane %v1618, %v1631
      %v1633 = vcombine.low %v1388, %v1424
      %v1634 = vcombine.high %v1388, %v1424
      %v1636 = vunpack.c.l.s4 1983009808
      %v1637 = vunpack.c.0.s8 %v1636
      %v1638 = vlaneseq
      %v1639 = vshrl.u32 %v1638, 7
      %v1640 = vsub.s32 %v1637, %v1639
      %v1641 = vrot.slane %v1633, %v1640
      %v1643 = vunpack.c.l.s4 1983009808
      %v1644 = vunpack.c.0.s8 %v1643
      %v1645 = vlaneseq
      %v1646 = vshrl.u32 %v1645, 7
      %v1647 = vsub.s32 %v1644, %v1646
      %v1648 = vrot.slane %v1634, %v1647
      %v1649 = vcombine.low %v1593, %v1609
      %v1650 = vcombine.high %v1593, %v1609
      %v1652 = vunpack.c.l.s4 1934713408
      %v1653 = vunpack.c.0.s8 %v1652
      %v1654 = vlaneseq
      %v1655 = vshrl.u32 %v1654, 7
      %v1656 = vsub.s32 %v1653, %v1655
      %v1657 = vrot.slane %v1649, %v1656
      %v1659 = vunpack.c.l.s4 1934713408
      %v1660 = vunpack.c.0.s8 %v1659
      %v1661 = vlaneseq
      %v1662 = vshrl.u32 %v1661, 7
      %v1663 = vsub.s32 %v1660, %v1662
      %v1664 = vrot.slane %v1650, %v1663
      %v1665 = vcombine.low %v1600, %v1616
      %v1666 = vcombine.high %v1600, %v1616
      %v1668 = vunpack.c.l.s4 1934713408
      %v1669 = vunpack.c.0.s8 %v1668
      %v1670 = vlaneseq
      %v1671 = vshrl.u32 %v1670, 7
      %v1672 = vsub.s32 %v1669, %v1671
      %v1673 = vrot.slane %v1665, %v1672
      %v1675 = vunpack.c.l.s4 1934713408
      %v1676 = vunpack.c.0.s8 %v1675
      %v1677 = vlaneseq
      %v1678 = vshrl.u32 %v1677, 7
      %v1679 = vsub.s32 %v1676, %v1678
      %v1680 = vrot.slane %v1666, %v1679
      %v1681 = vcombine.low %v1625, %v1641
      %v1682 = vcombine.high %v1625, %v1641
      %v1684 = vunpack.c.l.s4 1934713408
      %v1685 = vunpack.c.0.s8 %v1684
      %v1686 = vlaneseq
      %v1687 = vshrl.u32 %v1686, 7
      %v1688 = vsub.s32 %v1685, %v1687
      %v1689 = vrot.slane %v1681, %v1688
      %v1691 = vunpack.c.l.s4 1934713408
      %v1692 = vunpack.c.0.s8 %v1691
      %v1693 = vlaneseq
      %v1694 = vshrl.u32 %v1693, 7
      %v1695 = vsub.s32 %v1692, %v1694
      %v1696 = vrot.slane %v1682, %v1695
      %v1697 = vcombine.low %v1632, %v1648
      %v1698 = vcombine.high %v1632, %v1648
      %v1700 = vunpack.c.l.s4 1934713408
      %v1701 = vunpack.c.0.s8 %v1700
      %v1702 = vlaneseq
      %v1703 = vshrl.u32 %v1702, 7
      %v1704 = vsub.s32 %v1701, %v1703
      %v1705 = vrot.slane %v1697, %v1704
      %v1707 = vunpack.c.l.s4 1934713408
      %v1708 = vunpack.c.0.s8 %v1707
      %v1709 = vlaneseq
      %v1710 = vshrl.u32 %v1709, 7
      %v1711 = vsub.s32 %v1708, %v1710
      %v1712 = vrot.slane %v1698, %v1711
      %v1713 = vcombine.low %v1657, %v1689
      %v1714 = vcombine.high %v1657, %v1689
      %v1715 = vcombine.low %v1664, %v1696
      %v1716 = vcombine.high %v1664, %v1696
      %v1717 = vcombine.low %v1673, %v1705
      %v1718 = vcombine.high %v1673, %v1705
      %v1719 = vcombine.low %v1680, %v1712
      %v1720 = vcombine.high %v1680, %v1712
      %v1721 = vcombine.low %v1442, %v1478
      %v1722 = vcombine.high %v1442, %v1478
      %v1724 = vunpack.c.l.s4 1983009808
      %v1725 = vunpack.c.0.s8 %v1724
      %v1726 = vlaneseq
      %v1727 = vshrl.u32 %v1726, 7
      %v1728 = vsub.s32 %v1725, %v1727
      %v1729 = vrot.slane %v1721, %v1728
      %v1731 = vunpack.c.l.s4 1983009808
      %v1732 = vunpack.c.0.s8 %v1731
      %v1733 = vlaneseq
      %v1734 = vshrl.u32 %v1733, 7
      %v1735 = vsub.s32 %v1732, %v1734
      %v1736 = vrot.slane %v1722, %v1735
      %v1737 = vcombine.low %v1460, %v1496
      %v1738 = vcombine.high %v1460, %v1496
      %v1740 = vunpack.c.l.s4 1983009808
      %v1741 = vunpack.c.0.s8 %v1740
      %v1742 = vlaneseq
      %v1743 = vshrl.u32 %v1742, 7
      %v1744 = vsub.s32 %v1741, %v1743
      %v1745 = vrot.slane %v1737, %v1744
      %v1747 = vunpack.c.l.s4 1983009808
      %v1748 = vunpack.c.0.s8 %v1747
      %v1749 = vlaneseq
      %v1750 = vshrl.u32 %v1749, 7
      %v1751 = vsub.s32 %v1748, %v1750
      %v1752 = vrot.slane %v1738, %v1751
      %v1753 = vcombine.low %v1514, %v1550
      %v1754 = vcombine.high %v1514, %v1550
      %v1756 = vunpack.c.l.s4 1983009808
      %v1757 = vunpack.c.0.s8 %v1756
      %v1758 = vlaneseq
      %v1759 = vshrl.u32 %v1758, 7
      %v1760 = vsub.s32 %v1757, %v1759
      %v1761 = vrot.slane %v1753, %v1760
      %v1763 = vunpack.c.l.s4 1983009808
      %v1764 = vunpack.c.0.s8 %v1763
      %v1765 = vlaneseq
      %v1766 = vshrl.u32 %v1765, 7
      %v1767 = vsub.s32 %v1764, %v1766
      %v1768 = vrot.slane %v1754, %v1767
      %v1769 = vcombine.low %v1532, %v1568
      %v1770 = vcombine.high %v1532, %v1568
      %v1772 = vunpack.c.l.s4 1983009808
      %v1773 = vunpack.c.0.s8 %v1772
      %v1774 = vlaneseq
      %v1775 = vshrl.u32 %v1774, 7
      %v1776 = vsub.s32 %v1773, %v1775
      %v1777 = vrot.slane %v1769, %v1776
      %v1779 = vunpack.c.l.s4 1983009808
      %v1780 = vunpack.c.0.s8 %v1779
      %v1781 = vlaneseq
      %v1782 = vshrl.u32 %v1781, 7
      %v1783 = vsub.s32 %v1780, %v1782
      %v1784 = vrot.slane %v1770, %v1783
      %v1785 = vcombine.low %v1729, %v1745
      %v1786 = vcombine.high %v1729, %v1745
      %v1788 = vunpack.c.l.s4 1934713408
      %v1789 = vunpack.c.0.s8 %v1788
      %v1790 = vlaneseq
      %v1791 = vshrl.u32 %v1790, 7
      %v1792 = vsub.s32 %v1789, %v1791
      %v1793 = vrot.slane %v1785, %v1792
      %v1795 = vunpack.c.l.s4 1934713408
      %v1796 = vunpack.c.0.s8 %v1795
      %v1797 = vlaneseq
      %v1798 = vshrl.u32 %v1797, 7
      %v1799 = vsub.s32 %v1796, %v1798
      %v1800 = vrot.slane %v1786, %v1799
      %v1801 = vcombine.low %v1736, %v1752
      %v1802 = vcombine.high %v1736, %v1752
      %v1804 = vunpack.c.l.s4 1934713408
      %v1805 = vunpack.c.0.s8 %v1804
      %v1806 = vlaneseq
      %v1807 = vshrl.u32 %v1806, 7
      %v1808 = vsub.s32 %v1805, %v1807
      %v1809 = vrot.slane %v1801, %v1808
      %v1811 = vunpack.c.l.s4 1934713408
      %v1812 = vunpack.c.0.s8 %v1811
      %v1813 = vlaneseq
      %v1814 = vshrl.u32 %v1813, 7
      %v1815 = vsub.s32 %v1812, %v1814
      %v1816 = vrot.slane %v1802, %v1815
      %v1817 = vcombine.low %v1761, %v1777
      %v1818 = vcombine.high %v1761, %v1777
      %v1820 = vunpack.c.l.s4 1934713408
      %v1821 = vunpack.c.0.s8 %v1820
      %v1822 = vlaneseq
      %v1823 = vshrl.u32 %v1822, 7
      %v1824 = vsub.s32 %v1821, %v1823
      %v1825 = vrot.slane %v1817, %v1824
      %v1827 = vunpack.c.l.s4 1934713408
      %v1828 = vunpack.c.0.s8 %v1827
      %v1829 = vlaneseq
      %v1830 = vshrl.u32 %v1829, 7
      %v1831 = vsub.s32 %v1828, %v1830
      %v1832 = vrot.slane %v1818, %v1831
      %v1833 = vcombine.low %v1768, %v1784
      %v1834 = vcombine.high %v1768, %v1784
      %v1836 = vunpack.c.l.s4 1934713408
      %v1837 = vunpack.c.0.s8 %v1836
      %v1838 = vlaneseq
      %v1839 = vshrl.u32 %v1838, 7
      %v1840 = vsub.s32 %v1837, %v1839
      %v1841 = vrot.slane %v1833, %v1840
      %v1843 = vunpack.c.l.s4 1934713408
      %v1844 = vunpack.c.0.s8 %v1843
      %v1845 = vlaneseq
      %v1846 = vshrl.u32 %v1845, 7
      %v1847 = vsub.s32 %v1844, %v1846
      %v1848 = vrot.slane %v1834, %v1847
      %v1849 = vcombine.low %v1793, %v1825
      %v1850 = vcombine.high %v1793, %v1825
      %v1851 = vcombine.low %v1800, %v1832
      %v1852 = vcombine.high %v1800, %v1832
      %v1853 = vcombine.low %v1809, %v1841
      %v1854 = vcombine.high %v1809, %v1841
      %v1855 = vcombine.low %v1816, %v1848
      %v1856 = vcombine.high %v1816, %v1848
      %v1857 = vcombine.low %v1286, %v1336
      %v1858 = vcombine.high %v1286, %v1336
      %v1860 = vunpack.c.l.s4 1983009808
      %v1861 = vunpack.c.0.s8 %v1860
      %v1862 = vlaneseq
      %v1863 = vshrl.u32 %v1862, 7
      %v1864 = vsub.s32 %v1861, %v1863
      %v1865 = vrot.slane %v1857, %v1864
      %v1867 = vunpack.c.l.s4 1983009808
      %v1868 = vunpack.c.0.s8 %v1867
      %v1869 = vlaneseq
      %v1870 = vshrl.u32 %v1869, 7
      %v1871 = vsub.s32 %v1868, %v1870
      %v1872 = vrot.slane %v1858, %v1871
      %v1873 = vcombine.low %v1318, %v1354
      %v1874 = vcombine.high %v1318, %v1354
      %v1876 = vunpack.c.l.s4 1983009808
      %v1877 = vunpack.c.0.s8 %v1876
      %v1878 = vlaneseq
      %v1879 = vshrl.u32 %v1878, 7
      %v1880 = vsub.s32 %v1877, %v1879
      %v1881 = vrot.slane %v1873, %v1880
      %v1883 = vunpack.c.l.s4 1983009808
      %v1884 = vunpack.c.0.s8 %v1883
      %v1885 = vlaneseq
      %v1886 = vshrl.u32 %v1885, 7
      %v1887 = vsub.s32 %v1884, %v1886
      %v1888 = vrot.slane %v1874, %v1887
      %v1889 = vcombine.low %v1372, %v1408
      %v1890 = vcombine.high %v1372, %v1408
      %v1892 = vunpack.c.l.s4 1983009808
      %v1893 = vunpack.c.0.s8 %v1892
      %v1894 = vlaneseq
      %v1895 = vshrl.u32 %v1894, 7
      %v1896 = vsub.s32 %v1893, %v1895
      %v1897 = vrot.slane %v1889, %v1896
      %v1899 = vunpack.c.l.s4 1983009808
      %v1900 = vunpack.c.0.s8 %v1899
      %v1901 = vlaneseq
      %v1902 = vshrl.u32 %v1901, 7
      %v1903 = vsub.s32 %v1900, %v1902
      %v1904 = vrot.slane %v1890, %v1903
      %v1905 = vcombine.low %v1390, %v1426
      %v1906 = vcombine.high %v1390, %v1426
      %v1908 = vunpack.c.l.s4 1983009808
      %v1909 = vunpack.c.0.s8 %v1908
      %v1910 = vlaneseq
      %v1911 = vshrl.u32 %v1910, 7
      %v1912 = vsub.s32 %v1909, %v1911
      %v1913 = vrot.slane %v1905, %v1912
      %v1915 = vunpack.c.l.s4 1983009808
      %v1916 = vunpack.c.0.s8 %v1915
      %v1917 = vlaneseq
      %v1918 = vshrl.u32 %v1917, 7
      %v1919 = vsub.s32 %v1916, %v1918
      %v1920 = vrot.slane %v1906, %v1919
      %v1921 = vcombine.low %v1865, %v1881
      %v1922 = vcombine.high %v1865, %v1881
      %v1924 = vunpack.c.l.s4 1934713408
      %v1925 = vunpack.c.0.s8 %v1924
      %v1926 = vlaneseq
      %v1927 = vshrl.u32 %v1926, 7
      %v1928 = vsub.s32 %v1925, %v1927
      %v1929 = vrot.slane %v1921, %v1928
      %v1931 = vunpack.c.l.s4 1934713408
      %v1932 = vunpack.c.0.s8 %v1931
      %v1933 = vlaneseq
      %v1934 = vshrl.u32 %v1933, 7
      %v1935 = vsub.s32 %v1932, %v1934
      %v1936 = vrot.slane %v1922, %v1935
      %v1937 = vcombine.low %v1872, %v1888
      %v1938 = vcombine.high %v1872, %v1888
      %v1940 = vunpack.c.l.s4 1934713408
      %v1941 = vunpack.c.0.s8 %v1940
      %v1942 = vlaneseq
      %v1943 = vshrl.u32 %v1942, 7
      %v1944 = vsub.s32 %v1941, %v1943
      %v1945 = vrot.slane %v1937, %v1944
      %v1947 = vunpack.c.l.s4 1934713408
      %v1948 = vunpack.c.0.s8 %v1947
      %v1949 = vlaneseq
      %v1950 = vshrl.u32 %v1949, 7
      %v1951 = vsub.s32 %v1948, %v1950
      %v1952 = vrot.slane %v1938, %v1951
      %v1953 = vcombine.low %v1897, %v1913
      %v1954 = vcombine.high %v1897, %v1913
      %v1956 = vunpack.c.l.s4 1934713408
      %v1957 = vunpack.c.0.s8 %v1956
      %v1958 = vlaneseq
      %v1959 = vshrl.u32 %v1958, 7
      %v1960 = vsub.s32 %v1957, %v1959
      %v1961 = vrot.slane %v1953, %v1960
      %v1963 = vunpack.c.l.s4 1934713408
      %v1964 = vunpack.c.0.s8 %v1963
      %v1965 = vlaneseq
      %v1966 = vshrl.u32 %v1965, 7
      %v1967 = vsub.s32 %v1964, %v1966
      %v1968 = vrot.slane %v1954, %v1967
      %v1969 = vcombine.low %v1904, %v1920
      %v1970 = vcombine.high %v1904, %v1920
      %v1972 = vunpack.c.l.s4 1934713408
      %v1973 = vunpack.c.0.s8 %v1972
      %v1974 = vlaneseq
      %v1975 = vshrl.u32 %v1974, 7
      %v1976 = vsub.s32 %v1973, %v1975
      %v1977 = vrot.slane %v1969, %v1976
      %v1979 = vunpack.c.l.s4 1934713408
      %v1980 = vunpack.c.0.s8 %v1979
      %v1981 = vlaneseq
      %v1982 = vshrl.u32 %v1981, 7
      %v1983 = vsub.s32 %v1980, %v1982
      %v1984 = vrot.slane %v1970, %v1983
      %v1985 = vcombine.low %v1929, %v1961
      %v1986 = vcombine.high %v1929, %v1961
      %v1987 = vcombine.low %v1936, %v1968
      %v1988 = vcombine.high %v1936, %v1968
      %v1989 = vcombine.low %v1945, %v1977
      %v1990 = vcombine.high %v1945, %v1977
      %v1991 = vcombine.low %v1952, %v1984
      %v1992 = vcombine.high %v1952, %v1984
      %v1993 = vcombine.low %v1444, %v1480
      %v1994 = vcombine.high %v1444, %v1480
      %v1996 = vunpack.c.l.s4 1983009808
      %v1997 = vunpack.c.0.s8 %v1996
      %v1998 = vlaneseq
      %v1999 = vshrl.u32 %v1998, 7
      %v2000 = vsub.s32 %v1997, %v1999
      %v2001 = vrot.slane %v1993, %v2000
      %v2003 = vunpack.c.l.s4 1983009808
      %v2004 = vunpack.c.0.s8 %v2003
      %v2005 = vlaneseq
      %v2006 = vshrl.u32 %v2005, 7
      %v2007 = vsub.s32 %v2004, %v2006
      %v2008 = vrot.slane %v1994, %v2007
      %v2009 = vcombine.low %v1462, %v1498
      %v2010 = vcombine.high %v1462, %v1498
      %v2012 = vunpack.c.l.s4 1983009808
      %v2013 = vunpack.c.0.s8 %v2012
      %v2014 = vlaneseq
      %v2015 = vshrl.u32 %v2014, 7
      %v2016 = vsub.s32 %v2013, %v2015
      %v2017 = vrot.slane %v2009, %v2016
      %v2019 = vunpack.c.l.s4 1983009808
      %v2020 = vunpack.c.0.s8 %v2019
      %v2021 = vlaneseq
      %v2022 = vshrl.u32 %v2021, 7
      %v2023 = vsub.s32 %v2020, %v2022
      %v2024 = vrot.slane %v2010, %v2023
      %v2025 = vcombine.low %v1516, %v1552
      %v2026 = vcombine.high %v1516, %v1552
      %v2028 = vunpack.c.l.s4 1983009808
      %v2029 = vunpack.c.0.s8 %v2028
      %v2030 = vlaneseq
      %v2031 = vshrl.u32 %v2030, 7
      %v2032 = vsub.s32 %v2029, %v2031
      %v2033 = vrot.slane %v2025, %v2032
      %v2035 = vunpack.c.l.s4 1983009808
      %v2036 = vunpack.c.0.s8 %v2035
      %v2037 = vlaneseq
      %v2038 = vshrl.u32 %v2037, 7
      %v2039 = vsub.s32 %v2036, %v2038
      %v2040 = vrot.slane %v2026, %v2039
      %v2041 = vcombine.low %v1534, %v1570
      %v2042 = vcombine.high %v1534, %v1570
      %v2044 = vunpack.c.l.s4 1983009808
      %v2045 = vunpack.c.0.s8 %v2044
      %v2046 = vlaneseq
      %v2047 = vshrl.u32 %v2046, 7
      %v2048 = vsub.s32 %v2045, %v2047
      %v2049 = vrot.slane %v2041, %v2048
      %v2051 = vunpack.c.l.s4 1983009808
      %v2052 = vunpack.c.0.s8 %v2051
      %v2053 = vlaneseq
      %v2054 = vshrl.u32 %v2053, 7
      %v2055 = vsub.s32 %v2052, %v2054
      %v2056 = vrot.slane %v2042, %v2055
      %v2057 = vcombine.low %v2001, %v2017
      %v2058 = vcombine.high %v2001, %v2017
      %v2060 = vunpack.c.l.s4 1934713408
      %v2061 = vunpack.c.0.s8 %v2060
      %v2062 = vlaneseq
      %v2063 = vshrl.u32 %v2062, 7
      %v2064 = vsub.s32 %v2061, %v2063
      %v2065 = vrot.slane %v2057, %v2064
      %v2067 = vunpack.c.l.s4 1934713408
      %v2068 = vunpack.c.0.s8 %v2067
      %v2069 = vlaneseq
      %v2070 = vshrl.u32 %v2069, 7
      %v2071 = vsub.s32 %v2068, %v2070
      %v2072 = vrot.slane %v2058, %v2071
      %v2073 = vcombine.low %v2008, %v2024
      %v2074 = vcombine.high %v2008, %v2024
      %v2076 = vunpack.c.l.s4 1934713408
      %v2077 = vunpack.c.0.s8 %v2076
      %v2078 = vlaneseq
      %v2079 = vshrl.u32 %v2078, 7
      %v2080 = vsub.s32 %v2077, %v2079
      %v2081 = vrot.slane %v2073, %v2080
      %v2083 = vunpack.c.l.s4 1934713408
      %v2084 = vunpack.c.0.s8 %v2083
      %v2085 = vlaneseq
      %v2086 = vshrl.u32 %v2085, 7
      %v2087 = vsub.s32 %v2084, %v2086
      %v2088 = vrot.slane %v2074, %v2087
      %v2089 = vcombine.low %v2033, %v2049
      %v2090 = vcombine.high %v2033, %v2049
      %v2092 = vunpack.c.l.s4 1934713408
      %v2093 = vunpack.c.0.s8 %v2092
      %v2094 = vlaneseq
      %v2095 = vshrl.u32 %v2094, 7
      %v2096 = vsub.s32 %v2093, %v2095
      %v2097 = vrot.slane %v2089, %v2096
      %v2099 = vunpack.c.l.s4 1934713408
      %v2100 = vunpack.c.0.s8 %v2099
      %v2101 = vlaneseq
      %v2102 = vshrl.u32 %v2101, 7
      %v2103 = vsub.s32 %v2100, %v2102
      %v2104 = vrot.slane %v2090, %v2103
      %v2105 = vcombine.low %v2040, %v2056
      %v2106 = vcombine.high %v2040, %v2056
      %v2108 = vunpack.c.l.s4 1934713408
      %v2109 = vunpack.c.0.s8 %v2108
      %v2110 = vlaneseq
      %v2111 = vshrl.u32 %v2110, 7
      %v2112 = vsub.s32 %v2109, %v2111
      %v2113 = vrot.slane %v2105, %v2112
      %v2115 = vunpack.c.l.s4 1934713408
      %v2116 = vunpack.c.0.s8 %v2115
      %v2117 = vlaneseq
      %v2118 = vshrl.u32 %v2117, 7
      %v2119 = vsub.s32 %v2116, %v2118
      %v2120 = vrot.slane %v2106, %v2119
      %v2121 = vcombine.low %v2065, %v2097
      %v2122 = vcombine.high %v2065, %v2097
      %v2123 = vcombine.low %v2072, %v2104
      %v2124 = vcombine.high %v2072, %v2104
      %v2125 = vcombine.low %v2081, %v2113
      %v2126 = vcombine.high %v2081, %v2113
      %v2127 = vcombine.low %v2088, %v2120
      %v2128 = vcombine.high %v2088, %v2120
      %v2129 = vcombine.low %v1291, %v1338
      %v2130 = vcombine.high %v1291, %v1338
      %v2132 = vunpack.c.l.s4 1983009808
      %v2133 = vunpack.c.0.s8 %v2132
      %v2134 = vlaneseq
      %v2135 = vshrl.u32 %v2134, 7
      %v2136 = vsub.s32 %v2133, %v2135
      %v2137 = vrot.slane %v2129, %v2136
      %v2139 = vunpack.c.l.s4 1983009808
      %v2140 = vunpack.c.0.s8 %v2139
      %v2141 = vlaneseq
      %v2142 = vshrl.u32 %v2141, 7
      %v2143 = vsub.s32 %v2140, %v2142
      %v2144 = vrot.slane %v2130, %v2143
      %v2145 = vcombine.low %v1320, %v1356
      %v2146 = vcombine.high %v1320, %v1356
      %v2148 = vunpack.c.l.s4 1983009808
      %v2149 = vunpack.c.0.s8 %v2148
      %v2150 = vlaneseq
      %v2151 = vshrl.u32 %v2150, 7
      %v2152 = vsub.s32 %v2149, %v2151
      %v2153 = vrot.slane %v2145, %v2152
      %v2155 = vunpack.c.l.s4 1983009808
      %v2156 = vunpack.c.0.s8 %v2155
      %v2157 = vlaneseq
      %v2158 = vshrl.u32 %v2157, 7
      %v2159 = vsub.s32 %v2156, %v2158
      %v2160 = vrot.slane %v2146, %v2159
      %v2161 = vcombine.low %v1374, %v1410
      %v2162 = vcombine.high %v1374, %v1410
      %v2164 = vunpack.c.l.s4 1983009808
      %v2165 = vunpack.c.0.s8 %v2164
      %v2166 = vlaneseq
      %v2167 = vshrl.u32 %v2166, 7
      %v2168 = vsub.s32 %v2165, %v2167
      %v2169 = vrot.slane %v2161, %v2168
      %v2171 = vunpack.c.l.s4 1983009808
      %v2172 = vunpack.c.0.s8 %v2171
      %v2173 = vlaneseq
      %v2174 = vshrl.u32 %v2173, 7
      %v2175 = vsub.s32 %v2172, %v2174
      %v2176 = vrot.slane %v2162, %v2175
      %v2177 = vcombine.low %v1392, %v1428
      %v2178 = vcombine.high %v1392, %v1428
      %v2180 = vunpack.c.l.s4 1983009808
      %v2181 = vunpack.c.0.s8 %v2180
      %v2182 = vlaneseq
      %v2183 = vshrl.u32 %v2182, 7
      %v2184 = vsub.s32 %v2181, %v2183
      %v2185 = vrot.slane %v2177, %v2184
      %v2187 = vunpack.c.l.s4 1983009808
      %v2188 = vunpack.c.0.s8 %v2187
      %v2189 = vlaneseq
      %v2190 = vshrl.u32 %v2189, 7
      %v2191 = vsub.s32 %v2188, %v2190
      %v2192 = vrot.slane %v2178, %v2191
      %v2193 = vcombine.low %v2137, %v2153
      %v2194 = vcombine.high %v2137, %v2153
      %v2196 = vunpack.c.l.s4 1934713408
      %v2197 = vunpack.c.0.s8 %v2196
      %v2198 = vlaneseq
      %v2199 = vshrl.u32 %v2198, 7
      %v2200 = vsub.s32 %v2197, %v2199
      %v2201 = vrot.slane %v2193, %v2200
      %v2203 = vunpack.c.l.s4 1934713408
      %v2204 = vunpack.c.0.s8 %v2203
      %v2205 = vlaneseq
      %v2206 = vshrl.u32 %v2205, 7
      %v2207 = vsub.s32 %v2204, %v2206
      %v2208 = vrot.slane %v2194, %v2207
      %v2209 = vcombine.low %v2144, %v2160
      %v2210 = vcombine.high %v2144, %v2160
      %v2212 = vunpack.c.l.s4 1934713408
      %v2213 = vunpack.c.0.s8 %v2212
      %v2214 = vlaneseq
      %v2215 = vshrl.u32 %v2214, 7
      %v2216 = vsub.s32 %v2213, %v2215
      %v2217 = vrot.slane %v2209, %v2216
      %v2219 = vunpack.c.l.s4 1934713408
      %v2220 = vunpack.c.0.s8 %v2219
      %v2221 = vlaneseq
      %v2222 = vshrl.u32 %v2221, 7
      %v2223 = vsub.s32 %v2220, %v2222
      %v2224 = vrot.slane %v2210, %v2223
      %v2225 = vcombine.low %v2169, %v2185
      %v2226 = vcombine.high %v2169, %v2185
      %v2228 = vunpack.c.l.s4 1934713408
      %v2229 = vunpack.c.0.s8 %v2228
      %v2230 = vlaneseq
      %v2231 = vshrl.u32 %v2230, 7
      %v2232 = vsub.s32 %v2229, %v2231
      %v2233 = vrot.slane %v2225, %v2232
      %v2235 = vunpack.c.l.s4 1934713408
      %v2236 = vunpack.c.0.s8 %v2235
      %v2237 = vlaneseq
      %v2238 = vshrl.u32 %v2237, 7
      %v2239 = vsub.s32 %v2236, %v2238
      %v2240 = vrot.slane %v2226, %v2239
      %v2241 = vcombine.low %v2176, %v2192
      %v2242 = vcombine.high %v2176, %v2192
      %v2244 = vunpack.c.l.s4 1934713408
      %v2245 = vunpack.c.0.s8 %v2244
      %v2246 = vlaneseq
      %v2247 = vshrl.u32 %v2246, 7
      %v2248 = vsub.s32 %v2245, %v2247
      %v2249 = vrot.slane %v2241, %v2248
      %v2251 = vunpack.c.l.s4 1934713408
      %v2252 = vunpack.c.0.s8 %v2251
      %v2253 = vlaneseq
      %v2254 = vshrl.u32 %v2253, 7
      %v2255 = vsub.s32 %v2252, %v2254
      %v2256 = vrot.slane %v2242, %v2255
      %v2257 = vcombine.low %v2201, %v2233
      %v2258 = vcombine.high %v2201, %v2233
      %v2259 = vcombine.low %v2208, %v2240
      %v2260 = vcombine.high %v2208, %v2240
      %v2261 = vcombine.low %v2217, %v2249
      %v2262 = vcombine.high %v2217, %v2249
      %v2263 = vcombine.low %v2224, %v2256
      %v2264 = vcombine.high %v2224, %v2256
      %v2265 = vcombine.low %v1446, %v1482
      %v2266 = vcombine.high %v1446, %v1482
      %v2268 = vunpack.c.l.s4 1983009808
      %v2269 = vunpack.c.0.s8 %v2268
      %v2270 = vlaneseq
      %v2271 = vshrl.u32 %v2270, 7
      %v2272 = vsub.s32 %v2269, %v2271
      %v2273 = vrot.slane %v2265, %v2272
      %v2275 = vunpack.c.l.s4 1983009808
      %v2276 = vunpack.c.0.s8 %v2275
      %v2277 = vlaneseq
      %v2278 = vshrl.u32 %v2277, 7
      %v2279 = vsub.s32 %v2276, %v2278
      %v2280 = vrot.slane %v2266, %v2279
      %v2281 = vcombine.low %v1464, %v1500
      %v2282 = vcombine.high %v1464, %v1500
      %v2284 = vunpack.c.l.s4 1983009808
      %v2285 = vunpack.c.0.s8 %v2284
      %v2286 = vlaneseq
      %v2287 = vshrl.u32 %v2286, 7
      %v2288 = vsub.s32 %v2285, %v2287
      %v2289 = vrot.slane %v2281, %v2288
      %v2291 = vunpack.c.l.s4 1983009808
      %v2292 = vunpack.c.0.s8 %v2291
      %v2293 = vlaneseq
      %v2294 = vshrl.u32 %v2293, 7
      %v2295 = vsub.s32 %v2292, %v2294
      %v2296 = vrot.slane %v2282, %v2295
      %v2297 = vcombine.low %v1518, %v1554
      %v2298 = vcombine.high %v1518, %v1554
      %v2300 = vunpack.c.l.s4 1983009808
      %v2301 = vunpack.c.0.s8 %v2300
      %v2302 = vlaneseq
      %v2303 = vshrl.u32 %v2302, 7
      %v2304 = vsub.s32 %v2301, %v2303
      %v2305 = vrot.slane %v2297, %v2304
      %v2307 = vunpack.c.l.s4 1983009808
      %v2308 = vunpack.c.0.s8 %v2307
      %v2309 = vlaneseq
      %v2310 = vshrl.u32 %v2309, 7
      %v2311 = vsub.s32 %v2308, %v2310
      %v2312 = vrot.slane %v2298, %v2311
      %v2313 = vcombine.low %v1536, %v1572
      %v2314 = vcombine.high %v1536, %v1572
      %v2316 = vunpack.c.l.s4 1983009808
      %v2317 = vunpack.c.0.s8 %v2316
      %v2318 = vlaneseq
      %v2319 = vshrl.u32 %v2318, 7
      %v2320 = vsub.s32 %v2317, %v2319
      %v2321 = vrot.slane %v2313, %v2320
      %v2323 = vunpack.c.l.s4 1983009808
      %v2324 = vunpack.c.0.s8 %v2323
      %v2325 = vlaneseq
      %v2326 = vshrl.u32 %v2325, 7
      %v2327 = vsub.s32 %v2324, %v2326
      %v2328 = vrot.slane %v2314, %v2327
      %v2329 = vcombine.low %v2273, %v2289
      %v2330 = vcombine.high %v2273, %v2289
      %v2332 = vunpack.c.l.s4 1934713408
      %v2333 = vunpack.c.0.s8 %v2332
      %v2334 = vlaneseq
      %v2335 = vshrl.u32 %v2334, 7
      %v2336 = vsub.s32 %v2333, %v2335
      %v2337 = vrot.slane %v2329, %v2336
      %v2339 = vunpack.c.l.s4 1934713408
      %v2340 = vunpack.c.0.s8 %v2339
      %v2341 = vlaneseq
      %v2342 = vshrl.u32 %v2341, 7
      %v2343 = vsub.s32 %v2340, %v2342
      %v2344 = vrot.slane %v2330, %v2343
      %v2345 = vcombine.low %v2280, %v2296
      %v2346 = vcombine.high %v2280, %v2296
      %v2348 = vunpack.c.l.s4 1934713408
      %v2349 = vunpack.c.0.s8 %v2348
      %v2350 = vlaneseq
      %v2351 = vshrl.u32 %v2350, 7
      %v2352 = vsub.s32 %v2349, %v2351
      %v2353 = vrot.slane %v2345, %v2352
      %v2355 = vunpack.c.l.s4 1934713408
      %v2356 = vunpack.c.0.s8 %v2355
      %v2357 = vlaneseq
      %v2358 = vshrl.u32 %v2357, 7
      %v2359 = vsub.s32 %v2356, %v2358
      %v2360 = vrot.slane %v2346, %v2359
      %v2361 = vcombine.low %v2305, %v2321
      %v2362 = vcombine.high %v2305, %v2321
      %v2364 = vunpack.c.l.s4 1934713408
      %v2365 = vunpack.c.0.s8 %v2364
      %v2366 = vlaneseq
      %v2367 = vshrl.u32 %v2366, 7
      %v2368 = vsub.s32 %v2365, %v2367
      %v2369 = vrot.slane %v2361, %v2368
      %v2371 = vunpack.c.l.s4 1934713408
      %v2372 = vunpack.c.0.s8 %v2371
      %v2373 = vlaneseq
      %v2374 = vshrl.u32 %v2373, 7
      %v2375 = vsub.s32 %v2372, %v2374
      %v2376 = vrot.slane %v2362, %v2375
      %v2377 = vcombine.low %v2312, %v2328
      %v2378 = vcombine.high %v2312, %v2328
      %v2380 = vunpack.c.l.s4 1934713408
      %v2381 = vunpack.c.0.s8 %v2380
      %v2382 = vlaneseq
      %v2383 = vshrl.u32 %v2382, 7
      %v2384 = vsub.s32 %v2381, %v2383
      %v2385 = vrot.slane %v2377, %v2384
      %v2387 = vunpack.c.l.s4 1934713408
      %v2388 = vunpack.c.0.s8 %v2387
      %v2389 = vlaneseq
      %v2390 = vshrl.u32 %v2389, 7
      %v2391 = vsub.s32 %v2388, %v2390
      %v2392 = vrot.slane %v2378, %v2391
      %v2393 = vcombine.low %v2337, %v2369
      %v2394 = vcombine.high %v2337, %v2369
      %v2395 = vcombine.low %v2344, %v2376
      %v2396 = vcombine.high %v2344, %v2376
      %v2397 = vcombine.low %v2353, %v2385
      %v2398 = vcombine.high %v2353, %v2385
      %v2399 = vcombine.low %v2360, %v2392
      %v2400 = vcombine.high %v2360, %v2392
      %v2401 = vcombine.low %v1296, %v1340
      %v2402 = vcombine.high %v1296, %v1340
      %v2404 = vunpack.c.l.s4 1983009808
      %v2405 = vunpack.c.0.s8 %v2404
      %v2406 = vlaneseq
      %v2407 = vshrl.u32 %v2406, 7
      %v2408 = vsub.s32 %v2405, %v2407
      %v2409 = vrot.slane %v2401, %v2408
      %v2411 = vunpack.c.l.s4 1983009808
      %v2412 = vunpack.c.0.s8 %v2411
      %v2413 = vlaneseq
      %v2414 = vshrl.u32 %v2413, 7
      %v2415 = vsub.s32 %v2412, %v2414
      %v2416 = vrot.slane %v2402, %v2415
      %v2417 = vcombine.low %v1322, %v1358
      %v2418 = vcombine.high %v1322, %v1358
      %v2420 = vunpack.c.l.s4 1983009808
      %v2421 = vunpack.c.0.s8 %v2420
      %v2422 = vlaneseq
      %v2423 = vshrl.u32 %v2422, 7
      %v2424 = vsub.s32 %v2421, %v2423
      %v2425 = vrot.slane %v2417, %v2424
      %v2427 = vunpack.c.l.s4 1983009808
      %v2428 = vunpack.c.0.s8 %v2427
      %v2429 = vlaneseq
      %v2430 = vshrl.u32 %v2429, 7
      %v2431 = vsub.s32 %v2428, %v2430
      %v2432 = vrot.slane %v2418, %v2431
      %v2433 = vcombine.low %v1376, %v1412
      %v2434 = vcombine.high %v1376, %v1412
      %v2436 = vunpack.c.l.s4 1983009808
      %v2437 = vunpack.c.0.s8 %v2436
      %v2438 = vlaneseq
      %v2439 = vshrl.u32 %v2438, 7
      %v2440 = vsub.s32 %v2437, %v2439
      %v2441 = vrot.slane %v2433, %v2440
      %v2443 = vunpack.c.l.s4 1983009808
      %v2444 = vunpack.c.0.s8 %v2443
      %v2445 = vlaneseq
      %v2446 = vshrl.u32 %v2445, 7
      %v2447 = vsub.s32 %v2444, %v2446
      %v2448 = vrot.slane %v2434, %v2447
      %v2449 = vcombine.low %v1394, %v1430
      %v2450 = vcombine.high %v1394, %v1430
      %v2452 = vunpack.c.l.s4 1983009808
      %v2453 = vunpack.c.0.s8 %v2452
      %v2454 = vlaneseq
      %v2455 = vshrl.u32 %v2454, 7
      %v2456 = vsub.s32 %v2453, %v2455
      %v2457 = vrot.slane %v2449, %v2456
      %v2459 = vunpack.c.l.s4 1983009808
      %v2460 = vunpack.c.0.s8 %v2459
      %v2461 = vlaneseq
      %v2462 = vshrl.u32 %v2461, 7
      %v2463 = vsub.s32 %v2460, %v2462
      %v2464 = vrot.slane %v2450, %v2463
      %v2465 = vcombine.low %v2409, %v2425
      %v2466 = vcombine.high %v2409, %v2425
      %v2468 = vunpack.c.l.s4 1934713408
      %v2469 = vunpack.c.0.s8 %v2468
      %v2470 = vlaneseq
      %v2471 = vshrl.u32 %v2470, 7
      %v2472 = vsub.s32 %v2469, %v2471
      %v2473 = vrot.slane %v2465, %v2472
      %v2475 = vunpack.c.l.s4 1934713408
      %v2476 = vunpack.c.0.s8 %v2475
      %v2477 = vlaneseq
      %v2478 = vshrl.u32 %v2477, 7
      %v2479 = vsub.s32 %v2476, %v2478
      %v2480 = vrot.slane %v2466, %v2479
      %v2481 = vcombine.low %v2416, %v2432
      %v2482 = vcombine.high %v2416, %v2432
      %v2484 = vunpack.c.l.s4 1934713408
      %v2485 = vunpack.c.0.s8 %v2484
      %v2486 = vlaneseq
      %v2487 = vshrl.u32 %v2486, 7
      %v2488 = vsub.s32 %v2485, %v2487
      %v2489 = vrot.slane %v2481, %v2488
      %v2491 = vunpack.c.l.s4 1934713408
      %v2492 = vunpack.c.0.s8 %v2491
      %v2493 = vlaneseq
      %v2494 = vshrl.u32 %v2493, 7
      %v2495 = vsub.s32 %v2492, %v2494
      %v2496 = vrot.slane %v2482, %v2495
      %v2497 = vcombine.low %v2441, %v2457
      %v2498 = vcombine.high %v2441, %v2457
      %v2500 = vunpack.c.l.s4 1934713408
      %v2501 = vunpack.c.0.s8 %v2500
      %v2502 = vlaneseq
      %v2503 = vshrl.u32 %v2502, 7
      %v2504 = vsub.s32 %v2501, %v2503
      %v2505 = vrot.slane %v2497, %v2504
      %v2507 = vunpack.c.l.s4 1934713408
      %v2508 = vunpack.c.0.s8 %v2507
      %v2509 = vlaneseq
      %v2510 = vshrl.u32 %v2509, 7
      %v2511 = vsub.s32 %v2508, %v2510
      %v2512 = vrot.slane %v2498, %v2511
      %v2513 = vcombine.low %v2448, %v2464
      %v2514 = vcombine.high %v2448, %v2464
      %v2516 = vunpack.c.l.s4 1934713408
      %v2517 = vunpack.c.0.s8 %v2516
      %v2518 = vlaneseq
      %v2519 = vshrl.u32 %v2518, 7
      %v2520 = vsub.s32 %v2517, %v2519
      %v2521 = vrot.slane %v2513, %v2520
      %v2523 = vunpack.c.l.s4 1934713408
      %v2524 = vunpack.c.0.s8 %v2523
      %v2525 = vlaneseq
      %v2526 = vshrl.u32 %v2525, 7
      %v2527 = vsub.s32 %v2524, %v2526
      %v2528 = vrot.slane %v2514, %v2527
      %v2529 = vcombine.low %v2473, %v2505
      %v2530 = vcombine.high %v2473, %v2505
      %v2531 = vcombine.low %v2480, %v2512
      %v2532 = vcombine.high %v2480, %v2512
      %v2533 = vcombine.low %v2489, %v2521
      %v2534 = vcombine.high %v2489, %v2521
      %v2535 = vcombine.low %v2496, %v2528
      %v2536 = vcombine.high %v2496, %v2528
      %v2537 = vcombine.low %v1448, %v1484
      %v2538 = vcombine.high %v1448, %v1484
      %v2540 = vunpack.c.l.s4 1983009808
      %v2541 = vunpack.c.0.s8 %v2540
      %v2542 = vlaneseq
      %v2543 = vshrl.u32 %v2542, 7
      %v2544 = vsub.s32 %v2541, %v2543
      %v2545 = vrot.slane %v2537, %v2544
      %v2547 = vunpack.c.l.s4 1983009808
      %v2548 = vunpack.c.0.s8 %v2547
      %v2549 = vlaneseq
      %v2550 = vshrl.u32 %v2549, 7
      %v2551 = vsub.s32 %v2548, %v2550
      %v2552 = vrot.slane %v2538, %v2551
      %v2553 = vcombine.low %v1466, %v1502
      %v2554 = vcombine.high %v1466, %v1502
      %v2556 = vunpack.c.l.s4 1983009808
      %v2557 = vunpack.c.0.s8 %v2556
      %v2558 = vlaneseq
      %v2559 = vshrl.u32 %v2558, 7
      %v2560 = vsub.s32 %v2557, %v2559
      %v2561 = vrot.slane %v2553, %v2560
      %v2563 = vunpack.c.l.s4 1983009808
      %v2564 = vunpack.c.0.s8 %v2563
      %v2565 = vlaneseq
      %v2566 = vshrl.u32 %v2565, 7
      %v2567 = vsub.s32 %v2564, %v2566
      %v2568 = vrot.slane %v2554, %v2567
      %v2569 = vcombine.low %v1520, %v1556
      %v2570 = vcombine.high %v1520, %v1556
      %v2572 = vunpack.c.l.s4 1983009808
      %v2573 = vunpack.c.0.s8 %v2572
      %v2574 = vlaneseq
      %v2575 = vshrl.u32 %v2574, 7
      %v2576 = vsub.s32 %v2573, %v2575
      %v2577 = vrot.slane %v2569, %v2576
      %v2579 = vunpack.c.l.s4 1983009808
      %v2580 = vunpack.c.0.s8 %v2579
      %v2581 = vlaneseq
      %v2582 = vshrl.u32 %v2581, 7
      %v2583 = vsub.s32 %v2580, %v2582
      %v2584 = vrot.slane %v2570, %v2583
      %v2585 = vcombine.low %v1538, %v1574
      %v2586 = vcombine.high %v1538, %v1574
      %v2588 = vunpack.c.l.s4 1983009808
      %v2589 = vunpack.c.0.s8 %v2588
      %v2590 = vlaneseq
      %v2591 = vshrl.u32 %v2590, 7
      %v2592 = vsub.s32 %v2589, %v2591
      %v2593 = vrot.slane %v2585, %v2592
      %v2595 = vunpack.c.l.s4 1983009808
      %v2596 = vunpack.c.0.s8 %v2595
      %v2597 = vlaneseq
      %v2598 = vshrl.u32 %v2597, 7
      %v2599 = vsub.s32 %v2596, %v2598
      %v2600 = vrot.slane %v2586, %v2599
      %v2601 = vcombine.low %v2545, %v2561
      %v2602 = vcombine.high %v2545, %v2561
      %v2604 = vunpack.c.l.s4 1934713408
      %v2605 = vunpack.c.0.s8 %v2604
      %v2606 = vlaneseq
      %v2607 = vshrl.u32 %v2606, 7
      %v2608 = vsub.s32 %v2605, %v2607
      %v2609 = vrot.slane %v2601, %v2608
      %v2611 = vunpack.c.l.s4 1934713408
      %v2612 = vunpack.c.0.s8 %v2611
      %v2613 = vlaneseq
      %v2614 = vshrl.u32 %v2613, 7
      %v2615 = vsub.s32 %v2612, %v2614
      %v2616 = vrot.slane %v2602, %v2615
      %v2617 = vcombine.low %v2552, %v2568
      %v2618 = vcombine.high %v2552, %v2568
      %v2620 = vunpack.c.l.s4 1934713408
      %v2621 = vunpack.c.0.s8 %v2620
      %v2622 = vlaneseq
      %v2623 = vshrl.u32 %v2622, 7
      %v2624 = vsub.s32 %v2621, %v2623
      %v2625 = vrot.slane %v2617, %v2624
      %v2627 = vunpack.c.l.s4 1934713408
      %v2628 = vunpack.c.0.s8 %v2627
      %v2629 = vlaneseq
      %v2630 = vshrl.u32 %v2629, 7
      %v2631 = vsub.s32 %v2628, %v2630
      %v2632 = vrot.slane %v2618, %v2631
      %v2633 = vcombine.low %v2577, %v2593
      %v2634 = vcombine.high %v2577, %v2593
      %v2636 = vunpack.c.l.s4 1934713408
      %v2637 = vunpack.c.0.s8 %v2636
      %v2638 = vlaneseq
      %v2639 = vshrl.u32 %v2638, 7
      %v2640 = vsub.s32 %v2637, %v2639
      %v2641 = vrot.slane %v2633, %v2640
      %v2643 = vunpack.c.l.s4 1934713408
      %v2644 = vunpack.c.0.s8 %v2643
      %v2645 = vlaneseq
      %v2646 = vshrl.u32 %v2645, 7
      %v2647 = vsub.s32 %v2644, %v2646
      %v2648 = vrot.slane %v2634, %v2647
      %v2649 = vcombine.low %v2584, %v2600
      %v2650 = vcombine.high %v2584, %v2600
      %v2652 = vunpack.c.l.s4 1934713408
      %v2653 = vunpack.c.0.s8 %v2652
      %v2654 = vlaneseq
      %v2655 = vshrl.u32 %v2654, 7
      %v2656 = vsub.s32 %v2653, %v2655
      %v2657 = vrot.slane %v2649, %v2656
      %v2659 = vunpack.c.l.s4 1934713408
      %v2660 = vunpack.c.0.s8 %v2659
      %v2661 = vlaneseq
      %v2662 = vshrl.u32 %v2661, 7
      %v2663 = vsub.s32 %v2660, %v2662
      %v2664 = vrot.slane %v2650, %v2663
      %v2665 = vcombine.low %v2609, %v2641
      %v2666 = vcombine.high %v2609, %v2641
      %v2667 = vcombine.low %v2616, %v2648
      %v2668 = vcombine.high %v2616, %v2648
      %v2669 = vcombine.low %v2625, %v2657
      %v2670 = vcombine.high %v2625, %v2657
      %v2671 = vcombine.low %v2632, %v2664
      %v2672 = vcombine.high %v2632, %v2664
      %v2673 = vcombine.low %v1301, %v1342
      %v2674 = vcombine.high %v1301, %v1342
      %v2676 = vunpack.c.l.s4 1983009808
      %v2677 = vunpack.c.0.s8 %v2676
      %v2678 = vlaneseq
      %v2679 = vshrl.u32 %v2678, 7
      %v2680 = vsub.s32 %v2677, %v2679
      %v2681 = vrot.slane %v2673, %v2680
      %v2683 = vunpack.c.l.s4 1983009808
      %v2684 = vunpack.c.0.s8 %v2683
      %v2685 = vlaneseq
      %v2686 = vshrl.u32 %v2685, 7
      %v2687 = vsub.s32 %v2684, %v2686
      %v2688 = vrot.slane %v2674, %v2687
      %v2689 = vcombine.low %v1324, %v1360
      %v2690 = vcombine.high %v1324, %v1360
      %v2692 = vunpack.c.l.s4 1983009808
      %v2693 = vunpack.c.0.s8 %v2692
      %v2694 = vlaneseq
      %v2695 = vshrl.u32 %v2694, 7
      %v2696 = vsub.s32 %v2693, %v2695
      %v2697 = vrot.slane %v2689, %v2696
      %v2699 = vunpack.c.l.s4 1983009808
      %v2700 = vunpack.c.0.s8 %v2699
      %v2701 = vlaneseq
      %v2702 = vshrl.u32 %v2701, 7
      %v2703 = vsub.s32 %v2700, %v2702
      %v2704 = vrot.slane %v2690, %v2703
      %v2705 = vcombine.low %v1378, %v1414
      %v2706 = vcombine.high %v1378, %v1414
      %v2708 = vunpack.c.l.s4 1983009808
      %v2709 = vunpack.c.0.s8 %v2708
      %v2710 = vlaneseq
      %v2711 = vshrl.u32 %v2710, 7
      %v2712 = vsub.s32 %v2709, %v2711
      %v2713 = vrot.slane %v2705, %v2712
      %v2715 = vunpack.c.l.s4 1983009808
      %v2716 = vunpack.c.0.s8 %v2715
      %v2717 = vlaneseq
      %v2718 = vshrl.u32 %v2717, 7
      %v2719 = vsub.s32 %v2716, %v2718
      %v2720 = vrot.slane %v2706, %v2719
      %v2721 = vcombine.low %v1396, %v1432
      %v2722 = vcombine.high %v1396, %v1432
      %v2724 = vunpack.c.l.s4 1983009808
      %v2725 = vunpack.c.0.s8 %v2724
      %v2726 = vlaneseq
      %v2727 = vshrl.u32 %v2726, 7
      %v2728 = vsub.s32 %v2725, %v2727
      %v2729 = vrot.slane %v2721, %v2728
      %v2731 = vunpack.c.l.s4 1983009808
      %v2732 = vunpack.c.0.s8 %v2731
      %v2733 = vlaneseq
      %v2734 = vshrl.u32 %v2733, 7
      %v2735 = vsub.s32 %v2732, %v2734
      %v2736 = vrot.slane %v2722, %v2735
      %v2737 = vcombine.low %v2681, %v2697
      %v2738 = vcombine.high %v2681, %v2697
      %v2740 = vunpack.c.l.s4 1934713408
      %v2741 = vunpack.c.0.s8 %v2740
      %v2742 = vlaneseq
      %v2743 = vshrl.u32 %v2742, 7
      %v2744 = vsub.s32 %v2741, %v2743
      %v2745 = vrot.slane %v2737, %v2744
      %v2747 = vunpack.c.l.s4 1934713408
      %v2748 = vunpack.c.0.s8 %v2747
      %v2749 = vlaneseq
      %v2750 = vshrl.u32 %v2749, 7
      %v2751 = vsub.s32 %v2748, %v2750
      %v2752 = vrot.slane %v2738, %v2751
      %v2753 = vcombine.low %v2688, %v2704
      %v2754 = vcombine.high %v2688, %v2704
      %v2756 = vunpack.c.l.s4 1934713408
      %v2757 = vunpack.c.0.s8 %v2756
      %v2758 = vlaneseq
      %v2759 = vshrl.u32 %v2758, 7
      %v2760 = vsub.s32 %v2757, %v2759
      %v2761 = vrot.slane %v2753, %v2760
      %v2763 = vunpack.c.l.s4 1934713408
      %v2764 = vunpack.c.0.s8 %v2763
      %v2765 = vlaneseq
      %v2766 = vshrl.u32 %v2765, 7
      %v2767 = vsub.s32 %v2764, %v2766
      %v2768 = vrot.slane %v2754, %v2767
      %v2769 = vcombine.low %v2713, %v2729
      %v2770 = vcombine.high %v2713, %v2729
      %v2772 = vunpack.c.l.s4 1934713408
      %v2773 = vunpack.c.0.s8 %v2772
      %v2774 = vlaneseq
      %v2775 = vshrl.u32 %v2774, 7
      %v2776 = vsub.s32 %v2773, %v2775
      %v2777 = vrot.slane %v2769, %v2776
      %v2779 = vunpack.c.l.s4 1934713408
      %v2780 = vunpack.c.0.s8 %v2779
      %v2781 = vlaneseq
      %v2782 = vshrl.u32 %v2781, 7
      %v2783 = vsub.s32 %v2780, %v2782
      %v2784 = vrot.slane %v2770, %v2783
      %v2785 = vcombine.low %v2720, %v2736
      %v2786 = vcombine.high %v2720, %v2736
      %v2788 = vunpack.c.l.s4 1934713408
      %v2789 = vunpack.c.0.s8 %v2788
      %v2790 = vlaneseq
      %v2791 = vshrl.u32 %v2790, 7
      %v2792 = vsub.s32 %v2789, %v2791
      %v2793 = vrot.slane %v2785, %v2792
      %v2795 = vunpack.c.l.s4 1934713408
      %v2796 = vunpack.c.0.s8 %v2795
      %v2797 = vlaneseq
      %v2798 = vshrl.u32 %v2797, 7
      %v2799 = vsub.s32 %v2796, %v2798
      %v2800 = vrot.slane %v2786, %v2799
      %v2801 = vcombine.low %v2745, %v2777
      %v2802 = vcombine.high %v2745, %v2777
      %v2803 = vcombine.low %v2752, %v2784
      %v2804 = vcombine.high %v2752, %v2784
      %v2805 = vcombine.low %v2761, %v2793
      %v2806 = vcombine.high %v2761, %v2793
      %v2807 = vcombine.low %v2768, %v2800
      %v2808 = vcombine.high %v2768, %v2800
      %v2809 = vcombine.low %v1450, %v1486
      %v2810 = vcombine.high %v1450, %v1486
      %v2812 = vunpack.c.l.s4 1983009808
      %v2813 = vunpack.c.0.s8 %v2812
      %v2814 = vlaneseq
      %v2815 = vshrl.u32 %v2814, 7
      %v2816 = vsub.s32 %v2813, %v2815
      %v2817 = vrot.slane %v2809, %v2816
      %v2819 = vunpack.c.l.s4 1983009808
      %v2820 = vunpack.c.0.s8 %v2819
      %v2821 = vlaneseq
      %v2822 = vshrl.u32 %v2821, 7
      %v2823 = vsub.s32 %v2820, %v2822
      %v2824 = vrot.slane %v2810, %v2823
      %v2825 = vcombine.low %v1468, %v1504
      %v2826 = vcombine.high %v1468, %v1504
      %v2828 = vunpack.c.l.s4 1983009808
      %v2829 = vunpack.c.0.s8 %v2828
      %v2830 = vlaneseq
      %v2831 = vshrl.u32 %v2830, 7
      %v2832 = vsub.s32 %v2829, %v2831
      %v2833 = vrot.slane %v2825, %v2832
      %v2835 = vunpack.c.l.s4 1983009808
      %v2836 = vunpack.c.0.s8 %v2835
      %v2837 = vlaneseq
      %v2838 = vshrl.u32 %v2837, 7
      %v2839 = vsub.s32 %v2836, %v2838
      %v2840 = vrot.slane %v2826, %v2839
      %v2841 = vcombine.low %v1522, %v1558
      %v2842 = vcombine.high %v1522, %v1558
      %v2844 = vunpack.c.l.s4 1983009808
      %v2845 = vunpack.c.0.s8 %v2844
      %v2846 = vlaneseq
      %v2847 = vshrl.u32 %v2846, 7
      %v2848 = vsub.s32 %v2845, %v2847
      %v2849 = vrot.slane %v2841, %v2848
      %v2851 = vunpack.c.l.s4 1983009808
      %v2852 = vunpack.c.0.s8 %v2851
      %v2853 = vlaneseq
      %v2854 = vshrl.u32 %v2853, 7
      %v2855 = vsub.s32 %v2852, %v2854
      %v2856 = vrot.slane %v2842, %v2855
      %v2857 = vcombine.low %v1540, %v1576
      %v2858 = vcombine.high %v1540, %v1576
      %v2860 = vunpack.c.l.s4 1983009808
      %v2861 = vunpack.c.0.s8 %v2860
      %v2862 = vlaneseq
      %v2863 = vshrl.u32 %v2862, 7
      %v2864 = vsub.s32 %v2861, %v2863
      %v2865 = vrot.slane %v2857, %v2864
      %v2867 = vunpack.c.l.s4 1983009808
      %v2868 = vunpack.c.0.s8 %v2867
      %v2869 = vlaneseq
      %v2870 = vshrl.u32 %v2869, 7
      %v2871 = vsub.s32 %v2868, %v2870
      %v2872 = vrot.slane %v2858, %v2871
      %v2873 = vcombine.low %v2817, %v2833
      %v2874 = vcombine.high %v2817, %v2833
      %v2876 = vunpack.c.l.s4 1934713408
      %v2877 = vunpack.c.0.s8 %v2876
      %v2878 = vlaneseq
      %v2879 = vshrl.u32 %v2878, 7
      %v2880 = vsub.s32 %v2877, %v2879
      %v2881 = vrot.slane %v2873, %v2880
      %v2883 = vunpack.c.l.s4 1934713408
      %v2884 = vunpack.c.0.s8 %v2883
      %v2885 = vlaneseq
      %v2886 = vshrl.u32 %v2885, 7
      %v2887 = vsub.s32 %v2884, %v2886
      %v2888 = vrot.slane %v2874, %v2887
      %v2889 = vcombine.low %v2824, %v2840
      %v2890 = vcombine.high %v2824, %v2840
      %v2892 = vunpack.c.l.s4 1934713408
      %v2893 = vunpack.c.0.s8 %v2892
      %v2894 = vlaneseq
      %v2895 = vshrl.u32 %v2894, 7
      %v2896 = vsub.s32 %v2893, %v2895
      %v2897 = vrot.slane %v2889, %v2896
      %v2899 = vunpack.c.l.s4 1934713408
      %v2900 = vunpack.c.0.s8 %v2899
      %v2901 = vlaneseq
      %v2902 = vshrl.u32 %v2901, 7
      %v2903 = vsub.s32 %v2900, %v2902
      %v2904 = vrot.slane %v2890, %v2903
      %v2905 = vcombine.low %v2849, %v2865
      %v2906 = vcombine.high %v2849, %v2865
      %v2908 = vunpack.c.l.s4 1934713408
      %v2909 = vunpack.c.0.s8 %v2908
      %v2910 = vlaneseq
      %v2911 = vshrl.u32 %v2910, 7
      %v2912 = vsub.s32 %v2909, %v2911
      %v2913 = vrot.slane %v2905, %v2912
      %v2915 = vunpack.c.l.s4 1934713408
      %v2916 = vunpack.c.0.s8 %v2915
      %v2917 = vlaneseq
      %v2918 = vshrl.u32 %v2917, 7
      %v2919 = vsub.s32 %v2916, %v2918
      %v2920 = vrot.slane %v2906, %v2919
      %v2921 = vcombine.low %v2856, %v2872
      %v2922 = vcombine.high %v2856, %v2872
      %v2924 = vunpack.c.l.s4 1934713408
      %v2925 = vunpack.c.0.s8 %v2924
      %v2926 = vlaneseq
      %v2927 = vshrl.u32 %v2926, 7
      %v2928 = vsub.s32 %v2925, %v2927
      %v2929 = vrot.slane %v2921, %v2928
      %v2931 = vunpack.c.l.s4 1934713408
      %v2932 = vunpack.c.0.s8 %v2931
      %v2933 = vlaneseq
      %v2934 = vshrl.u32 %v2933, 7
      %v2935 = vsub.s32 %v2932, %v2934
      %v2936 = vrot.slane %v2922, %v2935
      %v2937 = vcombine.low %v2881, %v2913
      %v2938 = vcombine.high %v2881, %v2913
      %v2939 = vcombine.low %v2888, %v2920
      %v2940 = vcombine.high %v2888, %v2920
      %v2941 = vcombine.low %v2897, %v2929
      %v2942 = vcombine.high %v2897, %v2929
      %v2943 = vcombine.low %v2904, %v2936
      %v2944 = vcombine.high %v2904, %v2936
      %v2945 = vcombine.low %v1306, %v1344
      %v2947 = vunpack.c.l.s4 1983009808
      %v2948 = vunpack.c.0.s8 %v2947
      %v2949 = vlaneseq
      %v2950 = vshrl.u32 %v2949, 7
      %v2951 = vsub.s32 %v2948, %v2950
      %v2952 = vrot.slane %v2945, %v2951
      %v2953 = vcombine.low %v1326, %v1362
      %v2955 = vunpack.c.l.s4 1983009808
      %v2956 = vunpack.c.0.s8 %v2955
      %v2957 = vlaneseq
      %v2958 = vshrl.u32 %v2957, 7
      %v2959 = vsub.s32 %v2956, %v2958
      %v2960 = vrot.slane %v2953, %v2959
      %v2961 = vcombine.low %v1380, %v1416
      %v2963 = vunpack.c.l.s4 1983009808
      %v2964 = vunpack.c.0.s8 %v2963
      %v2965 = vlaneseq
      %v2966 = vshrl.u32 %v2965, 7
      %v2967 = vsub.s32 %v2964, %v2966
      %v2968 = vrot.slane %v2961, %v2967
      %v2969 = vcombine.low %v1398, %v1434
      %v2971 = vunpack.c.l.s4 1983009808
      %v2972 = vunpack.c.0.s8 %v2971
      %v2973 = vlaneseq
      %v2974 = vshrl.u32 %v2973, 7
      %v2975 = vsub.s32 %v2972, %v2974
      %v2976 = vrot.slane %v2969, %v2975
      %v2977 = vcombine.low %v2952, %v2960
      %v2979 = vunpack.c.l.s4 1934713408
      %v2980 = vunpack.c.0.s8 %v2979
      %v2981 = vlaneseq
      %v2982 = vshrl.u32 %v2981, 7
      %v2983 = vsub.s32 %v2980, %v2982
      %v2984 = vrot.slane %v2977, %v2983
      %v2985 = vcombine.low %v2968, %v2976
      %v2987 = vunpack.c.l.s4 1934713408
      %v2988 = vunpack.c.0.s8 %v2987
      %v2989 = vlaneseq
      %v2990 = vshrl.u32 %v2989, 7
      %v2991 = vsub.s32 %v2988, %v2990
      %v2992 = vrot.slane %v2985, %v2991
      %v2993 = vcombine.low %v2984, %v2992
      %v2994 = vcombine.high %v2984, %v2992
      %v2995 = vcombine.low %v1452, %v1488
      %v2997 = vunpack.c.l.s4 1983009808
      %v2998 = vunpack.c.0.s8 %v2997
      %v2999 = vlaneseq
      %v3000 = vshrl.u32 %v2999, 7
      %v3001 = vsub.s32 %v2998, %v3000
      %v3002 = vrot.slane %v2995, %v3001
      %v3003 = vcombine.low %v1470, %v1506
      %v3005 = vunpack.c.l.s4 1983009808
      %v3006 = vunpack.c.0.s8 %v3005
      %v3007 = vlaneseq
      %v3008 = vshrl.u32 %v3007, 7
      %v3009 = vsub.s32 %v3006, %v3008
      %v3010 = vrot.slane %v3003, %v3009
      %v3011 = vcombine.low %v1524, %v1560
      %v3013 = vunpack.c.l.s4 1983009808
      %v3014 = vunpack.c.0.s8 %v3013
      %v3015 = vlaneseq
      %v3016 = vshrl.u32 %v3015, 7
      %v3017 = vsub.s32 %v3014, %v3016
      %v3018 = vrot.slane %v3011, %v3017
      %v3019 = vcombine.low %v1542, %v1578
      %v3021 = vunpack.c.l.s4 1983009808
      %v3022 = vunpack.c.0.s8 %v3021
      %v3023 = vlaneseq
      %v3024 = vshrl.u32 %v3023, 7
      %v3025 = vsub.s32 %v3022, %v3024
      %v3026 = vrot.slane %v3019, %v3025
      %v3027 = vcombine.low %v3002, %v3010
      %v3029 = vunpack.c.l.s4 1934713408
      %v3030 = vunpack.c.0.s8 %v3029
      %v3031 = vlaneseq
      %v3032 = vshrl.u32 %v3031, 7
      %v3033 = vsub.s32 %v3030, %v3032
      %v3034 = vrot.slane %v3027, %v3033
      %v3035 = vcombine.low %v3018, %v3026
      %v3037 = vunpack.c.l.s4 1934713408
      %v3038 = vunpack.c.0.s8 %v3037
      %v3039 = vlaneseq
      %v3040 = vshrl.u32 %v3039, 7
      %v3041 = vsub.s32 %v3038, %v3040
      %v3042 = vrot.slane %v3035, %v3041
      %v3043 = vcombine.low %v3034, %v3042
      %v3044 = vcombine.high %v3034, %v3042
      %v3046 = vsel %vm942, %v263, 0
      %3048 = vmatprep.subr.mxu0 0.0
      %3049 = vmatpush1.msra.mxu0 0.0
      %3050 = vmatprep.subr.mxu0 0.0
      %3051 = vmatpush1.msra.mxu0 0.0
      %3052 = vmatprep.subr.mxu0 0.0
      %3053 = vmatpush1.msra.mxu0 0.0
      %3054 = vmatprep.subr.mxu0 0.0
      %3055 = vmatpush1.msra.mxu0 0.0
      %3056 = vmatprep.subr.mxu0 0.0
      %3057 = vmatpush1.msra.mxu0 0.0
      %3058 = vmatprep.subr.mxu0 0.0
      %3059 = vmatpush1.msra.mxu0 0.0
      %3060 = vmatprep.subr.mxu0 0.0
      %3061 = vmatpush1.msra.mxu0 0.0
      %3062 = vmatprep.subr.mxu0 0.0
      %3063 = vmatpush1.msra.mxu0 0.0
      %3064 = vmatprep.subr.mxu0 0.0
      %3065 = vmatpush1.msra.mxu0 0.0
      %3066 = vmatprep.subr.mxu0 0.0
      %3067 = vmatpush1.msra.mxu0 0.0
      %3068 = vmatprep.subr.mxu0 0.0
      %3069 = vmatpush1.msra.mxu0 0.0
      %3070 = vmatprep.subr.mxu0 0.0
      %3071 = vmatpush1.msra.mxu0 0.0
      %3072 = vmatprep.subr.mxu0 0.0
      %3073 = vmatpush1.msra.mxu0 0.0
      %3074 = vmatprep.subr.mxu0 0.0
      %3075 = vmatpush1.msra.mxu0 0.0
      %3076 = vmatprep.subr.mxu0 0.0
      %3077 = vmatpush1.msra.mxu0 %v1849
      %3078 = vmatprep.subr.mxu0 0.0
      %3079 = vmatpush1.msra.mxu0 %v1713
      %3080 = vmatprep.subr.mxu0 0.0
      %3081 = vmatpush2.msra.mxu0 0.0
      %3082 = vmatprep.subr.mxu0 0.0
      %3083 = vmatpush2.msra.mxu0 0.0
      %3084 = vmatprep.subr.mxu0 0.0
      %3085 = vmatpush2.msra.mxu0 0.0
      %3086 = vmatprep.subr.mxu0 0.0
      %3087 = vmatpush2.msra.mxu0 0.0
      %3088 = vmatprep.subr.mxu0 0.0
      %3089 = vmatpush2.msra.mxu0 0.0
      %3090 = vmatprep.subr.mxu0 0.0
      %3091 = vmatpush2.msra.mxu0 0.0
      %3092 = vmatprep.subr.mxu0 0.0
      %3093 = vmatpush2.msra.mxu0 0.0
      %3094 = vmatprep.subr.mxu0 0.0
      %3095 = vmatpush2.msra.mxu0 0.0
      %3096 = vmatprep.subr.mxu0 0.0
      %3097 = vmatpush2.msra.mxu0 0.0
      %3098 = vmatprep.subr.mxu0 0.0
      %3099 = vmatpush2.msra.mxu0 0.0
      %3100 = vmatprep.subr.mxu0 0.0
      %3101 = vmatpush2.msra.mxu0 0.0
      %3102 = vmatprep.subr.mxu0 0.0
      %3103 = vmatpush2.msra.mxu0 0.0
      %3104 = vmatprep.subr.mxu0 0.0
      %3105 = vmatpush2.msra.mxu0 0.0
      %3106 = vmatprep.subr.mxu0 0.0
      %3107 = vmatpush2.msra.mxu0 0.0
      %3108 = vmatprep.subr.mxu0 0.0
      %3109 = vmatpush2.msra.mxu0 0.0
      %3110 = vmatprep.subr.mxu0 0.0
      %3111 = vmatpush2.msra.mxu0 0.0
      %3112 = vmatprep.mubr.f32.mxu0 0.0
      %3113 = vmatmul.mubr.f32.gmra.mxu0 %v3046
      %v3114 = vpop.f32.mrf.mxu0
      %v3115 = vadd.f32 0.0, %v3114
      %v3116 = vpop.f32.mrf.mxu0
      %3117 = vdwg.mxu0
      %v3119 = vsel %vm942, %v264, 0
      %3121 = vmatprep.subr.mxu0 0.0
      %3122 = vmatpush1.msra.mxu0 0.0
      %3123 = vmatprep.subr.mxu0 0.0
      %3124 = vmatpush1.msra.mxu0 0.0
      %3125 = vmatprep.subr.mxu0 0.0
      %3126 = vmatpush1.msra.mxu0 0.0
      %3127 = vmatprep.subr.mxu0 0.0
      %3128 = vmatpush1.msra.mxu0 0.0
      %3129 = vmatprep.subr.mxu0 0.0
      %3130 = vmatpush1.msra.mxu0 0.0
      %3131 = vmatprep.subr.mxu0 0.0
      %3132 = vmatpush1.msra.mxu0 0.0
      %3133 = vmatprep.subr.mxu0 0.0
      %3134 = vmatpush1.msra.mxu0 0.0
      %3135 = vmatprep.subr.mxu0 0.0
      %3136 = vmatpush1.msra.mxu0 0.0
      %3137 = vmatprep.subr.mxu0 0.0
      %3138 = vmatpush1.msra.mxu0 0.0
      %3139 = vmatprep.subr.mxu0 0.0
      %3140 = vmatpush1.msra.mxu0 0.0
      %3141 = vmatprep.subr.mxu0 0.0
      %3142 = vmatpush1.msra.mxu0 0.0
      %3143 = vmatprep.subr.mxu0 0.0
      %3144 = vmatpush1.msra.mxu0 0.0
      %3145 = vmatprep.subr.mxu0 0.0
      %3146 = vmatpush1.msra.mxu0 0.0
      %3147 = vmatprep.subr.mxu0 0.0
      %3148 = vmatpush1.msra.mxu0 0.0
      %3149 = vmatprep.subr.mxu0 0.0
      %3150 = vmatpush1.msra.mxu0 %v1856
      %3151 = vmatprep.subr.mxu0 0.0
      %3152 = vmatpush1.msra.mxu0 %v1720
      %3153 = vmatprep.subr.mxu0 0.0
      %3154 = vmatpush2.msra.mxu0 0.0
      %3155 = vmatprep.subr.mxu0 0.0
      %3156 = vmatpush2.msra.mxu0 0.0
      %3157 = vmatprep.subr.mxu0 0.0
      %3158 = vmatpush2.msra.mxu0 0.0
      %3159 = vmatprep.subr.mxu0 0.0
      %3160 = vmatpush2.msra.mxu0 0.0
      %3161 = vmatprep.subr.mxu0 0.0
      %3162 = vmatpush2.msra.mxu0 0.0
      %3163 = vmatprep.subr.mxu0 0.0
      %3164 = vmatpush2.msra.mxu0 0.0
      %3165 = vmatprep.subr.mxu0 0.0
      %3166 = vmatpush2.msra.mxu0 0.0
      %3167 = vmatprep.subr.mxu0 0.0
      %3168 = vmatpush2.msra.mxu0 0.0
      %3169 = vmatprep.subr.mxu0 0.0
      %3170 = vmatpush2.msra.mxu0 0.0
      %3171 = vmatprep.subr.mxu0 0.0
      %3172 = vmatpush2.msra.mxu0 0.0
      %3173 = vmatprep.subr.mxu0 0.0
      %3174 = vmatpush2.msra.mxu0 0.0
      %3175 = vmatprep.subr.mxu0 0.0
      %3176 = vmatpush2.msra.mxu0 0.0
      %3177 = vmatprep.subr.mxu0 0.0
      %3178 = vmatpush2.msra.mxu0 0.0
      %3179 = vmatprep.subr.mxu0 0.0
      %3180 = vmatpush2.msra.mxu0 0.0
      %3181 = vmatprep.subr.mxu0 0.0
      %3182 = vmatpush2.msra.mxu0 0.0
      %3183 = vmatprep.subr.mxu0 0.0
      %3184 = vmatpush2.msra.mxu0 0.0
      %3185 = vmatprep.mubr.f32.mxu0 0.0
      %3186 = vmatmul.mubr.f32.gmra.mxu0 %v3119
      %v3187 = vpop.f32.mrf.mxu0
      %v3188 = vadd.f32 0.0, %v3187
      %v3189 = vpop.f32.mrf.mxu0
      %3190 = vdwg.mxu0
      %v3192 = vsel %vm942, %v265, 0
      %3194 = vmatprep.subr.mxu0 0.0
      %3195 = vmatpush1.msra.mxu0 0.0
      %3196 = vmatprep.subr.mxu0 0.0
      %3197 = vmatpush1.msra.mxu0 0.0
      %3198 = vmatprep.subr.mxu0 0.0
      %3199 = vmatpush1.msra.mxu0 0.0
      %3200 = vmatprep.subr.mxu0 0.0
      %3201 = vmatpush1.msra.mxu0 0.0
      %3202 = vmatprep.subr.mxu0 0.0
      %3203 = vmatpush1.msra.mxu0 0.0
      %3204 = vmatprep.subr.mxu0 0.0
      %3205 = vmatpush1.msra.mxu0 0.0
      %3206 = vmatprep.subr.mxu0 0.0
      %3207 = vmatpush1.msra.mxu0 0.0
      %3208 = vmatprep.subr.mxu0 0.0
      %3209 = vmatpush1.msra.mxu0 0.0
      %3210 = vmatprep.subr.mxu0 0.0
      %3211 = vmatpush1.msra.mxu0 0.0
      %3212 = vmatprep.subr.mxu0 0.0
      %3213 = vmatpush1.msra.mxu0 0.0
      %3214 = vmatprep.subr.mxu0 0.0
      %3215 = vmatpush1.msra.mxu0 0.0
      %3216 = vmatprep.subr.mxu0 0.0
      %3217 = vmatpush1.msra.mxu0 0.0
      %3218 = vmatprep.subr.mxu0 0.0
      %3219 = vmatpush1.msra.mxu0 0.0
      %3220 = vmatprep.subr.mxu0 0.0
      %3221 = vmatpush1.msra.mxu0 0.0
      %3222 = vmatprep.subr.mxu0 0.0
      %3223 = vmatpush1.msra.mxu0 %v2127
      %3224 = vmatprep.subr.mxu0 0.0
      %3225 = vmatpush1.msra.mxu0 %v1991
      %3226 = vmatprep.subr.mxu0 0.0
      %3227 = vmatpush2.msra.mxu0 0.0
      %3228 = vmatprep.subr.mxu0 0.0
      %3229 = vmatpush2.msra.mxu0 0.0
      %3230 = vmatprep.subr.mxu0 0.0
      %3231 = vmatpush2.msra.mxu0 0.0
      %3232 = vmatprep.subr.mxu0 0.0
      %3233 = vmatpush2.msra.mxu0 0.0
      %3234 = vmatprep.subr.mxu0 0.0
      %3235 = vmatpush2.msra.mxu0 0.0
      %3236 = vmatprep.subr.mxu0 0.0
      %3237 = vmatpush2.msra.mxu0 0.0
      %3238 = vmatprep.subr.mxu0 0.0
      %3239 = vmatpush2.msra.mxu0 0.0
      %3240 = vmatprep.subr.mxu0 0.0
      %3241 = vmatpush2.msra.mxu0 0.0
      %3242 = vmatprep.subr.mxu0 0.0
      %3243 = vmatpush2.msra.mxu0 0.0
      %3244 = vmatprep.subr.mxu0 0.0
      %3245 = vmatpush2.msra.mxu0 0.0
      %3246 = vmatprep.subr.mxu0 0.0
      %3247 = vmatpush2.msra.mxu0 0.0
      %3248 = vmatprep.subr.mxu0 0.0
      %3249 = vmatpush2.msra.mxu0 0.0
      %3250 = vmatprep.subr.mxu0 0.0
      %3251 = vmatpush2.msra.mxu0 0.0
      %3252 = vmatprep.subr.mxu0 0.0
      %3253 = vmatpush2.msra.mxu0 0.0
      %3254 = vmatprep.subr.mxu0 0.0
      %3255 = vmatpush2.msra.mxu0 0.0
      %3256 = vmatprep.subr.mxu0 0.0
      %3257 = vmatpush2.msra.mxu0 0.0
      %3258 = vmatprep.mubr.f32.mxu0 0.0
      %3259 = vmatmul.mubr.f32.gmra.mxu0 %v3192
      %v3260 = vpop.f32.mrf.mxu0
      %v3261 = vadd.f32 0.0, %v3260
      %v3262 = vpop.f32.mrf.mxu0
      %3263 = vdwg.mxu0
      %v3265 = vsel %vm942, %v266, 0
      %3267 = vmatprep.subr.mxu0 0.0
      %3268 = vmatpush1.msra.mxu0 0.0
      %3269 = vmatprep.subr.mxu0 0.0
      %3270 = vmatpush1.msra.mxu0 0.0
      %3271 = vmatprep.subr.mxu0 0.0
      %3272 = vmatpush1.msra.mxu0 0.0
      %3273 = vmatprep.subr.mxu0 0.0
      %3274 = vmatpush1.msra.mxu0 0.0
      %3275 = vmatprep.subr.mxu0 0.0
      %3276 = vmatpush1.msra.mxu0 0.0
      %3277 = vmatprep.subr.mxu0 0.0
      %3278 = vmatpush1.msra.mxu0 0.0
      %3279 = vmatprep.subr.mxu0 0.0
      %3280 = vmatpush1.msra.mxu0 0.0
      %3281 = vmatprep.subr.mxu0 0.0
      %3282 = vmatpush1.msra.mxu0 0.0
      %3283 = vmatprep.subr.mxu0 0.0
      %3284 = vmatpush1.msra.mxu0 0.0
      %3285 = vmatprep.subr.mxu0 0.0
      %3286 = vmatpush1.msra.mxu0 0.0
      %3287 = vmatprep.subr.mxu0 0.0
      %3288 = vmatpush1.msra.mxu0 0.0
      %3289 = vmatprep.subr.mxu0 0.0
      %3290 = vmatpush1.msra.mxu0 0.0
      %3291 = vmatprep.subr.mxu0 0.0
      %3292 = vmatpush1.msra.mxu0 0.0
      %3293 = vmatprep.subr.mxu0 0.0
      %3294 = vmatpush1.msra.mxu0 0.0
      %3295 = vmatprep.subr.mxu0 0.0
      %3296 = vmatpush1.msra.mxu0 %v2398
      %3297 = vmatprep.subr.mxu0 0.0
      %3298 = vmatpush1.msra.mxu0 %v2262
      %3299 = vmatprep.subr.mxu0 0.0
      %3300 = vmatpush2.msra.mxu0 0.0
      %3301 = vmatprep.subr.mxu0 0.0
      %3302 = vmatpush2.msra.mxu0 0.0
      %3303 = vmatprep.subr.mxu0 0.0
      %3304 = vmatpush2.msra.mxu0 0.0
      %3305 = vmatprep.subr.mxu0 0.0
      %3306 = vmatpush2.msra.mxu0 0.0
      %3307 = vmatprep.subr.mxu0 0.0
      %3308 = vmatpush2.msra.mxu0 0.0
      %3309 = vmatprep.subr.mxu0 0.0
      %3310 = vmatpush2.msra.mxu0 0.0
      %3311 = vmatprep.subr.mxu0 0.0
      %3312 = vmatpush2.msra.mxu0 0.0
      %3313 = vmatprep.subr.mxu0 0.0
      %3314 = vmatpush2.msra.mxu0 0.0
      %3315 = vmatprep.subr.mxu0 0.0
      %3316 = vmatpush2.msra.mxu0 0.0
      %3317 = vmatprep.subr.mxu0 0.0
      %3318 = vmatpush2.msra.mxu0 0.0
      %3319 = vmatprep.subr.mxu0 0.0
      %3320 = vmatpush2.msra.mxu0 0.0
      %3321 = vmatprep.subr.mxu0 0.0
      %3322 = vmatpush2.msra.mxu0 0.0
      %3323 = vmatprep.subr.mxu0 0.0
      %3324 = vmatpush2.msra.mxu0 0.0
      %3325 = vmatprep.subr.mxu0 0.0
      %3326 = vmatpush2.msra.mxu0 0.0
      %3327 = vmatprep.subr.mxu0 0.0
      %3328 = vmatpush2.msra.mxu0 0.0
      %3329 = vmatprep.subr.mxu0 0.0
      %3330 = vmatpush2.msra.mxu0 0.0
      %3331 = vmatprep.mubr.f32.mxu0 0.0
      %3332 = vmatmul.mubr.f32.gmra.mxu0 %v3265
      %v3333 = vpop.f32.mrf.mxu0
      %v3334 = vadd.f32 0.0, %v3333
      %v3335 = vpop.f32.mrf.mxu0
      %3336 = vdwg.mxu0
      %v3338 = vsel %vm942, %v267, 0
      %3340 = vmatprep.subr.mxu0 0.0
      %3341 = vmatpush1.msra.mxu0 0.0
      %3342 = vmatprep.subr.mxu0 0.0
      %3343 = vmatpush1.msra.mxu0 0.0
      %3344 = vmatprep.subr.mxu0 0.0
      %3345 = vmatpush1.msra.mxu0 0.0
      %3346 = vmatprep.subr.mxu0 0.0
      %3347 = vmatpush1.msra.mxu0 0.0
      %3348 = vmatprep.subr.mxu0 0.0
      %3349 = vmatpush1.msra.mxu0 0.0
      %3350 = vmatprep.subr.mxu0 0.0
      %3351 = vmatpush1.msra.mxu0 0.0
      %3352 = vmatprep.subr.mxu0 0.0
      %3353 = vmatpush1.msra.mxu0 0.0
      %3354 = vmatprep.subr.mxu0 0.0
      %3355 = vmatpush1.msra.mxu0 0.0
      %3356 = vmatprep.subr.mxu0 0.0
      %3357 = vmatpush1.msra.mxu0 0.0
      %3358 = vmatprep.subr.mxu0 0.0
      %3359 = vmatpush1.msra.mxu0 0.0
      %3360 = vmatprep.subr.mxu0 0.0
      %3361 = vmatpush1.msra.mxu0 0.0
      %3362 = vmatprep.subr.mxu0 0.0
      %3363 = vmatpush1.msra.mxu0 0.0
      %3364 = vmatprep.subr.mxu0 0.0
      %3365 = vmatpush1.msra.mxu0 0.0
      %3366 = vmatprep.subr.mxu0 0.0
      %3367 = vmatpush1.msra.mxu0 0.0
      %3368 = vmatprep.subr.mxu0 0.0
      %3369 = vmatpush1.msra.mxu0 %v2669
      %3370 = vmatprep.subr.mxu0 0.0
      %3371 = vmatpush1.msra.mxu0 %v2533
      %3372 = vmatprep.subr.mxu0 0.0
      %3373 = vmatpush2.msra.mxu0 0.0
      %3374 = vmatprep.subr.mxu0 0.0
      %3375 = vmatpush2.msra.mxu0 0.0
      %3376 = vmatprep.subr.mxu0 0.0
      %3377 = vmatpush2.msra.mxu0 0.0
      %3378 = vmatprep.subr.mxu0 0.0
      %3379 = vmatpush2.msra.mxu0 0.0
      %3380 = vmatprep.subr.mxu0 0.0
      %3381 = vmatpush2.msra.mxu0 0.0
      %3382 = vmatprep.subr.mxu0 0.0
      %3383 = vmatpush2.msra.mxu0 0.0
      %3384 = vmatprep.subr.mxu0 0.0
      %3385 = vmatpush2.msra.mxu0 0.0
      %3386 = vmatprep.subr.mxu0 0.0
      %3387 = vmatpush2.msra.mxu0 0.0
      %3388 = vmatprep.subr.mxu0 0.0
      %3389 = vmatpush2.msra.mxu0 0.0
      %3390 = vmatprep.subr.mxu0 0.0
      %3391 = vmatpush2.msra.mxu0 0.0
      %3392 = vmatprep.subr.mxu0 0.0
      %3393 = vmatpush2.msra.mxu0 0.0
      %3394 = vmatprep.subr.mxu0 0.0
      %3395 = vmatpush2.msra.mxu0 0.0
      %3396 = vmatprep.subr.mxu0 0.0
      %3397 = vmatpush2.msra.mxu0 0.0
      %3398 = vmatprep.subr.mxu0 0.0
      %3399 = vmatpush2.msra.mxu0 0.0
      %3400 = vmatprep.subr.mxu0 0.0
      %3401 = vmatpush2.msra.mxu0 0.0
      %3402 = vmatprep.subr.mxu0 0.0
      %3403 = vmatpush2.msra.mxu0 0.0
      %3404 = vmatprep.mubr.f32.mxu0 0.0
      %3405 = vmatmul.mubr.f32.gmra.mxu0 %v3338
      %v3406 = vpop.f32.mrf.mxu0
      %v3407 = vadd.f32 0.0, %v3406
      %v3408 = vpop.f32.mrf.mxu0
      %3409 = vdwg.mxu0
      %v3411 = vsel %vm942, %v268, 0
      %3413 = vmatprep.subr.mxu0 0.0
      %3414 = vmatpush1.msra.mxu0 0.0
      %3415 = vmatprep.subr.mxu0 0.0
      %3416 = vmatpush1.msra.mxu0 0.0
      %3417 = vmatprep.subr.mxu0 0.0
      %3418 = vmatpush1.msra.mxu0 0.0
      %3419 = vmatprep.subr.mxu0 0.0
      %3420 = vmatpush1.msra.mxu0 0.0
      %3421 = vmatprep.subr.mxu0 0.0
      %3422 = vmatpush1.msra.mxu0 0.0
      %3423 = vmatprep.subr.mxu0 0.0
      %3424 = vmatpush1.msra.mxu0 0.0
      %3425 = vmatprep.subr.mxu0 0.0
      %3426 = vmatpush1.msra.mxu0 0.0
      %3427 = vmatprep.subr.mxu0 0.0
      %3428 = vmatpush1.msra.mxu0 0.0
      %3429 = vmatprep.subr.mxu0 0.0
      %3430 = vmatpush1.msra.mxu0 0.0
      %3431 = vmatprep.subr.mxu0 0.0
      %3432 = vmatpush1.msra.mxu0 0.0
      %3433 = vmatprep.subr.mxu0 0.0
      %3434 = vmatpush1.msra.mxu0 0.0
      %3435 = vmatprep.subr.mxu0 0.0
      %3436 = vmatpush1.msra.mxu0 0.0
      %3437 = vmatprep.subr.mxu0 0.0
      %3438 = vmatpush1.msra.mxu0 0.0
      %3439 = vmatprep.subr.mxu0 0.0
      %3440 = vmatpush1.msra.mxu0 0.0
      %3441 = vmatprep.subr.mxu0 0.0
      %3442 = vmatpush1.msra.mxu0 %v2940
      %3443 = vmatprep.subr.mxu0 0.0
      %3444 = vmatpush1.msra.mxu0 %v2804
      %3445 = vmatprep.subr.mxu0 0.0
      %3446 = vmatpush2.msra.mxu0 0.0
      %3447 = vmatprep.subr.mxu0 0.0
      %3448 = vmatpush2.msra.mxu0 0.0
      %3449 = vmatprep.subr.mxu0 0.0
      %3450 = vmatpush2.msra.mxu0 0.0
      %3451 = vmatprep.subr.mxu0 0.0
      %3452 = vmatpush2.msra.mxu0 0.0
      %3453 = vmatprep.subr.mxu0 0.0
      %3454 = vmatpush2.msra.mxu0 0.0
      %3455 = vmatprep.subr.mxu0 0.0
      %3456 = vmatpush2.msra.mxu0 0.0
      %3457 = vmatprep.subr.mxu0 0.0
      %3458 = vmatpush2.msra.mxu0 0.0
      %3459 = vmatprep.subr.mxu0 0.0
      %3460 = vmatpush2.msra.mxu0 0.0
      %3461 = vmatprep.subr.mxu0 0.0
      %3462 = vmatpush2.msra.mxu0 0.0
      %3463 = vmatprep.subr.mxu0 0.0
      %3464 = vmatpush2.msra.mxu0 0.0
      %3465 = vmatprep.subr.mxu0 0.0
      %3466 = vmatpush2.msra.mxu0 0.0
      %3467 = vmatprep.subr.mxu0 0.0
      %3468 = vmatpush2.msra.mxu0 0.0
      %3469 = vmatprep.subr.mxu0 0.0
      %3470 = vmatpush2.msra.mxu0 0.0
      %3471 = vmatprep.subr.mxu0 0.0
      %3472 = vmatpush2.msra.mxu0 0.0
      %3473 = vmatprep.subr.mxu0 0.0
      %3474 = vmatpush2.msra.mxu0 0.0
      %3475 = vmatprep.subr.mxu0 0.0
      %3476 = vmatpush2.msra.mxu0 0.0
      %3477 = vmatprep.mubr.f32.mxu0 0.0
      %3478 = vmatmul.mubr.f32.gmra.mxu0 %v3411
      %v3479 = vpop.f32.mrf.mxu0
      %v3480 = vadd.f32 0.0, %v3479
      %v3481 = vpop.f32.mrf.mxu0
      %3482 = vdwg.mxu0
      %vm3483 = vcmask 30720
      %3484 = vst.msk [vmem:[%s224] sm:$0x7f] %vm3483, %v3115
      %3485 = vst.msk [vmem:[%s224 + $0x38] sm:$0x7f] %vm3483, %v3188
      %3486 = vst.msk [vmem:[%s224 + $0x70] sm:$0x7f] %vm3483, %v3261
      %3487 = vst.msk [vmem:[%s224 + $0xa8] sm:$0x7f] %vm3483, %v3334
      %3488 = vst.msk [vmem:[%s224 + $0xe0] sm:$0x7f] %vm3483, %v3407
      %3489 = vst.msk [vmem:[%s224 + $0x118] sm:$0x7f] %vm3483, %v3480
      %3490 = vmatprep.subr.mxu0 0.0
      %3491 = vmatpush1.msra.mxu0 0.0
      %3492 = vmatprep.subr.mxu0 0.0
      %3493 = vmatpush1.msra.mxu0 0.0
      %3494 = vmatprep.subr.mxu0 0.0
      %3495 = vmatpush1.msra.mxu0 0.0
      %3496 = vmatprep.subr.mxu0 0.0
      %3497 = vmatpush1.msra.mxu0 0.0
      %3498 = vmatprep.subr.mxu0 0.0
      %3499 = vmatpush1.msra.mxu0 0.0
      %3500 = vmatprep.subr.mxu0 0.0
      %3501 = vmatpush1.msra.mxu0 0.0
      %3502 = vmatprep.subr.mxu0 0.0
      %3503 = vmatpush1.msra.mxu0 0.0
      %3504 = vmatprep.subr.mxu0 0.0
      %3505 = vmatpush1.msra.mxu0 0.0
      %3506 = vmatprep.subr.mxu0 0.0
      %3507 = vmatpush1.msra.mxu0 0.0
      %3508 = vmatprep.subr.mxu0 0.0
      %3509 = vmatpush1.msra.mxu0 0.0
      %3510 = vmatprep.subr.mxu0 0.0
      %3511 = vmatpush1.msra.mxu0 0.0
      %3512 = vmatprep.subr.mxu0 0.0
      %3513 = vmatpush1.msra.mxu0 0.0
      %3514 = vmatprep.subr.mxu0 0.0
      %3515 = vmatpush1.msra.mxu0 0.0
      %3516 = vmatprep.subr.mxu0 0.0
      %3517 = vmatpush1.msra.mxu0 0.0
      %3518 = vmatprep.subr.mxu0 0.0
      %3519 = vmatpush1.msra.mxu0 %v1850
      %3520 = vmatprep.subr.mxu0 0.0
      %3521 = vmatpush1.msra.mxu0 %v1714
      %3522 = vmatprep.subr.mxu0 0.0
      %3523 = vmatpush2.msra.mxu0 0.0
      %3524 = vmatprep.subr.mxu0 0.0
      %3525 = vmatpush2.msra.mxu0 0.0
      %3526 = vmatprep.subr.mxu0 0.0
      %3527 = vmatpush2.msra.mxu0 0.0
      %3528 = vmatprep.subr.mxu0 0.0
      %3529 = vmatpush2.msra.mxu0 0.0
      %3530 = vmatprep.subr.mxu0 0.0
      %3531 = vmatpush2.msra.mxu0 0.0
      %3532 = vmatprep.subr.mxu0 0.0
      %3533 = vmatpush2.msra.mxu0 0.0
      %3534 = vmatprep.subr.mxu0 0.0
      %3535 = vmatpush2.msra.mxu0 0.0
      %3536 = vmatprep.subr.mxu0 0.0
      %3537 = vmatpush2.msra.mxu0 0.0
      %3538 = vmatprep.subr.mxu0 0.0
      %3539 = vmatpush2.msra.mxu0 0.0
      %3540 = vmatprep.subr.mxu0 0.0
      %3541 = vmatpush2.msra.mxu0 0.0
      %3542 = vmatprep.subr.mxu0 0.0
      %3543 = vmatpush2.msra.mxu0 0.0
      %3544 = vmatprep.subr.mxu0 0.0
      %3545 = vmatpush2.msra.mxu0 0.0
      %3546 = vmatprep.subr.mxu0 0.0
      %3547 = vmatpush2.msra.mxu0 0.0
      %3548 = vmatprep.subr.mxu0 0.0
      %3549 = vmatpush2.msra.mxu0 0.0
      %3550 = vmatprep.subr.mxu0 0.0
      %3551 = vmatpush2.msra.mxu0 0.0
      %3552 = vmatprep.subr.mxu0 0.0
      %3553 = vmatpush2.msra.mxu0 0.0
      %3554 = vmatprep.mubr.f32.mxu0 0.0
      %3555 = vmatmul.mubr.f32.gmra.mxu0 %v3046
      %v3556 = vpop.f32.mrf.mxu0
      %v3557 = vadd.f32 0.0, %v3556
      %v3558 = vpop.f32.mrf.mxu0
      %3559 = vdwg.mxu0
      %3560 = vmatprep.subr.mxu0 0.0
      %3561 = vmatpush1.msra.mxu0 0.0
      %3562 = vmatprep.subr.mxu0 0.0
      %3563 = vmatpush1.msra.mxu0 0.0
      %3564 = vmatprep.subr.mxu0 0.0
      %3565 = vmatpush1.msra.mxu0 0.0
      %3566 = vmatprep.subr.mxu0 0.0
      %3567 = vmatpush1.msra.mxu0 0.0
      %3568 = vmatprep.subr.mxu0 0.0
      %3569 = vmatpush1.msra.mxu0 0.0
      %3570 = vmatprep.subr.mxu0 0.0
      %3571 = vmatpush1.msra.mxu0 0.0
      %3572 = vmatprep.subr.mxu0 0.0
      %3573 = vmatpush1.msra.mxu0 0.0
      %3574 = vmatprep.subr.mxu0 0.0
      %3575 = vmatpush1.msra.mxu0 0.0
      %3576 = vmatprep.subr.mxu0 0.0
      %3577 = vmatpush1.msra.mxu0 0.0
      %3578 = vmatprep.subr.mxu0 0.0
      %3579 = vmatpush1.msra.mxu0 0.0
      %3580 = vmatprep.subr.mxu0 0.0
      %3581 = vmatpush1.msra.mxu0 0.0
      %3582 = vmatprep.subr.mxu0 0.0
      %3583 = vmatpush1.msra.mxu0 0.0
      %3584 = vmatprep.subr.mxu0 0.0
      %3585 = vmatpush1.msra.mxu0 0.0
      %3586 = vmatprep.subr.mxu0 0.0
      %3587 = vmatpush1.msra.mxu0 0.0
      %3588 = vmatprep.subr.mxu0 0.0
      %3589 = vmatpush1.msra.mxu0 %v2121
      %3590 = vmatprep.subr.mxu0 0.0
      %3591 = vmatpush1.msra.mxu0 %v1985
      %3592 = vmatprep.subr.mxu0 0.0
      %3593 = vmatpush2.msra.mxu0 0.0
      %3594 = vmatprep.subr.mxu0 0.0
      %3595 = vmatpush2.msra.mxu0 0.0
      %3596 = vmatprep.subr.mxu0 0.0
      %3597 = vmatpush2.msra.mxu0 0.0
      %3598 = vmatprep.subr.mxu0 0.0
      %3599 = vmatpush2.msra.mxu0 0.0
      %3600 = vmatprep.subr.mxu0 0.0
      %3601 = vmatpush2.msra.mxu0 0.0
      %3602 = vmatprep.subr.mxu0 0.0
      %3603 = vmatpush2.msra.mxu0 0.0
      %3604 = vmatprep.subr.mxu0 0.0
      %3605 = vmatpush2.msra.mxu0 0.0
      %3606 = vmatprep.subr.mxu0 0.0
      %3607 = vmatpush2.msra.mxu0 0.0
      %3608 = vmatprep.subr.mxu0 0.0
      %3609 = vmatpush2.msra.mxu0 0.0
      %3610 = vmatprep.subr.mxu0 0.0
      %3611 = vmatpush2.msra.mxu0 0.0
      %3612 = vmatprep.subr.mxu0 0.0
      %3613 = vmatpush2.msra.mxu0 0.0
      %3614 = vmatprep.subr.mxu0 0.0
      %3615 = vmatpush2.msra.mxu0 0.0
      %3616 = vmatprep.subr.mxu0 0.0
      %3617 = vmatpush2.msra.mxu0 0.0
      %3618 = vmatprep.subr.mxu0 0.0
      %3619 = vmatpush2.msra.mxu0 0.0
      %3620 = vmatprep.subr.mxu0 0.0
      %3621 = vmatpush2.msra.mxu0 0.0
      %3622 = vmatprep.subr.mxu0 0.0
      %3623 = vmatpush2.msra.mxu0 0.0
      %3624 = vmatprep.mubr.f32.mxu0 0.0
      %3625 = vmatmul.mubr.f32.gmra.mxu0 %v3119
      %v3626 = vpop.f32.mrf.mxu0
      %v3627 = vadd.f32 0.0, %v3626
      %v3628 = vpop.f32.mrf.mxu0
      %3629 = vdwg.mxu0
      %3630 = vmatprep.subr.mxu0 0.0
      %3631 = vmatpush1.msra.mxu0 0.0
      %3632 = vmatprep.subr.mxu0 0.0
      %3633 = vmatpush1.msra.mxu0 0.0
      %3634 = vmatprep.subr.mxu0 0.0
      %3635 = vmatpush1.msra.mxu0 0.0
      %3636 = vmatprep.subr.mxu0 0.0
      %3637 = vmatpush1.msra.mxu0 0.0
      %3638 = vmatprep.subr.mxu0 0.0
      %3639 = vmatpush1.msra.mxu0 0.0
      %3640 = vmatprep.subr.mxu0 0.0
      %3641 = vmatpush1.msra.mxu0 0.0
      %3642 = vmatprep.subr.mxu0 0.0
      %3643 = vmatpush1.msra.mxu0 0.0
      %3644 = vmatprep.subr.mxu0 0.0
      %3645 = vmatpush1.msra.mxu0 0.0
      %3646 = vmatprep.subr.mxu0 0.0
      %3647 = vmatpush1.msra.mxu0 0.0
      %3648 = vmatprep.subr.mxu0 0.0
      %3649 = vmatpush1.msra.mxu0 0.0
      %3650 = vmatprep.subr.mxu0 0.0
      %3651 = vmatpush1.msra.mxu0 0.0
      %3652 = vmatprep.subr.mxu0 0.0
      %3653 = vmatpush1.msra.mxu0 0.0
      %3654 = vmatprep.subr.mxu0 0.0
      %3655 = vmatpush1.msra.mxu0 0.0
      %3656 = vmatprep.subr.mxu0 0.0
      %3657 = vmatpush1.msra.mxu0 0.0
      %3658 = vmatprep.subr.mxu0 0.0
      %3659 = vmatpush1.msra.mxu0 %v2128
      %3660 = vmatprep.subr.mxu0 0.0
      %3661 = vmatpush1.msra.mxu0 %v1992
      %3662 = vmatprep.subr.mxu0 0.0
      %3663 = vmatpush2.msra.mxu0 0.0
      %3664 = vmatprep.subr.mxu0 0.0
      %3665 = vmatpush2.msra.mxu0 0.0
      %3666 = vmatprep.subr.mxu0 0.0
      %3667 = vmatpush2.msra.mxu0 0.0
      %3668 = vmatprep.subr.mxu0 0.0
      %3669 = vmatpush2.msra.mxu0 0.0
      %3670 = vmatprep.subr.mxu0 0.0
      %3671 = vmatpush2.msra.mxu0 0.0
      %3672 = vmatprep.subr.mxu0 0.0
      %3673 = vmatpush2.msra.mxu0 0.0
      %3674 = vmatprep.subr.mxu0 0.0
      %3675 = vmatpush2.msra.mxu0 0.0
      %3676 = vmatprep.subr.mxu0 0.0
      %3677 = vmatpush2.msra.mxu0 0.0
      %3678 = vmatprep.subr.mxu0 0.0
      %3679 = vmatpush2.msra.mxu0 0.0
      %3680 = vmatprep.subr.mxu0 0.0
      %3681 = vmatpush2.msra.mxu0 0.0
      %3682 = vmatprep.subr.mxu0 0.0
      %3683 = vmatpush2.msra.mxu0 0.0
      %3684 = vmatprep.subr.mxu0 0.0
      %3685 = vmatpush2.msra.mxu0 0.0
      %3686 = vmatprep.subr.mxu0 0.0
      %3687 = vmatpush2.msra.mxu0 0.0
      %3688 = vmatprep.subr.mxu0 0.0
      %3689 = vmatpush2.msra.mxu0 0.0
      %3690 = vmatprep.subr.mxu0 0.0
      %3691 = vmatpush2.msra.mxu0 0.0
      %3692 = vmatprep.subr.mxu0 0.0
      %3693 = vmatpush2.msra.mxu0 0.0
      %3694 = vmatprep.mubr.f32.mxu0 0.0
      %3695 = vmatmul.mubr.f32.gmra.mxu0 %v3192
      %v3696 = vpop.f32.mrf.mxu0
      %v3697 = vadd.f32 0.0, %v3696
      %v3698 = vpop.f32.mrf.mxu0
      %3699 = vdwg.mxu0
      %3700 = vmatprep.subr.mxu0 0.0
      %3701 = vmatpush1.msra.mxu0 0.0
      %3702 = vmatprep.subr.mxu0 0.0
      %3703 = vmatpush1.msra.mxu0 0.0
      %3704 = vmatprep.subr.mxu0 0.0
      %3705 = vmatpush1.msra.mxu0 0.0
      %3706 = vmatprep.subr.mxu0 0.0
      %3707 = vmatpush1.msra.mxu0 0.0
      %3708 = vmatprep.subr.mxu0 0.0
      %3709 = vmatpush1.msra.mxu0 0.0
      %3710 = vmatprep.subr.mxu0 0.0
      %3711 = vmatpush1.msra.mxu0 0.0
      %3712 = vmatprep.subr.mxu0 0.0
      %3713 = vmatpush1.msra.mxu0 0.0
      %3714 = vmatprep.subr.mxu0 0.0
      %3715 = vmatpush1.msra.mxu0 0.0
      %3716 = vmatprep.subr.mxu0 0.0
      %3717 = vmatpush1.msra.mxu0 0.0
      %3718 = vmatprep.subr.mxu0 0.0
      %3719 = vmatpush1.msra.mxu0 0.0
      %3720 = vmatprep.subr.mxu0 0.0
      %3721 = vmatpush1.msra.mxu0 0.0
      %3722 = vmatprep.subr.mxu0 0.0
      %3723 = vmatpush1.msra.mxu0 0.0
      %3724 = vmatprep.subr.mxu0 0.0
      %3725 = vmatpush1.msra.mxu0 0.0
      %3726 = vmatprep.subr.mxu0 0.0
      %3727 = vmatpush1.msra.mxu0 0.0
      %3728 = vmatprep.subr.mxu0 0.0
      %3729 = vmatpush1.msra.mxu0 %v2399
      %3730 = vmatprep.subr.mxu0 0.0
      %3731 = vmatpush1.msra.mxu0 %v2263
      %3732 = vmatprep.subr.mxu0 0.0
      %3733 = vmatpush2.msra.mxu0 0.0
      %3734 = vmatprep.subr.mxu0 0.0
      %3735 = vmatpush2.msra.mxu0 0.0
      %3736 = vmatprep.subr.mxu0 0.0
      %3737 = vmatpush2.msra.mxu0 0.0
      %3738 = vmatprep.subr.mxu0 0.0
      %3739 = vmatpush2.msra.mxu0 0.0
      %3740 = vmatprep.subr.mxu0 0.0
      %3741 = vmatpush2.msra.mxu0 0.0
      %3742 = vmatprep.subr.mxu0 0.0
      %3743 = vmatpush2.msra.mxu0 0.0
      %3744 = vmatprep.subr.mxu0 0.0
      %3745 = vmatpush2.msra.mxu0 0.0
      %3746 = vmatprep.subr.mxu0 0.0
      %3747 = vmatpush2.msra.mxu0 0.0
      %3748 = vmatprep.subr.mxu0 0.0
      %3749 = vmatpush2.msra.mxu0 0.0
      %3750 = vmatprep.subr.mxu0 0.0
      %3751 = vmatpush2.msra.mxu0 0.0
      %3752 = vmatprep.subr.mxu0 0.0
      %3753 = vmatpush2.msra.mxu0 0.0
      %3754 = vmatprep.subr.mxu0 0.0
      %3755 = vmatpush2.msra.mxu0 0.0
      %3756 = vmatprep.subr.mxu0 0.0
      %3757 = vmatpush2.msra.mxu0 0.0
      %3758 = vmatprep.subr.mxu0 0.0
      %3759 = vmatpush2.msra.mxu0 0.0
      %3760 = vmatprep.subr.mxu0 0.0
      %3761 = vmatpush2.msra.mxu0 0.0
      %3762 = vmatprep.subr.mxu0 0.0
      %3763 = vmatpush2.msra.mxu0 0.0
      %3764 = vmatprep.mubr.f32.mxu0 0.0
      %3765 = vmatmul.mubr.f32.gmra.mxu0 %v3265
      %v3766 = vpop.f32.mrf.mxu0
      %v3767 = vadd.f32 0.0, %v3766
      %v3768 = vpop.f32.mrf.mxu0
      %3769 = vdwg.mxu0
      %3770 = vmatprep.subr.mxu0 0.0
      %3771 = vmatpush1.msra.mxu0 0.0
      %3772 = vmatprep.subr.mxu0 0.0
      %3773 = vmatpush1.msra.mxu0 0.0
      %3774 = vmatprep.subr.mxu0 0.0
      %3775 = vmatpush1.msra.mxu0 0.0
      %3776 = vmatprep.subr.mxu0 0.0
      %3777 = vmatpush1.msra.mxu0 0.0
      %3778 = vmatprep.subr.mxu0 0.0
      %3779 = vmatpush1.msra.mxu0 0.0
      %3780 = vmatprep.subr.mxu0 0.0
      %3781 = vmatpush1.msra.mxu0 0.0
      %3782 = vmatprep.subr.mxu0 0.0
      %3783 = vmatpush1.msra.mxu0 0.0
      %3784 = vmatprep.subr.mxu0 0.0
      %3785 = vmatpush1.msra.mxu0 0.0
      %3786 = vmatprep.subr.mxu0 0.0
      %3787 = vmatpush1.msra.mxu0 0.0
      %3788 = vmatprep.subr.mxu0 0.0
      %3789 = vmatpush1.msra.mxu0 0.0
      %3790 = vmatprep.subr.mxu0 0.0
      %3791 = vmatpush1.msra.mxu0 0.0
      %3792 = vmatprep.subr.mxu0 0.0
      %3793 = vmatpush1.msra.mxu0 0.0
      %3794 = vmatprep.subr.mxu0 0.0
      %3795 = vmatpush1.msra.mxu0 0.0
      %3796 = vmatprep.subr.mxu0 0.0
      %3797 = vmatpush1.msra.mxu0 0.0
      %3798 = vmatprep.subr.mxu0 0.0
      %3799 = vmatpush1.msra.mxu0 %v2670
      %3800 = vmatprep.subr.mxu0 0.0
      %3801 = vmatpush1.msra.mxu0 %v2534
      %3802 = vmatprep.subr.mxu0 0.0
      %3803 = vmatpush2.msra.mxu0 0.0
      %3804 = vmatprep.subr.mxu0 0.0
      %3805 = vmatpush2.msra.mxu0 0.0
      %3806 = vmatprep.subr.mxu0 0.0
      %3807 = vmatpush2.msra.mxu0 0.0
      %3808 = vmatprep.subr.mxu0 0.0
      %3809 = vmatpush2.msra.mxu0 0.0
      %3810 = vmatprep.subr.mxu0 0.0
      %3811 = vmatpush2.msra.mxu0 0.0
      %3812 = vmatprep.subr.mxu0 0.0
      %3813 = vmatpush2.msra.mxu0 0.0
      %3814 = vmatprep.subr.mxu0 0.0
      %3815 = vmatpush2.msra.mxu0 0.0
      %3816 = vmatprep.subr.mxu0 0.0
      %3817 = vmatpush2.msra.mxu0 0.0
      %3818 = vmatprep.subr.mxu0 0.0
      %3819 = vmatpush2.msra.mxu0 0.0
      %3820 = vmatprep.subr.mxu0 0.0
      %3821 = vmatpush2.msra.mxu0 0.0
      %3822 = vmatprep.subr.mxu0 0.0
      %3823 = vmatpush2.msra.mxu0 0.0
      %3824 = vmatprep.subr.mxu0 0.0
      %3825 = vmatpush2.msra.mxu0 0.0
      %3826 = vmatprep.subr.mxu0 0.0
      %3827 = vmatpush2.msra.mxu0 0.0
      %3828 = vmatprep.subr.mxu0 0.0
      %3829 = vmatpush2.msra.mxu0 0.0
      %3830 = vmatprep.subr.mxu0 0.0
      %3831 = vmatpush2.msra.mxu0 0.0
      %3832 = vmatprep.subr.mxu0 0.0
      %3833 = vmatpush2.msra.mxu0 0.0
      %3834 = vmatprep.mubr.f32.mxu0 0.0
      %3835 = vmatmul.mubr.f32.gmra.mxu0 %v3338
      %v3836 = vpop.f32.mrf.mxu0
      %v3837 = vadd.f32 0.0, %v3836
      %v3838 = vpop.f32.mrf.mxu0
      %3839 = vdwg.mxu0
      %3840 = vmatprep.subr.mxu0 0.0
      %3841 = vmatpush1.msra.mxu0 0.0
      %3842 = vmatprep.subr.mxu0 0.0
      %3843 = vmatpush1.msra.mxu0 0.0
      %3844 = vmatprep.subr.mxu0 0.0
      %3845 = vmatpush1.msra.mxu0 0.0
      %3846 = vmatprep.subr.mxu0 0.0
      %3847 = vmatpush1.msra.mxu0 0.0
      %3848 = vmatprep.subr.mxu0 0.0
      %3849 = vmatpush1.msra.mxu0 0.0
      %3850 = vmatprep.subr.mxu0 0.0
      %3851 = vmatpush1.msra.mxu0 0.0
      %3852 = vmatprep.subr.mxu0 0.0
      %3853 = vmatpush1.msra.mxu0 0.0
      %3854 = vmatprep.subr.mxu0 0.0
      %3855 = vmatpush1.msra.mxu0 0.0
      %3856 = vmatprep.subr.mxu0 0.0
      %3857 = vmatpush1.msra.mxu0 0.0
      %3858 = vmatprep.subr.mxu0 0.0
      %3859 = vmatpush1.msra.mxu0 0.0
      %3860 = vmatprep.subr.mxu0 0.0
      %3861 = vmatpush1.msra.mxu0 0.0
      %3862 = vmatprep.subr.mxu0 0.0
      %3863 = vmatpush1.msra.mxu0 0.0
      %3864 = vmatprep.subr.mxu0 0.0
      %3865 = vmatpush1.msra.mxu0 0.0
      %3866 = vmatprep.subr.mxu0 0.0
      %3867 = vmatpush1.msra.mxu0 0.0
      %3868 = vmatprep.subr.mxu0 0.0
      %3869 = vmatpush1.msra.mxu0 %v2941
      %3870 = vmatprep.subr.mxu0 0.0
      %3871 = vmatpush1.msra.mxu0 %v2805
      %3872 = vmatprep.subr.mxu0 0.0
      %3873 = vmatpush2.msra.mxu0 0.0
      %3874 = vmatprep.subr.mxu0 0.0
      %3875 = vmatpush2.msra.mxu0 0.0
      %3876 = vmatprep.subr.mxu0 0.0
      %3877 = vmatpush2.msra.mxu0 0.0
      %3878 = vmatprep.subr.mxu0 0.0
      %3879 = vmatpush2.msra.mxu0 0.0
      %3880 = vmatprep.subr.mxu0 0.0
      %3881 = vmatpush2.msra.mxu0 0.0
      %3882 = vmatprep.subr.mxu0 0.0
      %3883 = vmatpush2.msra.mxu0 0.0
      %3884 = vmatprep.subr.mxu0 0.0
      %3885 = vmatpush2.msra.mxu0 0.0
      %3886 = vmatprep.subr.mxu0 0.0
      %3887 = vmatpush2.msra.mxu0 0.0
      %3888 = vmatprep.subr.mxu0 0.0
      %3889 = vmatpush2.msra.mxu0 0.0
      %3890 = vmatprep.subr.mxu0 0.0
      %3891 = vmatpush2.msra.mxu0 0.0
      %3892 = vmatprep.subr.mxu0 0.0
      %3893 = vmatpush2.msra.mxu0 0.0
      %3894 = vmatprep.subr.mxu0 0.0
      %3895 = vmatpush2.msra.mxu0 0.0
      %3896 = vmatprep.subr.mxu0 0.0
      %3897 = vmatpush2.msra.mxu0 0.0
      %3898 = vmatprep.subr.mxu0 0.0
      %3899 = vmatpush2.msra.mxu0 0.0
      %3900 = vmatprep.subr.mxu0 0.0
      %3901 = vmatpush2.msra.mxu0 0.0
      %3902 = vmatprep.subr.mxu0 0.0
      %3903 = vmatpush2.msra.mxu0 0.0
      %3904 = vmatprep.mubr.f32.mxu0 0.0
      %3905 = vmatmul.mubr.f32.gmra.mxu0 %v3411
      %v3906 = vpop.f32.mrf.mxu0
      %v3907 = vadd.f32 0.0, %v3906
      %v3908 = vpop.f32.mrf.mxu0
      %3909 = vdwg.mxu0
      %s3910 = scalar_lea.vmem %s224, 8
      %3911 = vst.msk [vmem:[%s3910] sm:$0x7f] %vm3483, %v3557
      %3912 = vst.msk [vmem:[%s3910 + $0x38] sm:$0x7f] %vm3483, %v3627
      %3913 = vst.msk [vmem:[%s3910 + $0x70] sm:$0x7f] %vm3483, %v3697
      %3914 = vst.msk [vmem:[%s3910 + $0xa8] sm:$0x7f] %vm3483, %v3767
      %3915 = vst.msk [vmem:[%s3910 + $0xe0] sm:$0x7f] %vm3483, %v3837
      %3916 = vst.msk [vmem:[%s3910 + $0x118] sm:$0x7f] %vm3483, %v3907
      %3917 = vmatprep.subr.mxu0 0.0
      %3918 = vmatpush1.msra.mxu0 0.0
      %3919 = vmatprep.subr.mxu0 0.0
      %3920 = vmatpush1.msra.mxu0 0.0
      %3921 = vmatprep.subr.mxu0 0.0
      %3922 = vmatpush1.msra.mxu0 0.0
      %3923 = vmatprep.subr.mxu0 0.0
      %3924 = vmatpush1.msra.mxu0 0.0
      %3925 = vmatprep.subr.mxu0 0.0
      %3926 = vmatpush1.msra.mxu0 0.0
      %3927 = vmatprep.subr.mxu0 0.0
      %3928 = vmatpush1.msra.mxu0 0.0
      %3929 = vmatprep.subr.mxu0 0.0
      %3930 = vmatpush1.msra.mxu0 0.0
      %3931 = vmatprep.subr.mxu0 0.0
      %3932 = vmatpush1.msra.mxu0 0.0
      %3933 = vmatprep.subr.mxu0 0.0
      %3934 = vmatpush1.msra.mxu0 0.0
      %3935 = vmatprep.subr.mxu0 0.0
      %3936 = vmatpush1.msra.mxu0 0.0
      %3937 = vmatprep.subr.mxu0 0.0
      %3938 = vmatpush1.msra.mxu0 0.0
      %3939 = vmatprep.subr.mxu0 0.0
      %3940 = vmatpush1.msra.mxu0 0.0
      %3941 = vmatprep.subr.mxu0 0.0
      %3942 = vmatpush1.msra.mxu0 0.0
      %3943 = vmatprep.subr.mxu0 0.0
      %3944 = vmatpush1.msra.mxu0 0.0
      %3945 = vmatprep.subr.mxu0 0.0
      %3946 = vmatpush1.msra.mxu0 %v1851
      %3947 = vmatprep.subr.mxu0 0.0
      %3948 = vmatpush1.msra.mxu0 %v1715
      %3949 = vmatprep.subr.mxu0 0.0
      %3950 = vmatpush2.msra.mxu0 0.0
      %3951 = vmatprep.subr.mxu0 0.0
      %3952 = vmatpush2.msra.mxu0 0.0
      %3953 = vmatprep.subr.mxu0 0.0
      %3954 = vmatpush2.msra.mxu0 0.0
      %3955 = vmatprep.subr.mxu0 0.0
      %3956 = vmatpush2.msra.mxu0 0.0
      %3957 = vmatprep.subr.mxu0 0.0
      %3958 = vmatpush2.msra.mxu0 0.0
      %3959 = vmatprep.subr.mxu0 0.0
      %3960 = vmatpush2.msra.mxu0 0.0
      %3961 = vmatprep.subr.mxu0 0.0
      %3962 = vmatpush2.msra.mxu0 0.0
      %3963 = vmatprep.subr.mxu0 0.0
      %3964 = vmatpush2.msra.mxu0 0.0
      %3965 = vmatprep.subr.mxu0 0.0
      %3966 = vmatpush2.msra.mxu0 0.0
      %3967 = vmatprep.subr.mxu0 0.0
      %3968 = vmatpush2.msra.mxu0 0.0
      %3969 = vmatprep.subr.mxu0 0.0
      %3970 = vmatpush2.msra.mxu0 0.0
      %3971 = vmatprep.subr.mxu0 0.0
      %3972 = vmatpush2.msra.mxu0 0.0
      %3973 = vmatprep.subr.mxu0 0.0
      %3974 = vmatpush2.msra.mxu0 0.0
      %3975 = vmatprep.subr.mxu0 0.0
      %3976 = vmatpush2.msra.mxu0 0.0
      %3977 = vmatprep.subr.mxu0 0.0
      %3978 = vmatpush2.msra.mxu0 0.0
      %3979 = vmatprep.subr.mxu0 0.0
      %3980 = vmatpush2.msra.mxu0 0.0
      %3981 = vmatprep.mubr.f32.mxu0 0.0
      %3982 = vmatmul.mubr.f32.gmra.mxu0 %v3046
      %v3983 = vpop.f32.mrf.mxu0
      %v3984 = vadd.f32 0.0, %v3983
      %v3985 = vpop.f32.mrf.mxu0
      %3986 = vdwg.mxu0
      %3987 = vmatprep.subr.mxu0 0.0
      %3988 = vmatpush1.msra.mxu0 0.0
      %3989 = vmatprep.subr.mxu0 0.0
      %3990 = vmatpush1.msra.mxu0 0.0
      %3991 = vmatprep.subr.mxu0 0.0
      %3992 = vmatpush1.msra.mxu0 0.0
      %3993 = vmatprep.subr.mxu0 0.0
      %3994 = vmatpush1.msra.mxu0 0.0
      %3995 = vmatprep.subr.mxu0 0.0
      %3996 = vmatpush1.msra.mxu0 0.0
      %3997 = vmatprep.subr.mxu0 0.0
      %3998 = vmatpush1.msra.mxu0 0.0
      %3999 = vmatprep.subr.mxu0 0.0
      %4000 = vmatpush1.msra.mxu0 0.0
      %4001 = vmatprep.subr.mxu0 0.0
      %4002 = vmatpush1.msra.mxu0 0.0
      %4003 = vmatprep.subr.mxu0 0.0
      %4004 = vmatpush1.msra.mxu0 0.0
      %4005 = vmatprep.subr.mxu0 0.0
      %4006 = vmatpush1.msra.mxu0 0.0
      %4007 = vmatprep.subr.mxu0 0.0
      %4008 = vmatpush1.msra.mxu0 0.0
      %4009 = vmatprep.subr.mxu0 0.0
      %4010 = vmatpush1.msra.mxu0 0.0
      %4011 = vmatprep.subr.mxu0 0.0
      %4012 = vmatpush1.msra.mxu0 0.0
      %4013 = vmatprep.subr.mxu0 0.0
      %4014 = vmatpush1.msra.mxu0 0.0
      %4015 = vmatprep.subr.mxu0 0.0
      %4016 = vmatpush1.msra.mxu0 %v2122
      %4017 = vmatprep.subr.mxu0 0.0
      %4018 = vmatpush1.msra.mxu0 %v1986
      %4019 = vmatprep.subr.mxu0 0.0
      %4020 = vmatpush2.msra.mxu0 0.0
      %4021 = vmatprep.subr.mxu0 0.0
      %4022 = vmatpush2.msra.mxu0 0.0
      %4023 = vmatprep.subr.mxu0 0.0
      %4024 = vmatpush2.msra.mxu0 0.0
      %4025 = vmatprep.subr.mxu0 0.0
      %4026 = vmatpush2.msra.mxu0 0.0
      %4027 = vmatprep.subr.mxu0 0.0
      %4028 = vmatpush2.msra.mxu0 0.0
      %4029 = vmatprep.subr.mxu0 0.0
      %4030 = vmatpush2.msra.mxu0 0.0
      %4031 = vmatprep.subr.mxu0 0.0
      %4032 = vmatpush2.msra.mxu0 0.0
      %4033 = vmatprep.subr.mxu0 0.0
      %4034 = vmatpush2.msra.mxu0 0.0
      %4035 = vmatprep.subr.mxu0 0.0
      %4036 = vmatpush2.msra.mxu0 0.0
      %4037 = vmatprep.subr.mxu0 0.0
      %4038 = vmatpush2.msra.mxu0 0.0
      %4039 = vmatprep.subr.mxu0 0.0
      %4040 = vmatpush2.msra.mxu0 0.0
      %4041 = vmatprep.subr.mxu0 0.0
      %4042 = vmatpush2.msra.mxu0 0.0
      %4043 = vmatprep.subr.mxu0 0.0
      %4044 = vmatpush2.msra.mxu0 0.0
      %4045 = vmatprep.subr.mxu0 0.0
      %4046 = vmatpush2.msra.mxu0 0.0
      %4047 = vmatprep.subr.mxu0 0.0
      %4048 = vmatpush2.msra.mxu0 0.0
      %4049 = vmatprep.subr.mxu0 0.0
      %4050 = vmatpush2.msra.mxu0 0.0
      %4051 = vmatprep.mubr.f32.mxu0 0.0
      %4052 = vmatmul.mubr.f32.gmra.mxu0 %v3119
      %v4053 = vpop.f32.mrf.mxu0
      %v4054 = vadd.f32 0.0, %v4053
      %v4055 = vpop.f32.mrf.mxu0
      %4056 = vdwg.mxu0
      %4057 = vmatprep.subr.mxu0 0.0
      %4058 = vmatpush1.msra.mxu0 0.0
      %4059 = vmatprep.subr.mxu0 0.0
      %4060 = vmatpush1.msra.mxu0 0.0
      %4061 = vmatprep.subr.mxu0 0.0
      %4062 = vmatpush1.msra.mxu0 0.0
      %4063 = vmatprep.subr.mxu0 0.0
      %4064 = vmatpush1.msra.mxu0 0.0
      %4065 = vmatprep.subr.mxu0 0.0
      %4066 = vmatpush1.msra.mxu0 0.0
      %4067 = vmatprep.subr.mxu0 0.0
      %4068 = vmatpush1.msra.mxu0 0.0
      %4069 = vmatprep.subr.mxu0 0.0
      %4070 = vmatpush1.msra.mxu0 0.0
      %4071 = vmatprep.subr.mxu0 0.0
      %4072 = vmatpush1.msra.mxu0 0.0
      %4073 = vmatprep.subr.mxu0 0.0
      %4074 = vmatpush1.msra.mxu0 0.0
      %4075 = vmatprep.subr.mxu0 0.0
      %4076 = vmatpush1.msra.mxu0 0.0
      %4077 = vmatprep.subr.mxu0 0.0
      %4078 = vmatpush1.msra.mxu0 0.0
      %4079 = vmatprep.subr.mxu0 0.0
      %4080 = vmatpush1.msra.mxu0 0.0
      %4081 = vmatprep.subr.mxu0 0.0
      %4082 = vmatpush1.msra.mxu0 0.0
      %4083 = vmatprep.subr.mxu0 0.0
      %4084 = vmatpush1.msra.mxu0 0.0
      %4085 = vmatprep.subr.mxu0 0.0
      %4086 = vmatpush1.msra.mxu0 %v2393
      %4087 = vmatprep.subr.mxu0 0.0
      %4088 = vmatpush1.msra.mxu0 %v2257
      %4089 = vmatprep.subr.mxu0 0.0
      %4090 = vmatpush2.msra.mxu0 0.0
      %4091 = vmatprep.subr.mxu0 0.0
      %4092 = vmatpush2.msra.mxu0 0.0
      %4093 = vmatprep.subr.mxu0 0.0
      %4094 = vmatpush2.msra.mxu0 0.0
      %4095 = vmatprep.subr.mxu0 0.0
      %4096 = vmatpush2.msra.mxu0 0.0
      %4097 = vmatprep.subr.mxu0 0.0
      %4098 = vmatpush2.msra.mxu0 0.0
      %4099 = vmatprep.subr.mxu0 0.0
      %4100 = vmatpush2.msra.mxu0 0.0
      %4101 = vmatprep.subr.mxu0 0.0
      %4102 = vmatpush2.msra.mxu0 0.0
      %4103 = vmatprep.subr.mxu0 0.0
      %4104 = vmatpush2.msra.mxu0 0.0
      %4105 = vmatprep.subr.mxu0 0.0
      %4106 = vmatpush2.msra.mxu0 0.0
      %4107 = vmatprep.subr.mxu0 0.0
      %4108 = vmatpush2.msra.mxu0 0.0
      %4109 = vmatprep.subr.mxu0 0.0
      %4110 = vmatpush2.msra.mxu0 0.0
      %4111 = vmatprep.subr.mxu0 0.0
      %4112 = vmatpush2.msra.mxu0 0.0
      %4113 = vmatprep.subr.mxu0 0.0
      %4114 = vmatpush2.msra.mxu0 0.0
      %4115 = vmatprep.subr.mxu0 0.0
      %4116 = vmatpush2.msra.mxu0 0.0
      %4117 = vmatprep.subr.mxu0 0.0
      %4118 = vmatpush2.msra.mxu0 0.0
      %4119 = vmatprep.subr.mxu0 0.0
      %4120 = vmatpush2.msra.mxu0 0.0
      %4121 = vmatprep.mubr.f32.mxu0 0.0
      %4122 = vmatmul.mubr.f32.gmra.mxu0 %v3192
      %v4123 = vpop.f32.mrf.mxu0
      %v4124 = vadd.f32 0.0, %v4123
      %v4125 = vpop.f32.mrf.mxu0
      %4126 = vdwg.mxu0
      %4127 = vmatprep.subr.mxu0 0.0
      %4128 = vmatpush1.msra.mxu0 0.0
      %4129 = vmatprep.subr.mxu0 0.0
      %4130 = vmatpush1.msra.mxu0 0.0
      %4131 = vmatprep.subr.mxu0 0.0
      %4132 = vmatpush1.msra.mxu0 0.0
      %4133 = vmatprep.subr.mxu0 0.0
      %4134 = vmatpush1.msra.mxu0 0.0
      %4135 = vmatprep.subr.mxu0 0.0
      %4136 = vmatpush1.msra.mxu0 0.0
      %4137 = vmatprep.subr.mxu0 0.0
      %4138 = vmatpush1.msra.mxu0 0.0
      %4139 = vmatprep.subr.mxu0 0.0
      %4140 = vmatpush1.msra.mxu0 0.0
      %4141 = vmatprep.subr.mxu0 0.0
      %4142 = vmatpush1.msra.mxu0 0.0
      %4143 = vmatprep.subr.mxu0 0.0
      %4144 = vmatpush1.msra.mxu0 0.0
      %4145 = vmatprep.subr.mxu0 0.0
      %4146 = vmatpush1.msra.mxu0 0.0
      %4147 = vmatprep.subr.mxu0 0.0
      %4148 = vmatpush1.msra.mxu0 0.0
      %4149 = vmatprep.subr.mxu0 0.0
      %4150 = vmatpush1.msra.mxu0 0.0
      %4151 = vmatprep.subr.mxu0 0.0
      %4152 = vmatpush1.msra.mxu0 0.0
      %4153 = vmatprep.subr.mxu0 0.0
      %4154 = vmatpush1.msra.mxu0 0.0
      %4155 = vmatprep.subr.mxu0 0.0
      %4156 = vmatpush1.msra.mxu0 %v2400
      %4157 = vmatprep.subr.mxu0 0.0
      %4158 = vmatpush1.msra.mxu0 %v2264
      %4159 = vmatprep.subr.mxu0 0.0
      %4160 = vmatpush2.msra.mxu0 0.0
      %4161 = vmatprep.subr.mxu0 0.0
      %4162 = vmatpush2.msra.mxu0 0.0
      %4163 = vmatprep.subr.mxu0 0.0
      %4164 = vmatpush2.msra.mxu0 0.0
      %4165 = vmatprep.subr.mxu0 0.0
      %4166 = vmatpush2.msra.mxu0 0.0
      %4167 = vmatprep.subr.mxu0 0.0
      %4168 = vmatpush2.msra.mxu0 0.0
      %4169 = vmatprep.subr.mxu0 0.0
      %4170 = vmatpush2.msra.mxu0 0.0
      %4171 = vmatprep.subr.mxu0 0.0
      %4172 = vmatpush2.msra.mxu0 0.0
      %4173 = vmatprep.subr.mxu0 0.0
      %4174 = vmatpush2.msra.mxu0 0.0
      %4175 = vmatprep.subr.mxu0 0.0
      %4176 = vmatpush2.msra.mxu0 0.0
      %4177 = vmatprep.subr.mxu0 0.0
      %4178 = vmatpush2.msra.mxu0 0.0
      %4179 = vmatprep.subr.mxu0 0.0
      %4180 = vmatpush2.msra.mxu0 0.0
      %4181 = vmatprep.subr.mxu0 0.0
      %4182 = vmatpush2.msra.mxu0 0.0
      %4183 = vmatprep.subr.mxu0 0.0
      %4184 = vmatpush2.msra.mxu0 0.0
      %4185 = vmatprep.subr.mxu0 0.0
      %4186 = vmatpush2.msra.mxu0 0.0
      %4187 = vmatprep.subr.mxu0 0.0
      %4188 = vmatpush2.msra.mxu0 0.0
      %4189 = vmatprep.subr.mxu0 0.0
      %4190 = vmatpush2.msra.mxu0 0.0
      %4191 = vmatprep.mubr.f32.mxu0 0.0
      %4192 = vmatmul.mubr.f32.gmra.mxu0 %v3265
      %v4193 = vpop.f32.mrf.mxu0
      %v4194 = vadd.f32 0.0, %v4193
      %v4195 = vpop.f32.mrf.mxu0
      %4196 = vdwg.mxu0
      %4197 = vmatprep.subr.mxu0 0.0
      %4198 = vmatpush1.msra.mxu0 0.0
      %4199 = vmatprep.subr.mxu0 0.0
      %4200 = vmatpush1.msra.mxu0 0.0
      %4201 = vmatprep.subr.mxu0 0.0
      %4202 = vmatpush1.msra.mxu0 0.0
      %4203 = vmatprep.subr.mxu0 0.0
      %4204 = vmatpush1.msra.mxu0 0.0
      %4205 = vmatprep.subr.mxu0 0.0
      %4206 = vmatpush1.msra.mxu0 0.0
      %4207 = vmatprep.subr.mxu0 0.0
      %4208 = vmatpush1.msra.mxu0 0.0
      %4209 = vmatprep.subr.mxu0 0.0
      %4210 = vmatpush1.msra.mxu0 0.0
      %4211 = vmatprep.subr.mxu0 0.0
      %4212 = vmatpush1.msra.mxu0 0.0
      %4213 = vmatprep.subr.mxu0 0.0
      %4214 = vmatpush1.msra.mxu0 0.0
      %4215 = vmatprep.subr.mxu0 0.0
      %4216 = vmatpush1.msra.mxu0 0.0
      %4217 = vmatprep.subr.mxu0 0.0
      %4218 = vmatpush1.msra.mxu0 0.0
      %4219 = vmatprep.subr.mxu0 0.0
      %4220 = vmatpush1.msra.mxu0 0.0
      %4221 = vmatprep.subr.mxu0 0.0
      %4222 = vmatpush1.msra.mxu0 0.0
      %4223 = vmatprep.subr.mxu0 0.0
      %4224 = vmatpush1.msra.mxu0 0.0
      %4225 = vmatprep.subr.mxu0 0.0
      %4226 = vmatpush1.msra.mxu0 %v2671
      %4227 = vmatprep.subr.mxu0 0.0
      %4228 = vmatpush1.msra.mxu0 %v2535
      %4229 = vmatprep.subr.mxu0 0.0
      %4230 = vmatpush2.msra.mxu0 0.0
      %4231 = vmatprep.subr.mxu0 0.0
      %4232 = vmatpush2.msra.mxu0 0.0
      %4233 = vmatprep.subr.mxu0 0.0
      %4234 = vmatpush2.msra.mxu0 0.0
      %4235 = vmatprep.subr.mxu0 0.0
      %4236 = vmatpush2.msra.mxu0 0.0
      %4237 = vmatprep.subr.mxu0 0.0
      %4238 = vmatpush2.msra.mxu0 0.0
      %4239 = vmatprep.subr.mxu0 0.0
      %4240 = vmatpush2.msra.mxu0 0.0
      %4241 = vmatprep.subr.mxu0 0.0
      %4242 = vmatpush2.msra.mxu0 0.0
      %4243 = vmatprep.subr.mxu0 0.0
      %4244 = vmatpush2.msra.mxu0 0.0
      %4245 = vmatprep.subr.mxu0 0.0
      %4246 = vmatpush2.msra.mxu0 0.0
      %4247 = vmatprep.subr.mxu0 0.0
      %4248 = vmatpush2.msra.mxu0 0.0
      %4249 = vmatprep.subr.mxu0 0.0
      %4250 = vmatpush2.msra.mxu0 0.0
      %4251 = vmatprep.subr.mxu0 0.0
      %4252 = vmatpush2.msra.mxu0 0.0
      %4253 = vmatprep.subr.mxu0 0.0
      %4254 = vmatpush2.msra.mxu0 0.0
      %4255 = vmatprep.subr.mxu0 0.0
      %4256 = vmatpush2.msra.mxu0 0.0
      %4257 = vmatprep.subr.mxu0 0.0
      %4258 = vmatpush2.msra.mxu0 0.0
      %4259 = vmatprep.subr.mxu0 0.0
      %4260 = vmatpush2.msra.mxu0 0.0
      %4261 = vmatprep.mubr.f32.mxu0 0.0
      %4262 = vmatmul.mubr.f32.gmra.mxu0 %v3338
      %v4263 = vpop.f32.mrf.mxu0
      %v4264 = vadd.f32 0.0, %v4263
      %v4265 = vpop.f32.mrf.mxu0
      %4266 = vdwg.mxu0
      %4267 = vmatprep.subr.mxu0 0.0
      %4268 = vmatpush1.msra.mxu0 0.0
      %4269 = vmatprep.subr.mxu0 0.0
      %4270 = vmatpush1.msra.mxu0 0.0
      %4271 = vmatprep.subr.mxu0 0.0
      %4272 = vmatpush1.msra.mxu0 0.0
      %4273 = vmatprep.subr.mxu0 0.0
      %4274 = vmatpush1.msra.mxu0 0.0
      %4275 = vmatprep.subr.mxu0 0.0
      %4276 = vmatpush1.msra.mxu0 0.0
      %4277 = vmatprep.subr.mxu0 0.0
      %4278 = vmatpush1.msra.mxu0 0.0
      %4279 = vmatprep.subr.mxu0 0.0
      %4280 = vmatpush1.msra.mxu0 0.0
      %4281 = vmatprep.subr.mxu0 0.0
      %4282 = vmatpush1.msra.mxu0 0.0
      %4283 = vmatprep.subr.mxu0 0.0
      %4284 = vmatpush1.msra.mxu0 0.0
      %4285 = vmatprep.subr.mxu0 0.0
      %4286 = vmatpush1.msra.mxu0 0.0
      %4287 = vmatprep.subr.mxu0 0.0
      %4288 = vmatpush1.msra.mxu0 0.0
      %4289 = vmatprep.subr.mxu0 0.0
      %4290 = vmatpush1.msra.mxu0 0.0
      %4291 = vmatprep.subr.mxu0 0.0
      %4292 = vmatpush1.msra.mxu0 0.0
      %4293 = vmatprep.subr.mxu0 0.0
      %4294 = vmatpush1.msra.mxu0 0.0
      %4295 = vmatprep.subr.mxu0 0.0
      %4296 = vmatpush1.msra.mxu0 %v2942
      %4297 = vmatprep.subr.mxu0 0.0
      %4298 = vmatpush1.msra.mxu0 %v2806
      %4299 = vmatprep.subr.mxu0 0.0
      %4300 = vmatpush2.msra.mxu0 0.0
      %4301 = vmatprep.subr.mxu0 0.0
      %4302 = vmatpush2.msra.mxu0 0.0
      %4303 = vmatprep.subr.mxu0 0.0
      %4304 = vmatpush2.msra.mxu0 0.0
      %4305 = vmatprep.subr.mxu0 0.0
      %4306 = vmatpush2.msra.mxu0 0.0
      %4307 = vmatprep.subr.mxu0 0.0
      %4308 = vmatpush2.msra.mxu0 0.0
      %4309 = vmatprep.subr.mxu0 0.0
      %4310 = vmatpush2.msra.mxu0 0.0
      %4311 = vmatprep.subr.mxu0 0.0
      %4312 = vmatpush2.msra.mxu0 0.0
      %4313 = vmatprep.subr.mxu0 0.0
      %4314 = vmatpush2.msra.mxu0 0.0
      %4315 = vmatprep.subr.mxu0 0.0
      %4316 = vmatpush2.msra.mxu0 0.0
      %4317 = vmatprep.subr.mxu0 0.0
      %4318 = vmatpush2.msra.mxu0 0.0
      %4319 = vmatprep.subr.mxu0 0.0
      %4320 = vmatpush2.msra.mxu0 0.0
      %4321 = vmatprep.subr.mxu0 0.0
      %4322 = vmatpush2.msra.mxu0 0.0
      %4323 = vmatprep.subr.mxu0 0.0
      %4324 = vmatpush2.msra.mxu0 0.0
      %4325 = vmatprep.subr.mxu0 0.0
      %4326 = vmatpush2.msra.mxu0 0.0
      %4327 = vmatprep.subr.mxu0 0.0
      %4328 = vmatpush2.msra.mxu0 0.0
      %4329 = vmatprep.subr.mxu0 0.0
      %4330 = vmatpush2.msra.mxu0 0.0
      %4331 = vmatprep.mubr.f32.mxu0 0.0
      %4332 = vmatmul.mubr.f32.gmra.mxu0 %v3411
      %v4333 = vpop.f32.mrf.mxu0
      %v4334 = vadd.f32 0.0, %v4333
      %v4335 = vpop.f32.mrf.mxu0
      %4336 = vdwg.mxu0
      %s4337 = scalar_lea.vmem %s224, 16
      %4338 = vst.msk [vmem:[%s4337] sm:$0x7f] %vm3483, %v3984
      %4339 = vst.msk [vmem:[%s4337 + $0x38] sm:$0x7f] %vm3483, %v4054
      %4340 = vst.msk [vmem:[%s4337 + $0x70] sm:$0x7f] %vm3483, %v4124
      %4341 = vst.msk [vmem:[%s4337 + $0xa8] sm:$0x7f] %vm3483, %v4194
      %4342 = vst.msk [vmem:[%s4337 + $0xe0] sm:$0x7f] %vm3483, %v4264
      %4343 = vst.msk [vmem:[%s4337 + $0x118] sm:$0x7f] %vm3483, %v4334
      %4344 = vmatprep.subr.mxu0 0.0
      %4345 = vmatpush1.msra.mxu0 0.0
      %4346 = vmatprep.subr.mxu0 0.0
      %4347 = vmatpush1.msra.mxu0 0.0
      %4348 = vmatprep.subr.mxu0 0.0
      %4349 = vmatpush1.msra.mxu0 0.0
      %4350 = vmatprep.subr.mxu0 0.0
      %4351 = vmatpush1.msra.mxu0 0.0
      %4352 = vmatprep.subr.mxu0 0.0
      %4353 = vmatpush1.msra.mxu0 0.0
      %4354 = vmatprep.subr.mxu0 0.0
      %4355 = vmatpush1.msra.mxu0 0.0
      %4356 = vmatprep.subr.mxu0 0.0
      %4357 = vmatpush1.msra.mxu0 0.0
      %4358 = vmatprep.subr.mxu0 0.0
      %4359 = vmatpush1.msra.mxu0 0.0
      %4360 = vmatprep.subr.mxu0 0.0
      %4361 = vmatpush1.msra.mxu0 0.0
      %4362 = vmatprep.subr.mxu0 0.0
      %4363 = vmatpush1.msra.mxu0 0.0
      %4364 = vmatprep.subr.mxu0 0.0
      %4365 = vmatpush1.msra.mxu0 0.0
      %4366 = vmatprep.subr.mxu0 0.0
      %4367 = vmatpush1.msra.mxu0 0.0
      %4368 = vmatprep.subr.mxu0 0.0
      %4369 = vmatpush1.msra.mxu0 0.0
      %4370 = vmatprep.subr.mxu0 0.0
      %4371 = vmatpush1.msra.mxu0 0.0
      %4372 = vmatprep.subr.mxu0 0.0
      %4373 = vmatpush1.msra.mxu0 %v1852
      %4374 = vmatprep.subr.mxu0 0.0
      %4375 = vmatpush1.msra.mxu0 %v1716
      %4376 = vmatprep.subr.mxu0 0.0
      %4377 = vmatpush2.msra.mxu0 0.0
      %4378 = vmatprep.subr.mxu0 0.0
      %4379 = vmatpush2.msra.mxu0 0.0
      %4380 = vmatprep.subr.mxu0 0.0
      %4381 = vmatpush2.msra.mxu0 0.0
      %4382 = vmatprep.subr.mxu0 0.0
      %4383 = vmatpush2.msra.mxu0 0.0
      %4384 = vmatprep.subr.mxu0 0.0
      %4385 = vmatpush2.msra.mxu0 0.0
      %4386 = vmatprep.subr.mxu0 0.0
      %4387 = vmatpush2.msra.mxu0 0.0
      %4388 = vmatprep.subr.mxu0 0.0
      %4389 = vmatpush2.msra.mxu0 0.0
      %4390 = vmatprep.subr.mxu0 0.0
      %4391 = vmatpush2.msra.mxu0 0.0
      %4392 = vmatprep.subr.mxu0 0.0
      %4393 = vmatpush2.msra.mxu0 0.0
      %4394 = vmatprep.subr.mxu0 0.0
      %4395 = vmatpush2.msra.mxu0 0.0
      %4396 = vmatprep.subr.mxu0 0.0
      %4397 = vmatpush2.msra.mxu0 0.0
      %4398 = vmatprep.subr.mxu0 0.0
      %4399 = vmatpush2.msra.mxu0 0.0
      %4400 = vmatprep.subr.mxu0 0.0
      %4401 = vmatpush2.msra.mxu0 0.0
      %4402 = vmatprep.subr.mxu0 0.0
      %4403 = vmatpush2.msra.mxu0 0.0
      %4404 = vmatprep.subr.mxu0 0.0
      %4405 = vmatpush2.msra.mxu0 0.0
      %4406 = vmatprep.subr.mxu0 0.0
      %4407 = vmatpush2.msra.mxu0 0.0
      %4408 = vmatprep.mubr.f32.mxu0 0.0
      %4409 = vmatmul.mubr.f32.gmra.mxu0 %v3046
      %v4410 = vpop.f32.mrf.mxu0
      %v4411 = vadd.f32 0.0, %v4410
      %v4412 = vpop.f32.mrf.mxu0
      %4413 = vdwg.mxu0
      %4414 = vmatprep.subr.mxu0 0.0
      %4415 = vmatpush1.msra.mxu0 0.0
      %4416 = vmatprep.subr.mxu0 0.0
      %4417 = vmatpush1.msra.mxu0 0.0
      %4418 = vmatprep.subr.mxu0 0.0
      %4419 = vmatpush1.msra.mxu0 0.0
      %4420 = vmatprep.subr.mxu0 0.0
      %4421 = vmatpush1.msra.mxu0 0.0
      %4422 = vmatprep.subr.mxu0 0.0
      %4423 = vmatpush1.msra.mxu0 0.0
      %4424 = vmatprep.subr.mxu0 0.0
      %4425 = vmatpush1.msra.mxu0 0.0
      %4426 = vmatprep.subr.mxu0 0.0
      %4427 = vmatpush1.msra.mxu0 0.0
      %4428 = vmatprep.subr.mxu0 0.0
      %4429 = vmatpush1.msra.mxu0 0.0
      %4430 = vmatprep.subr.mxu0 0.0
      %4431 = vmatpush1.msra.mxu0 0.0
      %4432 = vmatprep.subr.mxu0 0.0
      %4433 = vmatpush1.msra.mxu0 0.0
      %4434 = vmatprep.subr.mxu0 0.0
      %4435 = vmatpush1.msra.mxu0 0.0
      %4436 = vmatprep.subr.mxu0 0.0
      %4437 = vmatpush1.msra.mxu0 0.0
      %4438 = vmatprep.subr.mxu0 0.0
      %4439 = vmatpush1.msra.mxu0 0.0
      %4440 = vmatprep.subr.mxu0 0.0
      %4441 = vmatpush1.msra.mxu0 0.0
      %4442 = vmatprep.subr.mxu0 0.0
      %4443 = vmatpush1.msra.mxu0 %v2123
      %4444 = vmatprep.subr.mxu0 0.0
      %4445 = vmatpush1.msra.mxu0 %v1987
      %4446 = vmatprep.subr.mxu0 0.0
      %4447 = vmatpush2.msra.mxu0 0.0
      %4448 = vmatprep.subr.mxu0 0.0
      %4449 = vmatpush2.msra.mxu0 0.0
      %4450 = vmatprep.subr.mxu0 0.0
      %4451 = vmatpush2.msra.mxu0 0.0
      %4452 = vmatprep.subr.mxu0 0.0
      %4453 = vmatpush2.msra.mxu0 0.0
      %4454 = vmatprep.subr.mxu0 0.0
      %4455 = vmatpush2.msra.mxu0 0.0
      %4456 = vmatprep.subr.mxu0 0.0
      %4457 = vmatpush2.msra.mxu0 0.0
      %4458 = vmatprep.subr.mxu0 0.0
      %4459 = vmatpush2.msra.mxu0 0.0
      %4460 = vmatprep.subr.mxu0 0.0
      %4461 = vmatpush2.msra.mxu0 0.0
      %4462 = vmatprep.subr.mxu0 0.0
      %4463 = vmatpush2.msra.mxu0 0.0
      %4464 = vmatprep.subr.mxu0 0.0
      %4465 = vmatpush2.msra.mxu0 0.0
      %4466 = vmatprep.subr.mxu0 0.0
      %4467 = vmatpush2.msra.mxu0 0.0
      %4468 = vmatprep.subr.mxu0 0.0
      %4469 = vmatpush2.msra.mxu0 0.0
      %4470 = vmatprep.subr.mxu0 0.0
      %4471 = vmatpush2.msra.mxu0 0.0
      %4472 = vmatprep.subr.mxu0 0.0
      %4473 = vmatpush2.msra.mxu0 0.0
      %4474 = vmatprep.subr.mxu0 0.0
      %4475 = vmatpush2.msra.mxu0 0.0
      %4476 = vmatprep.subr.mxu0 0.0
      %4477 = vmatpush2.msra.mxu0 0.0
      %4478 = vmatprep.mubr.f32.mxu0 0.0
      %4479 = vmatmul.mubr.f32.gmra.mxu0 %v3119
      %v4480 = vpop.f32.mrf.mxu0
      %v4481 = vadd.f32 0.0, %v4480
      %v4482 = vpop.f32.mrf.mxu0
      %4483 = vdwg.mxu0
      %4484 = vmatprep.subr.mxu0 0.0
      %4485 = vmatpush1.msra.mxu0 0.0
      %4486 = vmatprep.subr.mxu0 0.0
      %4487 = vmatpush1.msra.mxu0 0.0
      %4488 = vmatprep.subr.mxu0 0.0
      %4489 = vmatpush1.msra.mxu0 0.0
      %4490 = vmatprep.subr.mxu0 0.0
      %4491 = vmatpush1.msra.mxu0 0.0
      %4492 = vmatprep.subr.mxu0 0.0
      %4493 = vmatpush1.msra.mxu0 0.0
      %4494 = vmatprep.subr.mxu0 0.0
      %4495 = vmatpush1.msra.mxu0 0.0
      %4496 = vmatprep.subr.mxu0 0.0
      %4497 = vmatpush1.msra.mxu0 0.0
      %4498 = vmatprep.subr.mxu0 0.0
      %4499 = vmatpush1.msra.mxu0 0.0
      %4500 = vmatprep.subr.mxu0 0.0
      %4501 = vmatpush1.msra.mxu0 0.0
      %4502 = vmatprep.subr.mxu0 0.0
      %4503 = vmatpush1.msra.mxu0 0.0
      %4504 = vmatprep.subr.mxu0 0.0
      %4505 = vmatpush1.msra.mxu0 0.0
      %4506 = vmatprep.subr.mxu0 0.0
      %4507 = vmatpush1.msra.mxu0 0.0
      %4508 = vmatprep.subr.mxu0 0.0
      %4509 = vmatpush1.msra.mxu0 0.0
      %4510 = vmatprep.subr.mxu0 0.0
      %4511 = vmatpush1.msra.mxu0 0.0
      %4512 = vmatprep.subr.mxu0 0.0
      %4513 = vmatpush1.msra.mxu0 %v2394
      %4514 = vmatprep.subr.mxu0 0.0
      %4515 = vmatpush1.msra.mxu0 %v2258
      %4516 = vmatprep.subr.mxu0 0.0
      %4517 = vmatpush2.msra.mxu0 0.0
      %4518 = vmatprep.subr.mxu0 0.0
      %4519 = vmatpush2.msra.mxu0 0.0
      %4520 = vmatprep.subr.mxu0 0.0
      %4521 = vmatpush2.msra.mxu0 0.0
      %4522 = vmatprep.subr.mxu0 0.0
      %4523 = vmatpush2.msra.mxu0 0.0
      %4524 = vmatprep.subr.mxu0 0.0
      %4525 = vmatpush2.msra.mxu0 0.0
      %4526 = vmatprep.subr.mxu0 0.0
      %4527 = vmatpush2.msra.mxu0 0.0
      %4528 = vmatprep.subr.mxu0 0.0
      %4529 = vmatpush2.msra.mxu0 0.0
      %4530 = vmatprep.subr.mxu0 0.0
      %4531 = vmatpush2.msra.mxu0 0.0
      %4532 = vmatprep.subr.mxu0 0.0
      %4533 = vmatpush2.msra.mxu0 0.0
      %4534 = vmatprep.subr.mxu0 0.0
      %4535 = vmatpush2.msra.mxu0 0.0
      %4536 = vmatprep.subr.mxu0 0.0
      %4537 = vmatpush2.msra.mxu0 0.0
      %4538 = vmatprep.subr.mxu0 0.0
      %4539 = vmatpush2.msra.mxu0 0.0
      %4540 = vmatprep.subr.mxu0 0.0
      %4541 = vmatpush2.msra.mxu0 0.0
      %4542 = vmatprep.subr.mxu0 0.0
      %4543 = vmatpush2.msra.mxu0 0.0
      %4544 = vmatprep.subr.mxu0 0.0
      %4545 = vmatpush2.msra.mxu0 0.0
      %4546 = vmatprep.subr.mxu0 0.0
      %4547 = vmatpush2.msra.mxu0 0.0
      %4548 = vmatprep.mubr.f32.mxu0 0.0
      %4549 = vmatmul.mubr.f32.gmra.mxu0 %v3192
      %v4550 = vpop.f32.mrf.mxu0
      %v4551 = vadd.f32 0.0, %v4550
      %v4552 = vpop.f32.mrf.mxu0
      %4553 = vdwg.mxu0
      %4554 = vmatprep.subr.mxu0 0.0
      %4555 = vmatpush1.msra.mxu0 0.0
      %4556 = vmatprep.subr.mxu0 0.0
      %4557 = vmatpush1.msra.mxu0 0.0
      %4558 = vmatprep.subr.mxu0 0.0
      %4559 = vmatpush1.msra.mxu0 0.0
      %4560 = vmatprep.subr.mxu0 0.0
      %4561 = vmatpush1.msra.mxu0 0.0
      %4562 = vmatprep.subr.mxu0 0.0
      %4563 = vmatpush1.msra.mxu0 0.0
      %4564 = vmatprep.subr.mxu0 0.0
      %4565 = vmatpush1.msra.mxu0 0.0
      %4566 = vmatprep.subr.mxu0 0.0
      %4567 = vmatpush1.msra.mxu0 0.0
      %4568 = vmatprep.subr.mxu0 0.0
      %4569 = vmatpush1.msra.mxu0 0.0
      %4570 = vmatprep.subr.mxu0 0.0
      %4571 = vmatpush1.msra.mxu0 0.0
      %4572 = vmatprep.subr.mxu0 0.0
      %4573 = vmatpush1.msra.mxu0 0.0
      %4574 = vmatprep.subr.mxu0 0.0
      %4575 = vmatpush1.msra.mxu0 0.0
      %4576 = vmatprep.subr.mxu0 0.0
      %4577 = vmatpush1.msra.mxu0 0.0
      %4578 = vmatprep.subr.mxu0 0.0
      %4579 = vmatpush1.msra.mxu0 0.0
      %4580 = vmatprep.subr.mxu0 0.0
      %4581 = vmatpush1.msra.mxu0 0.0
      %4582 = vmatprep.subr.mxu0 0.0
      %4583 = vmatpush1.msra.mxu0 %v2665
      %4584 = vmatprep.subr.mxu0 0.0
      %4585 = vmatpush1.msra.mxu0 %v2529
      %4586 = vmatprep.subr.mxu0 0.0
      %4587 = vmatpush2.msra.mxu0 0.0
      %4588 = vmatprep.subr.mxu0 0.0
      %4589 = vmatpush2.msra.mxu0 0.0
      %4590 = vmatprep.subr.mxu0 0.0
      %4591 = vmatpush2.msra.mxu0 0.0
      %4592 = vmatprep.subr.mxu0 0.0
      %4593 = vmatpush2.msra.mxu0 0.0
      %4594 = vmatprep.subr.mxu0 0.0
      %4595 = vmatpush2.msra.mxu0 0.0
      %4596 = vmatprep.subr.mxu0 0.0
      %4597 = vmatpush2.msra.mxu0 0.0
      %4598 = vmatprep.subr.mxu0 0.0
      %4599 = vmatpush2.msra.mxu0 0.0
      %4600 = vmatprep.subr.mxu0 0.0
      %4601 = vmatpush2.msra.mxu0 0.0
      %4602 = vmatprep.subr.mxu0 0.0
      %4603 = vmatpush2.msra.mxu0 0.0
      %4604 = vmatprep.subr.mxu0 0.0
      %4605 = vmatpush2.msra.mxu0 0.0
      %4606 = vmatprep.subr.mxu0 0.0
      %4607 = vmatpush2.msra.mxu0 0.0
      %4608 = vmatprep.subr.mxu0 0.0
      %4609 = vmatpush2.msra.mxu0 0.0
      %4610 = vmatprep.subr.mxu0 0.0
      %4611 = vmatpush2.msra.mxu0 0.0
      %4612 = vmatprep.subr.mxu0 0.0
      %4613 = vmatpush2.msra.mxu0 0.0
      %4614 = vmatprep.subr.mxu0 0.0
      %4615 = vmatpush2.msra.mxu0 0.0
      %4616 = vmatprep.subr.mxu0 0.0
      %4617 = vmatpush2.msra.mxu0 0.0
      %4618 = vmatprep.mubr.f32.mxu0 0.0
      %4619 = vmatmul.mubr.f32.gmra.mxu0 %v3265
      %v4620 = vpop.f32.mrf.mxu0
      %v4621 = vadd.f32 0.0, %v4620
      %v4622 = vpop.f32.mrf.mxu0
      %4623 = vdwg.mxu0
      %4624 = vmatprep.subr.mxu0 0.0
      %4625 = vmatpush1.msra.mxu0 0.0
      %4626 = vmatprep.subr.mxu0 0.0
      %4627 = vmatpush1.msra.mxu0 0.0
      %4628 = vmatprep.subr.mxu0 0.0
      %4629 = vmatpush1.msra.mxu0 0.0
      %4630 = vmatprep.subr.mxu0 0.0
      %4631 = vmatpush1.msra.mxu0 0.0
      %4632 = vmatprep.subr.mxu0 0.0
      %4633 = vmatpush1.msra.mxu0 0.0
      %4634 = vmatprep.subr.mxu0 0.0
      %4635 = vmatpush1.msra.mxu0 0.0
      %4636 = vmatprep.subr.mxu0 0.0
      %4637 = vmatpush1.msra.mxu0 0.0
      %4638 = vmatprep.subr.mxu0 0.0
      %4639 = vmatpush1.msra.mxu0 0.0
      %4640 = vmatprep.subr.mxu0 0.0
      %4641 = vmatpush1.msra.mxu0 0.0
      %4642 = vmatprep.subr.mxu0 0.0
      %4643 = vmatpush1.msra.mxu0 0.0
      %4644 = vmatprep.subr.mxu0 0.0
      %4645 = vmatpush1.msra.mxu0 0.0
      %4646 = vmatprep.subr.mxu0 0.0
      %4647 = vmatpush1.msra.mxu0 0.0
      %4648 = vmatprep.subr.mxu0 0.0
      %4649 = vmatpush1.msra.mxu0 0.0
      %4650 = vmatprep.subr.mxu0 0.0
      %4651 = vmatpush1.msra.mxu0 0.0
      %4652 = vmatprep.subr.mxu0 0.0
      %4653 = vmatpush1.msra.mxu0 %v2672
      %4654 = vmatprep.subr.mxu0 0.0
      %4655 = vmatpush1.msra.mxu0 %v2536
      %4656 = vmatprep.subr.mxu0 0.0
      %4657 = vmatpush2.msra.mxu0 0.0
      %4658 = vmatprep.subr.mxu0 0.0
      %4659 = vmatpush2.msra.mxu0 0.0
      %4660 = vmatprep.subr.mxu0 0.0
      %4661 = vmatpush2.msra.mxu0 0.0
      %4662 = vmatprep.subr.mxu0 0.0
      %4663 = vmatpush2.msra.mxu0 0.0
      %4664 = vmatprep.subr.mxu0 0.0
      %4665 = vmatpush2.msra.mxu0 0.0
      %4666 = vmatprep.subr.mxu0 0.0
      %4667 = vmatpush2.msra.mxu0 0.0
      %4668 = vmatprep.subr.mxu0 0.0
      %4669 = vmatpush2.msra.mxu0 0.0
      %4670 = vmatprep.subr.mxu0 0.0
      %4671 = vmatpush2.msra.mxu0 0.0
      %4672 = vmatprep.subr.mxu0 0.0
      %4673 = vmatpush2.msra.mxu0 0.0
      %4674 = vmatprep.subr.mxu0 0.0
      %4675 = vmatpush2.msra.mxu0 0.0
      %4676 = vmatprep.subr.mxu0 0.0
      %4677 = vmatpush2.msra.mxu0 0.0
      %4678 = vmatprep.subr.mxu0 0.0
      %4679 = vmatpush2.msra.mxu0 0.0
      %4680 = vmatprep.subr.mxu0 0.0
      %4681 = vmatpush2.msra.mxu0 0.0
      %4682 = vmatprep.subr.mxu0 0.0
      %4683 = vmatpush2.msra.mxu0 0.0
      %4684 = vmatprep.subr.mxu0 0.0
      %4685 = vmatpush2.msra.mxu0 0.0
      %4686 = vmatprep.subr.mxu0 0.0
      %4687 = vmatpush2.msra.mxu0 0.0
      %4688 = vmatprep.mubr.f32.mxu0 0.0
      %4689 = vmatmul.mubr.f32.gmra.mxu0 %v3338
      %v4690 = vpop.f32.mrf.mxu0
      %v4691 = vadd.f32 0.0, %v4690
      %v4692 = vpop.f32.mrf.mxu0
      %4693 = vdwg.mxu0
      %4694 = vmatprep.subr.mxu0 0.0
      %4695 = vmatpush1.msra.mxu0 0.0
      %4696 = vmatprep.subr.mxu0 0.0
      %4697 = vmatpush1.msra.mxu0 0.0
      %4698 = vmatprep.subr.mxu0 0.0
      %4699 = vmatpush1.msra.mxu0 0.0
      %4700 = vmatprep.subr.mxu0 0.0
      %4701 = vmatpush1.msra.mxu0 0.0
      %4702 = vmatprep.subr.mxu0 0.0
      %4703 = vmatpush1.msra.mxu0 0.0
      %4704 = vmatprep.subr.mxu0 0.0
      %4705 = vmatpush1.msra.mxu0 0.0
      %4706 = vmatprep.subr.mxu0 0.0
      %4707 = vmatpush1.msra.mxu0 0.0
      %4708 = vmatprep.subr.mxu0 0.0
      %4709 = vmatpush1.msra.mxu0 0.0
      %4710 = vmatprep.subr.mxu0 0.0
      %4711 = vmatpush1.msra.mxu0 0.0
      %4712 = vmatprep.subr.mxu0 0.0
      %4713 = vmatpush1.msra.mxu0 0.0
      %4714 = vmatprep.subr.mxu0 0.0
      %4715 = vmatpush1.msra.mxu0 0.0
      %4716 = vmatprep.subr.mxu0 0.0
      %4717 = vmatpush1.msra.mxu0 0.0
      %4718 = vmatprep.subr.mxu0 0.0
      %4719 = vmatpush1.msra.mxu0 0.0
      %4720 = vmatprep.subr.mxu0 0.0
      %4721 = vmatpush1.msra.mxu0 0.0
      %4722 = vmatprep.subr.mxu0 0.0
      %4723 = vmatpush1.msra.mxu0 %v2943
      %4724 = vmatprep.subr.mxu0 0.0
      %4725 = vmatpush1.msra.mxu0 %v2807
      %4726 = vmatprep.subr.mxu0 0.0
      %4727 = vmatpush2.msra.mxu0 0.0
      %4728 = vmatprep.subr.mxu0 0.0
      %4729 = vmatpush2.msra.mxu0 0.0
      %4730 = vmatprep.subr.mxu0 0.0
      %4731 = vmatpush2.msra.mxu0 0.0
      %4732 = vmatprep.subr.mxu0 0.0
      %4733 = vmatpush2.msra.mxu0 0.0
      %4734 = vmatprep.subr.mxu0 0.0
      %4735 = vmatpush2.msra.mxu0 0.0
      %4736 = vmatprep.subr.mxu0 0.0
      %4737 = vmatpush2.msra.mxu0 0.0
      %4738 = vmatprep.subr.mxu0 0.0
      %4739 = vmatpush2.msra.mxu0 0.0
      %4740 = vmatprep.subr.mxu0 0.0
      %4741 = vmatpush2.msra.mxu0 0.0
      %4742 = vmatprep.subr.mxu0 0.0
      %4743 = vmatpush2.msra.mxu0 0.0
      %4744 = vmatprep.subr.mxu0 0.0
      %4745 = vmatpush2.msra.mxu0 0.0
      %4746 = vmatprep.subr.mxu0 0.0
      %4747 = vmatpush2.msra.mxu0 0.0
      %4748 = vmatprep.subr.mxu0 0.0
      %4749 = vmatpush2.msra.mxu0 0.0
      %4750 = vmatprep.subr.mxu0 0.0
      %4751 = vmatpush2.msra.mxu0 0.0
      %4752 = vmatprep.subr.mxu0 0.0
      %4753 = vmatpush2.msra.mxu0 0.0
      %4754 = vmatprep.subr.mxu0 0.0
      %4755 = vmatpush2.msra.mxu0 0.0
      %4756 = vmatprep.subr.mxu0 0.0
      %4757 = vmatpush2.msra.mxu0 0.0
      %4758 = vmatprep.mubr.f32.mxu0 0.0
      %4759 = vmatmul.mubr.f32.gmra.mxu0 %v3411
      %v4760 = vpop.f32.mrf.mxu0
      %v4761 = vadd.f32 0.0, %v4760
      %v4762 = vpop.f32.mrf.mxu0
      %4763 = vdwg.mxu0
      %s4764 = scalar_lea.vmem %s224, 24
      %4765 = vst.msk [vmem:[%s4764] sm:$0x7f] %vm3483, %v4411
      %4766 = vst.msk [vmem:[%s4764 + $0x38] sm:$0x7f] %vm3483, %v4481
      %4767 = vst.msk [vmem:[%s4764 + $0x70] sm:$0x7f] %vm3483, %v4551
      %4768 = vst.msk [vmem:[%s4764 + $0xa8] sm:$0x7f] %vm3483, %v4621
      %4769 = vst.msk [vmem:[%s4764 + $0xe0] sm:$0x7f] %vm3483, %v4691
      %4770 = vst.msk [vmem:[%s4764 + $0x118] sm:$0x7f] %vm3483, %v4761
      %4771 = vmatprep.subr.mxu0 0.0
      %4772 = vmatpush1.msra.mxu0 0.0
      %4773 = vmatprep.subr.mxu0 0.0
      %4774 = vmatpush1.msra.mxu0 0.0
      %4775 = vmatprep.subr.mxu0 0.0
      %4776 = vmatpush1.msra.mxu0 0.0
      %4777 = vmatprep.subr.mxu0 0.0
      %4778 = vmatpush1.msra.mxu0 0.0
      %4779 = vmatprep.subr.mxu0 0.0
      %4780 = vmatpush1.msra.mxu0 0.0
      %4781 = vmatprep.subr.mxu0 0.0
      %4782 = vmatpush1.msra.mxu0 0.0
      %4783 = vmatprep.subr.mxu0 0.0
      %4784 = vmatpush1.msra.mxu0 0.0
      %4785 = vmatprep.subr.mxu0 0.0
      %4786 = vmatpush1.msra.mxu0 0.0
      %4787 = vmatprep.subr.mxu0 0.0
      %4788 = vmatpush1.msra.mxu0 0.0
      %4789 = vmatprep.subr.mxu0 0.0
      %4790 = vmatpush1.msra.mxu0 0.0
      %4791 = vmatprep.subr.mxu0 0.0
      %4792 = vmatpush1.msra.mxu0 0.0
      %4793 = vmatprep.subr.mxu0 0.0
      %4794 = vmatpush1.msra.mxu0 0.0
      %4795 = vmatprep.subr.mxu0 0.0
      %4796 = vmatpush1.msra.mxu0 0.0
      %4797 = vmatprep.subr.mxu0 0.0
      %4798 = vmatpush1.msra.mxu0 0.0
      %4799 = vmatprep.subr.mxu0 0.0
      %4800 = vmatpush1.msra.mxu0 %v1853
      %4801 = vmatprep.subr.mxu0 0.0
      %4802 = vmatpush1.msra.mxu0 %v1717
      %4803 = vmatprep.subr.mxu0 0.0
      %4804 = vmatpush2.msra.mxu0 0.0
      %4805 = vmatprep.subr.mxu0 0.0
      %4806 = vmatpush2.msra.mxu0 0.0
      %4807 = vmatprep.subr.mxu0 0.0
      %4808 = vmatpush2.msra.mxu0 0.0
      %4809 = vmatprep.subr.mxu0 0.0
      %4810 = vmatpush2.msra.mxu0 0.0
      %4811 = vmatprep.subr.mxu0 0.0
      %4812 = vmatpush2.msra.mxu0 0.0
      %4813 = vmatprep.subr.mxu0 0.0
      %4814 = vmatpush2.msra.mxu0 0.0
      %4815 = vmatprep.subr.mxu0 0.0
      %4816 = vmatpush2.msra.mxu0 0.0
      %4817 = vmatprep.subr.mxu0 0.0
      %4818 = vmatpush2.msra.mxu0 0.0
      %4819 = vmatprep.subr.mxu0 0.0
      %4820 = vmatpush2.msra.mxu0 0.0
      %4821 = vmatprep.subr.mxu0 0.0
      %4822 = vmatpush2.msra.mxu0 0.0
      %4823 = vmatprep.subr.mxu0 0.0
      %4824 = vmatpush2.msra.mxu0 0.0
      %4825 = vmatprep.subr.mxu0 0.0
      %4826 = vmatpush2.msra.mxu0 0.0
      %4827 = vmatprep.subr.mxu0 0.0
      %4828 = vmatpush2.msra.mxu0 0.0
      %4829 = vmatprep.subr.mxu0 0.0
      %4830 = vmatpush2.msra.mxu0 0.0
      %4831 = vmatprep.subr.mxu0 0.0
      %4832 = vmatpush2.msra.mxu0 0.0
      %4833 = vmatprep.subr.mxu0 0.0
      %4834 = vmatpush2.msra.mxu0 0.0
      %4835 = vmatprep.mubr.f32.mxu0 0.0
      %4836 = vmatmul.mubr.f32.gmra.mxu0 %v3046
      %v4837 = vpop.f32.mrf.mxu0
      %v4838 = vadd.f32 0.0, %v4837
      %v4839 = vpop.f32.mrf.mxu0
      %4840 = vdwg.mxu0
      %4841 = vmatprep.subr.mxu0 0.0
      %4842 = vmatpush1.msra.mxu0 0.0
      %4843 = vmatprep.subr.mxu0 0.0
      %4844 = vmatpush1.msra.mxu0 0.0
      %4845 = vmatprep.subr.mxu0 0.0
      %4846 = vmatpush1.msra.mxu0 0.0
      %4847 = vmatprep.subr.mxu0 0.0
      %4848 = vmatpush1.msra.mxu0 0.0
      %4849 = vmatprep.subr.mxu0 0.0
      %4850 = vmatpush1.msra.mxu0 0.0
      %4851 = vmatprep.subr.mxu0 0.0
      %4852 = vmatpush1.msra.mxu0 0.0
      %4853 = vmatprep.subr.mxu0 0.0
      %4854 = vmatpush1.msra.mxu0 0.0
      %4855 = vmatprep.subr.mxu0 0.0
      %4856 = vmatpush1.msra.mxu0 0.0
      %4857 = vmatprep.subr.mxu0 0.0
      %4858 = vmatpush1.msra.mxu0 0.0
      %4859 = vmatprep.subr.mxu0 0.0
      %4860 = vmatpush1.msra.mxu0 0.0
      %4861 = vmatprep.subr.mxu0 0.0
      %4862 = vmatpush1.msra.mxu0 0.0
      %4863 = vmatprep.subr.mxu0 0.0
      %4864 = vmatpush1.msra.mxu0 0.0
      %4865 = vmatprep.subr.mxu0 0.0
      %4866 = vmatpush1.msra.mxu0 0.0
      %4867 = vmatprep.subr.mxu0 0.0
      %4868 = vmatpush1.msra.mxu0 0.0
      %4869 = vmatprep.subr.mxu0 0.0
      %4870 = vmatpush1.msra.mxu0 %v2124
      %4871 = vmatprep.subr.mxu0 0.0
      %4872 = vmatpush1.msra.mxu0 %v1988
      %4873 = vmatprep.subr.mxu0 0.0
      %4874 = vmatpush2.msra.mxu0 0.0
      %4875 = vmatprep.subr.mxu0 0.0
      %4876 = vmatpush2.msra.mxu0 0.0
      %4877 = vmatprep.subr.mxu0 0.0
      %4878 = vmatpush2.msra.mxu0 0.0
      %4879 = vmatprep.subr.mxu0 0.0
      %4880 = vmatpush2.msra.mxu0 0.0
      %4881 = vmatprep.subr.mxu0 0.0
      %4882 = vmatpush2.msra.mxu0 0.0
      %4883 = vmatprep.subr.mxu0 0.0
      %4884 = vmatpush2.msra.mxu0 0.0
      %4885 = vmatprep.subr.mxu0 0.0
      %4886 = vmatpush2.msra.mxu0 0.0
      %4887 = vmatprep.subr.mxu0 0.0
      %4888 = vmatpush2.msra.mxu0 0.0
      %4889 = vmatprep.subr.mxu0 0.0
      %4890 = vmatpush2.msra.mxu0 0.0
      %4891 = vmatprep.subr.mxu0 0.0
      %4892 = vmatpush2.msra.mxu0 0.0
      %4893 = vmatprep.subr.mxu0 0.0
      %4894 = vmatpush2.msra.mxu0 0.0
      %4895 = vmatprep.subr.mxu0 0.0
      %4896 = vmatpush2.msra.mxu0 0.0
      %4897 = vmatprep.subr.mxu0 0.0
      %4898 = vmatpush2.msra.mxu0 0.0
      %4899 = vmatprep.subr.mxu0 0.0
      %4900 = vmatpush2.msra.mxu0 0.0
      %4901 = vmatprep.subr.mxu0 0.0
      %4902 = vmatpush2.msra.mxu0 0.0
      %4903 = vmatprep.subr.mxu0 0.0
      %4904 = vmatpush2.msra.mxu0 0.0
      %4905 = vmatprep.mubr.f32.mxu0 0.0
      %4906 = vmatmul.mubr.f32.gmra.mxu0 %v3119
      %v4907 = vpop.f32.mrf.mxu0
      %v4908 = vadd.f32 0.0, %v4907
      %v4909 = vpop.f32.mrf.mxu0
      %4910 = vdwg.mxu0
      %4911 = vmatprep.subr.mxu0 0.0
      %4912 = vmatpush1.msra.mxu0 0.0
      %4913 = vmatprep.subr.mxu0 0.0
      %4914 = vmatpush1.msra.mxu0 0.0
      %4915 = vmatprep.subr.mxu0 0.0
      %4916 = vmatpush1.msra.mxu0 0.0
      %4917 = vmatprep.subr.mxu0 0.0
      %4918 = vmatpush1.msra.mxu0 0.0
      %4919 = vmatprep.subr.mxu0 0.0
      %4920 = vmatpush1.msra.mxu0 0.0
      %4921 = vmatprep.subr.mxu0 0.0
      %4922 = vmatpush1.msra.mxu0 0.0
      %4923 = vmatprep.subr.mxu0 0.0
      %4924 = vmatpush1.msra.mxu0 0.0
      %4925 = vmatprep.subr.mxu0 0.0
      %4926 = vmatpush1.msra.mxu0 0.0
      %4927 = vmatprep.subr.mxu0 0.0
      %4928 = vmatpush1.msra.mxu0 0.0
      %4929 = vmatprep.subr.mxu0 0.0
      %4930 = vmatpush1.msra.mxu0 0.0
      %4931 = vmatprep.subr.mxu0 0.0
      %4932 = vmatpush1.msra.mxu0 0.0
      %4933 = vmatprep.subr.mxu0 0.0
      %4934 = vmatpush1.msra.mxu0 0.0
      %4935 = vmatprep.subr.mxu0 0.0
      %4936 = vmatpush1.msra.mxu0 0.0
      %4937 = vmatprep.subr.mxu0 0.0
      %4938 = vmatpush1.msra.mxu0 0.0
      %4939 = vmatprep.subr.mxu0 0.0
      %4940 = vmatpush1.msra.mxu0 %v2395
      %4941 = vmatprep.subr.mxu0 0.0
      %4942 = vmatpush1.msra.mxu0 %v2259
      %4943 = vmatprep.subr.mxu0 0.0
      %4944 = vmatpush2.msra.mxu0 0.0
      %4945 = vmatprep.subr.mxu0 0.0
      %4946 = vmatpush2.msra.mxu0 0.0
      %4947 = vmatprep.subr.mxu0 0.0
      %4948 = vmatpush2.msra.mxu0 0.0
      %4949 = vmatprep.subr.mxu0 0.0
      %4950 = vmatpush2.msra.mxu0 0.0
      %4951 = vmatprep.subr.mxu0 0.0
      %4952 = vmatpush2.msra.mxu0 0.0
      %4953 = vmatprep.subr.mxu0 0.0
      %4954 = vmatpush2.msra.mxu0 0.0
      %4955 = vmatprep.subr.mxu0 0.0
      %4956 = vmatpush2.msra.mxu0 0.0
      %4957 = vmatprep.subr.mxu0 0.0
      %4958 = vmatpush2.msra.mxu0 0.0
      %4959 = vmatprep.subr.mxu0 0.0
      %4960 = vmatpush2.msra.mxu0 0.0
      %4961 = vmatprep.subr.mxu0 0.0
      %4962 = vmatpush2.msra.mxu0 0.0
      %4963 = vmatprep.subr.mxu0 0.0
      %4964 = vmatpush2.msra.mxu0 0.0
      %4965 = vmatprep.subr.mxu0 0.0
      %4966 = vmatpush2.msra.mxu0 0.0
      %4967 = vmatprep.subr.mxu0 0.0
      %4968 = vmatpush2.msra.mxu0 0.0
      %4969 = vmatprep.subr.mxu0 0.0
      %4970 = vmatpush2.msra.mxu0 0.0
      %4971 = vmatprep.subr.mxu0 0.0
      %4972 = vmatpush2.msra.mxu0 0.0
      %4973 = vmatprep.subr.mxu0 0.0
      %4974 = vmatpush2.msra.mxu0 0.0
      %4975 = vmatprep.mubr.f32.mxu0 0.0
      %4976 = vmatmul.mubr.f32.gmra.mxu0 %v3192
      %v4977 = vpop.f32.mrf.mxu0
      %v4978 = vadd.f32 0.0, %v4977
      %v4979 = vpop.f32.mrf.mxu0
      %4980 = vdwg.mxu0
      %4981 = vmatprep.subr.mxu0 0.0
      %4982 = vmatpush1.msra.mxu0 0.0
      %4983 = vmatprep.subr.mxu0 0.0
      %4984 = vmatpush1.msra.mxu0 0.0
      %4985 = vmatprep.subr.mxu0 0.0
      %4986 = vmatpush1.msra.mxu0 0.0
      %4987 = vmatprep.subr.mxu0 0.0
      %4988 = vmatpush1.msra.mxu0 0.0
      %4989 = vmatprep.subr.mxu0 0.0
      %4990 = vmatpush1.msra.mxu0 0.0
      %4991 = vmatprep.subr.mxu0 0.0
      %4992 = vmatpush1.msra.mxu0 0.0
      %4993 = vmatprep.subr.mxu0 0.0
      %4994 = vmatpush1.msra.mxu0 0.0
      %4995 = vmatprep.subr.mxu0 0.0
      %4996 = vmatpush1.msra.mxu0 0.0
      %4997 = vmatprep.subr.mxu0 0.0
      %4998 = vmatpush1.msra.mxu0 0.0
      %4999 = vmatprep.subr.mxu0 0.0
      %5000 = vmatpush1.msra.mxu0 0.0
      %5001 = vmatprep.subr.mxu0 0.0
      %5002 = vmatpush1.msra.mxu0 0.0
      %5003 = vmatprep.subr.mxu0 0.0
      %5004 = vmatpush1.msra.mxu0 0.0
      %5005 = vmatprep.subr.mxu0 0.0
      %5006 = vmatpush1.msra.mxu0 0.0
      %5007 = vmatprep.subr.mxu0 0.0
      %5008 = vmatpush1.msra.mxu0 0.0
      %5009 = vmatprep.subr.mxu0 0.0
      %5010 = vmatpush1.msra.mxu0 %v2666
      %5011 = vmatprep.subr.mxu0 0.0
      %5012 = vmatpush1.msra.mxu0 %v2530
      %5013 = vmatprep.subr.mxu0 0.0
      %5014 = vmatpush2.msra.mxu0 0.0
      %5015 = vmatprep.subr.mxu0 0.0
      %5016 = vmatpush2.msra.mxu0 0.0
      %5017 = vmatprep.subr.mxu0 0.0
      %5018 = vmatpush2.msra.mxu0 0.0
      %5019 = vmatprep.subr.mxu0 0.0
      %5020 = vmatpush2.msra.mxu0 0.0
      %5021 = vmatprep.subr.mxu0 0.0
      %5022 = vmatpush2.msra.mxu0 0.0
      %5023 = vmatprep.subr.mxu0 0.0
      %5024 = vmatpush2.msra.mxu0 0.0
      %5025 = vmatprep.subr.mxu0 0.0
      %5026 = vmatpush2.msra.mxu0 0.0
      %5027 = vmatprep.subr.mxu0 0.0
      %5028 = vmatpush2.msra.mxu0 0.0
      %5029 = vmatprep.subr.mxu0 0.0
      %5030 = vmatpush2.msra.mxu0 0.0
      %5031 = vmatprep.subr.mxu0 0.0
      %5032 = vmatpush2.msra.mxu0 0.0
      %5033 = vmatprep.subr.mxu0 0.0
      %5034 = vmatpush2.msra.mxu0 0.0
      %5035 = vmatprep.subr.mxu0 0.0
      %5036 = vmatpush2.msra.mxu0 0.0
      %5037 = vmatprep.subr.mxu0 0.0
      %5038 = vmatpush2.msra.mxu0 0.0
      %5039 = vmatprep.subr.mxu0 0.0
      %5040 = vmatpush2.msra.mxu0 0.0
      %5041 = vmatprep.subr.mxu0 0.0
      %5042 = vmatpush2.msra.mxu0 0.0
      %5043 = vmatprep.subr.mxu0 0.0
      %5044 = vmatpush2.msra.mxu0 0.0
      %5045 = vmatprep.mubr.f32.mxu0 0.0
      %5046 = vmatmul.mubr.f32.gmra.mxu0 %v3265
      %v5047 = vpop.f32.mrf.mxu0
      %v5048 = vadd.f32 0.0, %v5047
      %v5049 = vpop.f32.mrf.mxu0
      %5050 = vdwg.mxu0
      %5051 = vmatprep.subr.mxu0 0.0
      %5052 = vmatpush1.msra.mxu0 0.0
      %5053 = vmatprep.subr.mxu0 0.0
      %5054 = vmatpush1.msra.mxu0 0.0
      %5055 = vmatprep.subr.mxu0 0.0
      %5056 = vmatpush1.msra.mxu0 0.0
      %5057 = vmatprep.subr.mxu0 0.0
      %5058 = vmatpush1.msra.mxu0 0.0
      %5059 = vmatprep.subr.mxu0 0.0
      %5060 = vmatpush1.msra.mxu0 0.0
      %5061 = vmatprep.subr.mxu0 0.0
      %5062 = vmatpush1.msra.mxu0 0.0
      %5063 = vmatprep.subr.mxu0 0.0
      %5064 = vmatpush1.msra.mxu0 0.0
      %5065 = vmatprep.subr.mxu0 0.0
      %5066 = vmatpush1.msra.mxu0 0.0
      %5067 = vmatprep.subr.mxu0 0.0
      %5068 = vmatpush1.msra.mxu0 0.0
      %5069 = vmatprep.subr.mxu0 0.0
      %5070 = vmatpush1.msra.mxu0 0.0
      %5071 = vmatprep.subr.mxu0 0.0
      %5072 = vmatpush1.msra.mxu0 0.0
      %5073 = vmatprep.subr.mxu0 0.0
      %5074 = vmatpush1.msra.mxu0 0.0
      %5075 = vmatprep.subr.mxu0 0.0
      %5076 = vmatpush1.msra.mxu0 0.0
      %5077 = vmatprep.subr.mxu0 0.0
      %5078 = vmatpush1.msra.mxu0 0.0
      %5079 = vmatprep.subr.mxu0 0.0
      %5080 = vmatpush1.msra.mxu0 %v2937
      %5081 = vmatprep.subr.mxu0 0.0
      %5082 = vmatpush1.msra.mxu0 %v2801
      %5083 = vmatprep.subr.mxu0 0.0
      %5084 = vmatpush2.msra.mxu0 0.0
      %5085 = vmatprep.subr.mxu0 0.0
      %5086 = vmatpush2.msra.mxu0 0.0
      %5087 = vmatprep.subr.mxu0 0.0
      %5088 = vmatpush2.msra.mxu0 0.0
      %5089 = vmatprep.subr.mxu0 0.0
      %5090 = vmatpush2.msra.mxu0 0.0
      %5091 = vmatprep.subr.mxu0 0.0
      %5092 = vmatpush2.msra.mxu0 0.0
      %5093 = vmatprep.subr.mxu0 0.0
      %5094 = vmatpush2.msra.mxu0 0.0
      %5095 = vmatprep.subr.mxu0 0.0
      %5096 = vmatpush2.msra.mxu0 0.0
      %5097 = vmatprep.subr.mxu0 0.0
      %5098 = vmatpush2.msra.mxu0 0.0
      %5099 = vmatprep.subr.mxu0 0.0
      %5100 = vmatpush2.msra.mxu0 0.0
      %5101 = vmatprep.subr.mxu0 0.0
      %5102 = vmatpush2.msra.mxu0 0.0
      %5103 = vmatprep.subr.mxu0 0.0
      %5104 = vmatpush2.msra.mxu0 0.0
      %5105 = vmatprep.subr.mxu0 0.0
      %5106 = vmatpush2.msra.mxu0 0.0
      %5107 = vmatprep.subr.mxu0 0.0
      %5108 = vmatpush2.msra.mxu0 0.0
      %5109 = vmatprep.subr.mxu0 0.0
      %5110 = vmatpush2.msra.mxu0 0.0
      %5111 = vmatprep.subr.mxu0 0.0
      %5112 = vmatpush2.msra.mxu0 0.0
      %5113 = vmatprep.subr.mxu0 0.0
      %5114 = vmatpush2.msra.mxu0 0.0
      %5115 = vmatprep.mubr.f32.mxu0 0.0
      %5116 = vmatmul.mubr.f32.gmra.mxu0 %v3338
      %v5117 = vpop.f32.mrf.mxu0
      %v5118 = vadd.f32 0.0, %v5117
      %v5119 = vpop.f32.mrf.mxu0
      %5120 = vdwg.mxu0
      %5121 = vmatprep.subr.mxu0 0.0
      %5122 = vmatpush1.msra.mxu0 0.0
      %5123 = vmatprep.subr.mxu0 0.0
      %5124 = vmatpush1.msra.mxu0 0.0
      %5125 = vmatprep.subr.mxu0 0.0
      %5126 = vmatpush1.msra.mxu0 0.0
      %5127 = vmatprep.subr.mxu0 0.0
      %5128 = vmatpush1.msra.mxu0 0.0
      %5129 = vmatprep.subr.mxu0 0.0
      %5130 = vmatpush1.msra.mxu0 0.0
      %5131 = vmatprep.subr.mxu0 0.0
      %5132 = vmatpush1.msra.mxu0 0.0
      %5133 = vmatprep.subr.mxu0 0.0
      %5134 = vmatpush1.msra.mxu0 0.0
      %5135 = vmatprep.subr.mxu0 0.0
      %5136 = vmatpush1.msra.mxu0 0.0
      %5137 = vmatprep.subr.mxu0 0.0
      %5138 = vmatpush1.msra.mxu0 0.0
      %5139 = vmatprep.subr.mxu0 0.0
      %5140 = vmatpush1.msra.mxu0 0.0
      %5141 = vmatprep.subr.mxu0 0.0
      %5142 = vmatpush1.msra.mxu0 0.0
      %5143 = vmatprep.subr.mxu0 0.0
      %5144 = vmatpush1.msra.mxu0 0.0
      %5145 = vmatprep.subr.mxu0 0.0
      %5146 = vmatpush1.msra.mxu0 0.0
      %5147 = vmatprep.subr.mxu0 0.0
      %5148 = vmatpush1.msra.mxu0 0.0
      %5149 = vmatprep.subr.mxu0 0.0
      %5150 = vmatpush1.msra.mxu0 %v2944
      %5151 = vmatprep.subr.mxu0 0.0
      %5152 = vmatpush1.msra.mxu0 %v2808
      %5153 = vmatprep.subr.mxu0 0.0
      %5154 = vmatpush2.msra.mxu0 0.0
      %5155 = vmatprep.subr.mxu0 0.0
      %5156 = vmatpush2.msra.mxu0 0.0
      %5157 = vmatprep.subr.mxu0 0.0
      %5158 = vmatpush2.msra.mxu0 0.0
      %5159 = vmatprep.subr.mxu0 0.0
      %5160 = vmatpush2.msra.mxu0 0.0
      %5161 = vmatprep.subr.mxu0 0.0
      %5162 = vmatpush2.msra.mxu0 0.0
      %5163 = vmatprep.subr.mxu0 0.0
      %5164 = vmatpush2.msra.mxu0 0.0
      %5165 = vmatprep.subr.mxu0 0.0
      %5166 = vmatpush2.msra.mxu0 0.0
      %5167 = vmatprep.subr.mxu0 0.0
      %5168 = vmatpush2.msra.mxu0 0.0
      %5169 = vmatprep.subr.mxu0 0.0
      %5170 = vmatpush2.msra.mxu0 0.0
      %5171 = vmatprep.subr.mxu0 0.0
      %5172 = vmatpush2.msra.mxu0 0.0
      %5173 = vmatprep.subr.mxu0 0.0
      %5174 = vmatpush2.msra.mxu0 0.0
      %5175 = vmatprep.subr.mxu0 0.0
      %5176 = vmatpush2.msra.mxu0 0.0
      %5177 = vmatprep.subr.mxu0 0.0
      %5178 = vmatpush2.msra.mxu0 0.0
      %5179 = vmatprep.subr.mxu0 0.0
      %5180 = vmatpush2.msra.mxu0 0.0
      %5181 = vmatprep.subr.mxu0 0.0
      %5182 = vmatpush2.msra.mxu0 0.0
      %5183 = vmatprep.subr.mxu0 0.0
      %5184 = vmatpush2.msra.mxu0 0.0
      %5185 = vmatprep.mubr.f32.mxu0 0.0
      %5186 = vmatmul.mubr.f32.gmra.mxu0 %v3411
      %v5187 = vpop.f32.mrf.mxu0
      %v5188 = vadd.f32 0.0, %v5187
      %v5189 = vpop.f32.mrf.mxu0
      %5190 = vdwg.mxu0
      %s5191 = scalar_lea.vmem %s224, 32
      %5192 = vst.msk [vmem:[%s5191] sm:$0x7f] %vm3483, %v4838
      %5193 = vst.msk [vmem:[%s5191 + $0x38] sm:$0x7f] %vm3483, %v4908
      %5194 = vst.msk [vmem:[%s5191 + $0x70] sm:$0x7f] %vm3483, %v4978
      %5195 = vst.msk [vmem:[%s5191 + $0xa8] sm:$0x7f] %vm3483, %v5048
      %5196 = vst.msk [vmem:[%s5191 + $0xe0] sm:$0x7f] %vm3483, %v5118
      %5197 = vst.msk [vmem:[%s5191 + $0x118] sm:$0x7f] %vm3483, %v5188
      %5198 = vmatprep.subr.mxu0 0.0
      %5199 = vmatpush1.msra.mxu0 0.0
      %5200 = vmatprep.subr.mxu0 0.0
      %5201 = vmatpush1.msra.mxu0 0.0
      %5202 = vmatprep.subr.mxu0 0.0
      %5203 = vmatpush1.msra.mxu0 0.0
      %5204 = vmatprep.subr.mxu0 0.0
      %5205 = vmatpush1.msra.mxu0 0.0
      %5206 = vmatprep.subr.mxu0 0.0
      %5207 = vmatpush1.msra.mxu0 0.0
      %5208 = vmatprep.subr.mxu0 0.0
      %5209 = vmatpush1.msra.mxu0 0.0
      %5210 = vmatprep.subr.mxu0 0.0
      %5211 = vmatpush1.msra.mxu0 0.0
      %5212 = vmatprep.subr.mxu0 0.0
      %5213 = vmatpush1.msra.mxu0 0.0
      %5214 = vmatprep.subr.mxu0 0.0
      %5215 = vmatpush1.msra.mxu0 0.0
      %5216 = vmatprep.subr.mxu0 0.0
      %5217 = vmatpush1.msra.mxu0 0.0
      %5218 = vmatprep.subr.mxu0 0.0
      %5219 = vmatpush1.msra.mxu0 0.0
      %5220 = vmatprep.subr.mxu0 0.0
      %5221 = vmatpush1.msra.mxu0 0.0
      %5222 = vmatprep.subr.mxu0 0.0
      %5223 = vmatpush1.msra.mxu0 0.0
      %5224 = vmatprep.subr.mxu0 0.0
      %5225 = vmatpush1.msra.mxu0 0.0
      %5226 = vmatprep.subr.mxu0 0.0
      %5227 = vmatpush1.msra.mxu0 %v1854
      %5228 = vmatprep.subr.mxu0 0.0
      %5229 = vmatpush1.msra.mxu0 %v1718
      %5230 = vmatprep.subr.mxu0 0.0
      %5231 = vmatpush2.msra.mxu0 0.0
      %5232 = vmatprep.subr.mxu0 0.0
      %5233 = vmatpush2.msra.mxu0 0.0
      %5234 = vmatprep.subr.mxu0 0.0
      %5235 = vmatpush2.msra.mxu0 0.0
      %5236 = vmatprep.subr.mxu0 0.0
      %5237 = vmatpush2.msra.mxu0 0.0
      %5238 = vmatprep.subr.mxu0 0.0
      %5239 = vmatpush2.msra.mxu0 0.0
      %5240 = vmatprep.subr.mxu0 0.0
      %5241 = vmatpush2.msra.mxu0 0.0
      %5242 = vmatprep.subr.mxu0 0.0
      %5243 = vmatpush2.msra.mxu0 0.0
      %5244 = vmatprep.subr.mxu0 0.0
      %5245 = vmatpush2.msra.mxu0 0.0
      %5246 = vmatprep.subr.mxu0 0.0
      %5247 = vmatpush2.msra.mxu0 0.0
      %5248 = vmatprep.subr.mxu0 0.0
      %5249 = vmatpush2.msra.mxu0 0.0
      %5250 = vmatprep.subr.mxu0 0.0
      %5251 = vmatpush2.msra.mxu0 0.0
      %5252 = vmatprep.subr.mxu0 0.0
      %5253 = vmatpush2.msra.mxu0 0.0
      %5254 = vmatprep.subr.mxu0 0.0
      %5255 = vmatpush2.msra.mxu0 0.0
      %5256 = vmatprep.subr.mxu0 0.0
      %5257 = vmatpush2.msra.mxu0 0.0
      %5258 = vmatprep.subr.mxu0 0.0
      %5259 = vmatpush2.msra.mxu0 0.0
      %5260 = vmatprep.subr.mxu0 0.0
      %5261 = vmatpush2.msra.mxu0 0.0
      %5262 = vmatprep.mubr.f32.mxu0 0.0
      %5263 = vmatmul.mubr.f32.gmra.mxu0 %v3046
      %v5264 = vpop.f32.mrf.mxu0
      %v5265 = vadd.f32 0.0, %v5264
      %v5266 = vpop.f32.mrf.mxu0
      %5267 = vdwg.mxu0
      %5268 = vmatprep.subr.mxu0 0.0
      %5269 = vmatpush1.msra.mxu0 0.0
      %5270 = vmatprep.subr.mxu0 0.0
      %5271 = vmatpush1.msra.mxu0 0.0
      %5272 = vmatprep.subr.mxu0 0.0
      %5273 = vmatpush1.msra.mxu0 0.0
      %5274 = vmatprep.subr.mxu0 0.0
      %5275 = vmatpush1.msra.mxu0 0.0
      %5276 = vmatprep.subr.mxu0 0.0
      %5277 = vmatpush1.msra.mxu0 0.0
      %5278 = vmatprep.subr.mxu0 0.0
      %5279 = vmatpush1.msra.mxu0 0.0
      %5280 = vmatprep.subr.mxu0 0.0
      %5281 = vmatpush1.msra.mxu0 0.0
      %5282 = vmatprep.subr.mxu0 0.0
      %5283 = vmatpush1.msra.mxu0 0.0
      %5284 = vmatprep.subr.mxu0 0.0
      %5285 = vmatpush1.msra.mxu0 0.0
      %5286 = vmatprep.subr.mxu0 0.0
      %5287 = vmatpush1.msra.mxu0 0.0
      %5288 = vmatprep.subr.mxu0 0.0
      %5289 = vmatpush1.msra.mxu0 0.0
      %5290 = vmatprep.subr.mxu0 0.0
      %5291 = vmatpush1.msra.mxu0 0.0
      %5292 = vmatprep.subr.mxu0 0.0
      %5293 = vmatpush1.msra.mxu0 0.0
      %5294 = vmatprep.subr.mxu0 0.0
      %5295 = vmatpush1.msra.mxu0 0.0
      %5296 = vmatprep.subr.mxu0 0.0
      %5297 = vmatpush1.msra.mxu0 %v2125
      %5298 = vmatprep.subr.mxu0 0.0
      %5299 = vmatpush1.msra.mxu0 %v1989
      %5300 = vmatprep.subr.mxu0 0.0
      %5301 = vmatpush2.msra.mxu0 0.0
      %5302 = vmatprep.subr.mxu0 0.0
      %5303 = vmatpush2.msra.mxu0 0.0
      %5304 = vmatprep.subr.mxu0 0.0
      %5305 = vmatpush2.msra.mxu0 0.0
      %5306 = vmatprep.subr.mxu0 0.0
      %5307 = vmatpush2.msra.mxu0 0.0
      %5308 = vmatprep.subr.mxu0 0.0
      %5309 = vmatpush2.msra.mxu0 0.0
      %5310 = vmatprep.subr.mxu0 0.0
      %5311 = vmatpush2.msra.mxu0 0.0
      %5312 = vmatprep.subr.mxu0 0.0
      %5313 = vmatpush2.msra.mxu0 0.0
      %5314 = vmatprep.subr.mxu0 0.0
      %5315 = vmatpush2.msra.mxu0 0.0
      %5316 = vmatprep.subr.mxu0 0.0
      %5317 = vmatpush2.msra.mxu0 0.0
      %5318 = vmatprep.subr.mxu0 0.0
      %5319 = vmatpush2.msra.mxu0 0.0
      %5320 = vmatprep.subr.mxu0 0.0
      %5321 = vmatpush2.msra.mxu0 0.0
      %5322 = vmatprep.subr.mxu0 0.0
      %5323 = vmatpush2.msra.mxu0 0.0
      %5324 = vmatprep.subr.mxu0 0.0
      %5325 = vmatpush2.msra.mxu0 0.0
      %5326 = vmatprep.subr.mxu0 0.0
      %5327 = vmatpush2.msra.mxu0 0.0
      %5328 = vmatprep.subr.mxu0 0.0
      %5329 = vmatpush2.msra.mxu0 0.0
      %5330 = vmatprep.subr.mxu0 0.0
      %5331 = vmatpush2.msra.mxu0 0.0
      %5332 = vmatprep.mubr.f32.mxu0 0.0
      %5333 = vmatmul.mubr.f32.gmra.mxu0 %v3119
      %v5334 = vpop.f32.mrf.mxu0
      %v5335 = vadd.f32 0.0, %v5334
      %v5336 = vpop.f32.mrf.mxu0
      %5337 = vdwg.mxu0
      %5338 = vmatprep.subr.mxu0 0.0
      %5339 = vmatpush1.msra.mxu0 0.0
      %5340 = vmatprep.subr.mxu0 0.0
      %5341 = vmatpush1.msra.mxu0 0.0
      %5342 = vmatprep.subr.mxu0 0.0
      %5343 = vmatpush1.msra.mxu0 0.0
      %5344 = vmatprep.subr.mxu0 0.0
      %5345 = vmatpush1.msra.mxu0 0.0
      %5346 = vmatprep.subr.mxu0 0.0
      %5347 = vmatpush1.msra.mxu0 0.0
      %5348 = vmatprep.subr.mxu0 0.0
      %5349 = vmatpush1.msra.mxu0 0.0
      %5350 = vmatprep.subr.mxu0 0.0
      %5351 = vmatpush1.msra.mxu0 0.0
      %5352 = vmatprep.subr.mxu0 0.0
      %5353 = vmatpush1.msra.mxu0 0.0
      %5354 = vmatprep.subr.mxu0 0.0
      %5355 = vmatpush1.msra.mxu0 0.0
      %5356 = vmatprep.subr.mxu0 0.0
      %5357 = vmatpush1.msra.mxu0 0.0
      %5358 = vmatprep.subr.mxu0 0.0
      %5359 = vmatpush1.msra.mxu0 0.0
      %5360 = vmatprep.subr.mxu0 0.0
      %5361 = vmatpush1.msra.mxu0 0.0
      %5362 = vmatprep.subr.mxu0 0.0
      %5363 = vmatpush1.msra.mxu0 0.0
      %5364 = vmatprep.subr.mxu0 0.0
      %5365 = vmatpush1.msra.mxu0 0.0
      %5366 = vmatprep.subr.mxu0 0.0
      %5367 = vmatpush1.msra.mxu0 %v2396
      %5368 = vmatprep.subr.mxu0 0.0
      %5369 = vmatpush1.msra.mxu0 %v2260
      %5370 = vmatprep.subr.mxu0 0.0
      %5371 = vmatpush2.msra.mxu0 0.0
      %5372 = vmatprep.subr.mxu0 0.0
      %5373 = vmatpush2.msra.mxu0 0.0
      %5374 = vmatprep.subr.mxu0 0.0
      %5375 = vmatpush2.msra.mxu0 0.0
      %5376 = vmatprep.subr.mxu0 0.0
      %5377 = vmatpush2.msra.mxu0 0.0
      %5378 = vmatprep.subr.mxu0 0.0
      %5379 = vmatpush2.msra.mxu0 0.0
      %5380 = vmatprep.subr.mxu0 0.0
      %5381 = vmatpush2.msra.mxu0 0.0
      %5382 = vmatprep.subr.mxu0 0.0
      %5383 = vmatpush2.msra.mxu0 0.0
      %5384 = vmatprep.subr.mxu0 0.0
      %5385 = vmatpush2.msra.mxu0 0.0
      %5386 = vmatprep.subr.mxu0 0.0
      %5387 = vmatpush2.msra.mxu0 0.0
      %5388 = vmatprep.subr.mxu0 0.0
      %5389 = vmatpush2.msra.mxu0 0.0
      %5390 = vmatprep.subr.mxu0 0.0
      %5391 = vmatpush2.msra.mxu0 0.0
      %5392 = vmatprep.subr.mxu0 0.0
      %5393 = vmatpush2.msra.mxu0 0.0
      %5394 = vmatprep.subr.mxu0 0.0
      %5395 = vmatpush2.msra.mxu0 0.0
      %5396 = vmatprep.subr.mxu0 0.0
      %5397 = vmatpush2.msra.mxu0 0.0
      %5398 = vmatprep.subr.mxu0 0.0
      %5399 = vmatpush2.msra.mxu0 0.0
      %5400 = vmatprep.subr.mxu0 0.0
      %5401 = vmatpush2.msra.mxu0 0.0
      %5402 = vmatprep.mubr.f32.mxu0 0.0
      %5403 = vmatmul.mubr.f32.gmra.mxu0 %v3192
      %v5404 = vpop.f32.mrf.mxu0
      %v5405 = vadd.f32 0.0, %v5404
      %v5406 = vpop.f32.mrf.mxu0
      %5407 = vdwg.mxu0
      %5408 = vmatprep.subr.mxu0 0.0
      %5409 = vmatpush1.msra.mxu0 0.0
      %5410 = vmatprep.subr.mxu0 0.0
      %5411 = vmatpush1.msra.mxu0 0.0
      %5412 = vmatprep.subr.mxu0 0.0
      %5413 = vmatpush1.msra.mxu0 0.0
      %5414 = vmatprep.subr.mxu0 0.0
      %5415 = vmatpush1.msra.mxu0 0.0
      %5416 = vmatprep.subr.mxu0 0.0
      %5417 = vmatpush1.msra.mxu0 0.0
      %5418 = vmatprep.subr.mxu0 0.0
      %5419 = vmatpush1.msra.mxu0 0.0
      %5420 = vmatprep.subr.mxu0 0.0
      %5421 = vmatpush1.msra.mxu0 0.0
      %5422 = vmatprep.subr.mxu0 0.0
      %5423 = vmatpush1.msra.mxu0 0.0
      %5424 = vmatprep.subr.mxu0 0.0
      %5425 = vmatpush1.msra.mxu0 0.0
      %5426 = vmatprep.subr.mxu0 0.0
      %5427 = vmatpush1.msra.mxu0 0.0
      %5428 = vmatprep.subr.mxu0 0.0
      %5429 = vmatpush1.msra.mxu0 0.0
      %5430 = vmatprep.subr.mxu0 0.0
      %5431 = vmatpush1.msra.mxu0 0.0
      %5432 = vmatprep.subr.mxu0 0.0
      %5433 = vmatpush1.msra.mxu0 0.0
      %5434 = vmatprep.subr.mxu0 0.0
      %5435 = vmatpush1.msra.mxu0 0.0
      %5436 = vmatprep.subr.mxu0 0.0
      %5437 = vmatpush1.msra.mxu0 %v2667
      %5438 = vmatprep.subr.mxu0 0.0
      %5439 = vmatpush1.msra.mxu0 %v2531
      %5440 = vmatprep.subr.mxu0 0.0
      %5441 = vmatpush2.msra.mxu0 0.0
      %5442 = vmatprep.subr.mxu0 0.0
      %5443 = vmatpush2.msra.mxu0 0.0
      %5444 = vmatprep.subr.mxu0 0.0
      %5445 = vmatpush2.msra.mxu0 0.0
      %5446 = vmatprep.subr.mxu0 0.0
      %5447 = vmatpush2.msra.mxu0 0.0
      %5448 = vmatprep.subr.mxu0 0.0
      %5449 = vmatpush2.msra.mxu0 0.0
      %5450 = vmatprep.subr.mxu0 0.0
      %5451 = vmatpush2.msra.mxu0 0.0
      %5452 = vmatprep.subr.mxu0 0.0
      %5453 = vmatpush2.msra.mxu0 0.0
      %5454 = vmatprep.subr.mxu0 0.0
      %5455 = vmatpush2.msra.mxu0 0.0
      %5456 = vmatprep.subr.mxu0 0.0
      %5457 = vmatpush2.msra.mxu0 0.0
      %5458 = vmatprep.subr.mxu0 0.0
      %5459 = vmatpush2.msra.mxu0 0.0
      %5460 = vmatprep.subr.mxu0 0.0
      %5461 = vmatpush2.msra.mxu0 0.0
      %5462 = vmatprep.subr.mxu0 0.0
      %5463 = vmatpush2.msra.mxu0 0.0
      %5464 = vmatprep.subr.mxu0 0.0
      %5465 = vmatpush2.msra.mxu0 0.0
      %5466 = vmatprep.subr.mxu0 0.0
      %5467 = vmatpush2.msra.mxu0 0.0
      %5468 = vmatprep.subr.mxu0 0.0
      %5469 = vmatpush2.msra.mxu0 0.0
      %5470 = vmatprep.subr.mxu0 0.0
      %5471 = vmatpush2.msra.mxu0 0.0
      %5472 = vmatprep.mubr.f32.mxu0 0.0
      %5473 = vmatmul.mubr.f32.gmra.mxu0 %v3265
      %v5474 = vpop.f32.mrf.mxu0
      %v5475 = vadd.f32 0.0, %v5474
      %v5476 = vpop.f32.mrf.mxu0
      %5477 = vdwg.mxu0
      %5478 = vmatprep.subr.mxu0 0.0
      %5479 = vmatpush1.msra.mxu0 0.0
      %5480 = vmatprep.subr.mxu0 0.0
      %5481 = vmatpush1.msra.mxu0 0.0
      %5482 = vmatprep.subr.mxu0 0.0
      %5483 = vmatpush1.msra.mxu0 0.0
      %5484 = vmatprep.subr.mxu0 0.0
      %5485 = vmatpush1.msra.mxu0 0.0
      %5486 = vmatprep.subr.mxu0 0.0
      %5487 = vmatpush1.msra.mxu0 0.0
      %5488 = vmatprep.subr.mxu0 0.0
      %5489 = vmatpush1.msra.mxu0 0.0
      %5490 = vmatprep.subr.mxu0 0.0
      %5491 = vmatpush1.msra.mxu0 0.0
      %5492 = vmatprep.subr.mxu0 0.0
      %5493 = vmatpush1.msra.mxu0 0.0
      %5494 = vmatprep.subr.mxu0 0.0
      %5495 = vmatpush1.msra.mxu0 0.0
      %5496 = vmatprep.subr.mxu0 0.0
      %5497 = vmatpush1.msra.mxu0 0.0
      %5498 = vmatprep.subr.mxu0 0.0
      %5499 = vmatpush1.msra.mxu0 0.0
      %5500 = vmatprep.subr.mxu0 0.0
      %5501 = vmatpush1.msra.mxu0 0.0
      %5502 = vmatprep.subr.mxu0 0.0
      %5503 = vmatpush1.msra.mxu0 0.0
      %5504 = vmatprep.subr.mxu0 0.0
      %5505 = vmatpush1.msra.mxu0 0.0
      %5506 = vmatprep.subr.mxu0 0.0
      %5507 = vmatpush1.msra.mxu0 %v2938
      %5508 = vmatprep.subr.mxu0 0.0
      %5509 = vmatpush1.msra.mxu0 %v2802
      %5510 = vmatprep.subr.mxu0 0.0
      %5511 = vmatpush2.msra.mxu0 0.0
      %5512 = vmatprep.subr.mxu0 0.0
      %5513 = vmatpush2.msra.mxu0 0.0
      %5514 = vmatprep.subr.mxu0 0.0
      %5515 = vmatpush2.msra.mxu0 0.0
      %5516 = vmatprep.subr.mxu0 0.0
      %5517 = vmatpush2.msra.mxu0 0.0
      %5518 = vmatprep.subr.mxu0 0.0
      %5519 = vmatpush2.msra.mxu0 0.0
      %5520 = vmatprep.subr.mxu0 0.0
      %5521 = vmatpush2.msra.mxu0 0.0
      %5522 = vmatprep.subr.mxu0 0.0
      %5523 = vmatpush2.msra.mxu0 0.0
      %5524 = vmatprep.subr.mxu0 0.0
      %5525 = vmatpush2.msra.mxu0 0.0
      %5526 = vmatprep.subr.mxu0 0.0
      %5527 = vmatpush2.msra.mxu0 0.0
      %5528 = vmatprep.subr.mxu0 0.0
      %5529 = vmatpush2.msra.mxu0 0.0
      %5530 = vmatprep.subr.mxu0 0.0
      %5531 = vmatpush2.msra.mxu0 0.0
      %5532 = vmatprep.subr.mxu0 0.0
      %5533 = vmatpush2.msra.mxu0 0.0
      %5534 = vmatprep.subr.mxu0 0.0
      %5535 = vmatpush2.msra.mxu0 0.0
      %5536 = vmatprep.subr.mxu0 0.0
      %5537 = vmatpush2.msra.mxu0 0.0
      %5538 = vmatprep.subr.mxu0 0.0
      %5539 = vmatpush2.msra.mxu0 0.0
      %5540 = vmatprep.subr.mxu0 0.0
      %5541 = vmatpush2.msra.mxu0 0.0
      %5542 = vmatprep.mubr.f32.mxu0 0.0
      %5543 = vmatmul.mubr.f32.gmra.mxu0 %v3338
      %v5544 = vpop.f32.mrf.mxu0
      %v5545 = vadd.f32 0.0, %v5544
      %v5546 = vpop.f32.mrf.mxu0
      %5547 = vdwg.mxu0
      %5548 = vmatprep.subr.mxu0 0.0
      %5549 = vmatpush1.msra.mxu0 0.0
      %5550 = vmatprep.subr.mxu0 0.0
      %5551 = vmatpush1.msra.mxu0 0.0
      %5552 = vmatprep.subr.mxu0 0.0
      %5553 = vmatpush1.msra.mxu0 0.0
      %5554 = vmatprep.subr.mxu0 0.0
      %5555 = vmatpush1.msra.mxu0 0.0
      %5556 = vmatprep.subr.mxu0 0.0
      %5557 = vmatpush1.msra.mxu0 0.0
      %5558 = vmatprep.subr.mxu0 0.0
      %5559 = vmatpush1.msra.mxu0 0.0
      %5560 = vmatprep.subr.mxu0 0.0
      %5561 = vmatpush1.msra.mxu0 0.0
      %5562 = vmatprep.subr.mxu0 0.0
      %5563 = vmatpush1.msra.mxu0 0.0
      %5564 = vmatprep.subr.mxu0 0.0
      %5565 = vmatpush1.msra.mxu0 0.0
      %5566 = vmatprep.subr.mxu0 0.0
      %5567 = vmatpush1.msra.mxu0 0.0
      %5568 = vmatprep.subr.mxu0 0.0
      %5569 = vmatpush1.msra.mxu0 0.0
      %5570 = vmatprep.subr.mxu0 0.0
      %5571 = vmatpush1.msra.mxu0 0.0
      %5572 = vmatprep.subr.mxu0 0.0
      %5573 = vmatpush1.msra.mxu0 0.0
      %5574 = vmatprep.subr.mxu0 0.0
      %5575 = vmatpush1.msra.mxu0 0.0
      %5576 = vmatprep.subr.mxu0 0.0
      %5577 = vmatpush1.msra.mxu0 %v3043
      %5578 = vmatprep.subr.mxu0 0.0
      %5579 = vmatpush1.msra.mxu0 %v2993
      %5580 = vmatprep.subr.mxu0 0.0
      %5581 = vmatpush2.msra.mxu0 0.0
      %5582 = vmatprep.subr.mxu0 0.0
      %5583 = vmatpush2.msra.mxu0 0.0
      %5584 = vmatprep.subr.mxu0 0.0
      %5585 = vmatpush2.msra.mxu0 0.0
      %5586 = vmatprep.subr.mxu0 0.0
      %5587 = vmatpush2.msra.mxu0 0.0
      %5588 = vmatprep.subr.mxu0 0.0
      %5589 = vmatpush2.msra.mxu0 0.0
      %5590 = vmatprep.subr.mxu0 0.0
      %5591 = vmatpush2.msra.mxu0 0.0
      %5592 = vmatprep.subr.mxu0 0.0
      %5593 = vmatpush2.msra.mxu0 0.0
      %5594 = vmatprep.subr.mxu0 0.0
      %5595 = vmatpush2.msra.mxu0 0.0
      %5596 = vmatprep.subr.mxu0 0.0
      %5597 = vmatpush2.msra.mxu0 0.0
      %5598 = vmatprep.subr.mxu0 0.0
      %5599 = vmatpush2.msra.mxu0 0.0
      %5600 = vmatprep.subr.mxu0 0.0
      %5601 = vmatpush2.msra.mxu0 0.0
      %5602 = vmatprep.subr.mxu0 0.0
      %5603 = vmatpush2.msra.mxu0 0.0
      %5604 = vmatprep.subr.mxu0 0.0
      %5605 = vmatpush2.msra.mxu0 0.0
      %5606 = vmatprep.subr.mxu0 0.0
      %5607 = vmatpush2.msra.mxu0 0.0
      %5608 = vmatprep.subr.mxu0 0.0
      %5609 = vmatpush2.msra.mxu0 0.0
      %5610 = vmatprep.subr.mxu0 0.0
      %5611 = vmatpush2.msra.mxu0 0.0
      %5612 = vmatprep.mubr.f32.mxu0 0.0
      %5613 = vmatmul.mubr.f32.gmra.mxu0 %v3411
      %v5614 = vpop.f32.mrf.mxu0
      %v5615 = vadd.f32 0.0, %v5614
      %v5616 = vpop.f32.mrf.mxu0
      %5617 = vdwg.mxu0
      %s5618 = scalar_lea.vmem %s224, 40
      %5619 = vst.msk [vmem:[%s5618] sm:$0x7f] %vm3483, %v5265
      %5620 = vst.msk [vmem:[%s5618 + $0x38] sm:$0x7f] %vm3483, %v5335
      %5621 = vst.msk [vmem:[%s5618 + $0x70] sm:$0x7f] %vm3483, %v5405
      %5622 = vst.msk [vmem:[%s5618 + $0xa8] sm:$0x7f] %vm3483, %v5475
      %5623 = vst.msk [vmem:[%s5618 + $0xe0] sm:$0x7f] %vm3483, %v5545
      %5624 = vst.msk [vmem:[%s5618 + $0x118] sm:$0x7f] %vm3483, %v5615
      %5625 = vmatprep.subr.mxu0 0.0
      %5626 = vmatpush1.msra.mxu0 0.0
      %5627 = vmatprep.subr.mxu0 0.0
      %5628 = vmatpush1.msra.mxu0 0.0
      %5629 = vmatprep.subr.mxu0 0.0
      %5630 = vmatpush1.msra.mxu0 0.0
      %5631 = vmatprep.subr.mxu0 0.0
      %5632 = vmatpush1.msra.mxu0 0.0
      %5633 = vmatprep.subr.mxu0 0.0
      %5634 = vmatpush1.msra.mxu0 0.0
      %5635 = vmatprep.subr.mxu0 0.0
      %5636 = vmatpush1.msra.mxu0 0.0
      %5637 = vmatprep.subr.mxu0 0.0
      %5638 = vmatpush1.msra.mxu0 0.0
      %5639 = vmatprep.subr.mxu0 0.0
      %5640 = vmatpush1.msra.mxu0 0.0
      %5641 = vmatprep.subr.mxu0 0.0
      %5642 = vmatpush1.msra.mxu0 0.0
      %5643 = vmatprep.subr.mxu0 0.0
      %5644 = vmatpush1.msra.mxu0 0.0
      %5645 = vmatprep.subr.mxu0 0.0
      %5646 = vmatpush1.msra.mxu0 0.0
      %5647 = vmatprep.subr.mxu0 0.0
      %5648 = vmatpush1.msra.mxu0 0.0
      %5649 = vmatprep.subr.mxu0 0.0
      %5650 = vmatpush1.msra.mxu0 0.0
      %5651 = vmatprep.subr.mxu0 0.0
      %5652 = vmatpush1.msra.mxu0 0.0
      %5653 = vmatprep.subr.mxu0 0.0
      %5654 = vmatpush1.msra.mxu0 %v1855
      %5655 = vmatprep.subr.mxu0 0.0
      %5656 = vmatpush1.msra.mxu0 %v1719
      %5657 = vmatprep.subr.mxu0 0.0
      %5658 = vmatpush2.msra.mxu0 0.0
      %5659 = vmatprep.subr.mxu0 0.0
      %5660 = vmatpush2.msra.mxu0 0.0
      %5661 = vmatprep.subr.mxu0 0.0
      %5662 = vmatpush2.msra.mxu0 0.0
      %5663 = vmatprep.subr.mxu0 0.0
      %5664 = vmatpush2.msra.mxu0 0.0
      %5665 = vmatprep.subr.mxu0 0.0
      %5666 = vmatpush2.msra.mxu0 0.0
      %5667 = vmatprep.subr.mxu0 0.0
      %5668 = vmatpush2.msra.mxu0 0.0
      %5669 = vmatprep.subr.mxu0 0.0
      %5670 = vmatpush2.msra.mxu0 0.0
      %5671 = vmatprep.subr.mxu0 0.0
      %5672 = vmatpush2.msra.mxu0 0.0
      %5673 = vmatprep.subr.mxu0 0.0
      %5674 = vmatpush2.msra.mxu0 0.0
      %5675 = vmatprep.subr.mxu0 0.0
      %5676 = vmatpush2.msra.mxu0 0.0
      %5677 = vmatprep.subr.mxu0 0.0
      %5678 = vmatpush2.msra.mxu0 0.0
      %5679 = vmatprep.subr.mxu0 0.0
      %5680 = vmatpush2.msra.mxu0 0.0
      %5681 = vmatprep.subr.mxu0 0.0
      %5682 = vmatpush2.msra.mxu0 0.0
      %5683 = vmatprep.subr.mxu0 0.0
      %5684 = vmatpush2.msra.mxu0 0.0
      %5685 = vmatprep.subr.mxu0 0.0
      %5686 = vmatpush2.msra.mxu0 0.0
      %5687 = vmatprep.subr.mxu0 0.0
      %5688 = vmatpush2.msra.mxu0 0.0
      %5689 = vmatprep.mubr.f32.mxu0 0.0
      %5690 = vmatmul.mubr.f32.gmra.mxu0 %v3046
      %v5691 = vpop.f32.mrf.mxu0
      %v5692 = vadd.f32 0.0, %v5691
      %v5693 = vpop.f32.mrf.mxu0
      %5694 = vdwg.mxu0
      %5695 = vmatprep.subr.mxu0 0.0
      %5696 = vmatpush1.msra.mxu0 0.0
      %5697 = vmatprep.subr.mxu0 0.0
      %5698 = vmatpush1.msra.mxu0 0.0
      %5699 = vmatprep.subr.mxu0 0.0
      %5700 = vmatpush1.msra.mxu0 0.0
      %5701 = vmatprep.subr.mxu0 0.0
      %5702 = vmatpush1.msra.mxu0 0.0
      %5703 = vmatprep.subr.mxu0 0.0
      %5704 = vmatpush1.msra.mxu0 0.0
      %5705 = vmatprep.subr.mxu0 0.0
      %5706 = vmatpush1.msra.mxu0 0.0
      %5707 = vmatprep.subr.mxu0 0.0
      %5708 = vmatpush1.msra.mxu0 0.0
      %5709 = vmatprep.subr.mxu0 0.0
      %5710 = vmatpush1.msra.mxu0 0.0
      %5711 = vmatprep.subr.mxu0 0.0
      %5712 = vmatpush1.msra.mxu0 0.0
      %5713 = vmatprep.subr.mxu0 0.0
      %5714 = vmatpush1.msra.mxu0 0.0
      %5715 = vmatprep.subr.mxu0 0.0
      %5716 = vmatpush1.msra.mxu0 0.0
      %5717 = vmatprep.subr.mxu0 0.0
      %5718 = vmatpush1.msra.mxu0 0.0
      %5719 = vmatprep.subr.mxu0 0.0
      %5720 = vmatpush1.msra.mxu0 0.0
      %5721 = vmatprep.subr.mxu0 0.0
      %5722 = vmatpush1.msra.mxu0 0.0
      %5723 = vmatprep.subr.mxu0 0.0
      %5724 = vmatpush1.msra.mxu0 %v2126
      %5725 = vmatprep.subr.mxu0 0.0
      %5726 = vmatpush1.msra.mxu0 %v1990
      %5727 = vmatprep.subr.mxu0 0.0
      %5728 = vmatpush2.msra.mxu0 0.0
      %5729 = vmatprep.subr.mxu0 0.0
      %5730 = vmatpush2.msra.mxu0 0.0
      %5731 = vmatprep.subr.mxu0 0.0
      %5732 = vmatpush2.msra.mxu0 0.0
      %5733 = vmatprep.subr.mxu0 0.0
      %5734 = vmatpush2.msra.mxu0 0.0
      %5735 = vmatprep.subr.mxu0 0.0
      %5736 = vmatpush2.msra.mxu0 0.0
      %5737 = vmatprep.subr.mxu0 0.0
      %5738 = vmatpush2.msra.mxu0 0.0
      %5739 = vmatprep.subr.mxu0 0.0
      %5740 = vmatpush2.msra.mxu0 0.0
      %5741 = vmatprep.subr.mxu0 0.0
      %5742 = vmatpush2.msra.mxu0 0.0
      %5743 = vmatprep.subr.mxu0 0.0
      %5744 = vmatpush2.msra.mxu0 0.0
      %5745 = vmatprep.subr.mxu0 0.0
      %5746 = vmatpush2.msra.mxu0 0.0
      %5747 = vmatprep.subr.mxu0 0.0
      %5748 = vmatpush2.msra.mxu0 0.0
      %5749 = vmatprep.subr.mxu0 0.0
      %5750 = vmatpush2.msra.mxu0 0.0
      %5751 = vmatprep.subr.mxu0 0.0
      %5752 = vmatpush2.msra.mxu0 0.0
      %5753 = vmatprep.subr.mxu0 0.0
      %5754 = vmatpush2.msra.mxu0 0.0
      %5755 = vmatprep.subr.mxu0 0.0
      %5756 = vmatpush2.msra.mxu0 0.0
      %5757 = vmatprep.subr.mxu0 0.0
      %5758 = vmatpush2.msra.mxu0 0.0
      %5759 = vmatprep.mubr.f32.mxu0 0.0
      %5760 = vmatmul.mubr.f32.gmra.mxu0 %v3119
      %v5761 = vpop.f32.mrf.mxu0
      %v5762 = vadd.f32 0.0, %v5761
      %v5763 = vpop.f32.mrf.mxu0
      %5764 = vdwg.mxu0
      %5765 = vmatprep.subr.mxu0 0.0
      %5766 = vmatpush1.msra.mxu0 0.0
      %5767 = vmatprep.subr.mxu0 0.0
      %5768 = vmatpush1.msra.mxu0 0.0
      %5769 = vmatprep.subr.mxu0 0.0
      %5770 = vmatpush1.msra.mxu0 0.0
      %5771 = vmatprep.subr.mxu0 0.0
      %5772 = vmatpush1.msra.mxu0 0.0
      %5773 = vmatprep.subr.mxu0 0.0
      %5774 = vmatpush1.msra.mxu0 0.0
      %5775 = vmatprep.subr.mxu0 0.0
      %5776 = vmatpush1.msra.mxu0 0.0
      %5777 = vmatprep.subr.mxu0 0.0
      %5778 = vmatpush1.msra.mxu0 0.0
      %5779 = vmatprep.subr.mxu0 0.0
      %5780 = vmatpush1.msra.mxu0 0.0
      %5781 = vmatprep.subr.mxu0 0.0
      %5782 = vmatpush1.msra.mxu0 0.0
      %5783 = vmatprep.subr.mxu0 0.0
      %5784 = vmatpush1.msra.mxu0 0.0
      %5785 = vmatprep.subr.mxu0 0.0
      %5786 = vmatpush1.msra.mxu0 0.0
      %5787 = vmatprep.subr.mxu0 0.0
      %5788 = vmatpush1.msra.mxu0 0.0
      %5789 = vmatprep.subr.mxu0 0.0
      %5790 = vmatpush1.msra.mxu0 0.0
      %5791 = vmatprep.subr.mxu0 0.0
      %5792 = vmatpush1.msra.mxu0 0.0
      %5793 = vmatprep.subr.mxu0 0.0
      %5794 = vmatpush1.msra.mxu0 %v2397
      %5795 = vmatprep.subr.mxu0 0.0
      %5796 = vmatpush1.msra.mxu0 %v2261
      %5797 = vmatprep.subr.mxu0 0.0
      %5798 = vmatpush2.msra.mxu0 0.0
      %5799 = vmatprep.subr.mxu0 0.0
      %5800 = vmatpush2.msra.mxu0 0.0
      %5801 = vmatprep.subr.mxu0 0.0
      %5802 = vmatpush2.msra.mxu0 0.0
      %5803 = vmatprep.subr.mxu0 0.0
      %5804 = vmatpush2.msra.mxu0 0.0
      %5805 = vmatprep.subr.mxu0 0.0
      %5806 = vmatpush2.msra.mxu0 0.0
      %5807 = vmatprep.subr.mxu0 0.0
      %5808 = vmatpush2.msra.mxu0 0.0
      %5809 = vmatprep.subr.mxu0 0.0
      %5810 = vmatpush2.msra.mxu0 0.0
      %5811 = vmatprep.subr.mxu0 0.0
      %5812 = vmatpush2.msra.mxu0 0.0
      %5813 = vmatprep.subr.mxu0 0.0
      %5814 = vmatpush2.msra.mxu0 0.0
      %5815 = vmatprep.subr.mxu0 0.0
      %5816 = vmatpush2.msra.mxu0 0.0
      %5817 = vmatprep.subr.mxu0 0.0
      %5818 = vmatpush2.msra.mxu0 0.0
      %5819 = vmatprep.subr.mxu0 0.0
      %5820 = vmatpush2.msra.mxu0 0.0
      %5821 = vmatprep.subr.mxu0 0.0
      %5822 = vmatpush2.msra.mxu0 0.0
      %5823 = vmatprep.subr.mxu0 0.0
      %5824 = vmatpush2.msra.mxu0 0.0
      %5825 = vmatprep.subr.mxu0 0.0
      %5826 = vmatpush2.msra.mxu0 0.0
      %5827 = vmatprep.subr.mxu0 0.0
      %5828 = vmatpush2.msra.mxu0 0.0
      %5829 = vmatprep.mubr.f32.mxu0 0.0
      %5830 = vmatmul.mubr.f32.gmra.mxu0 %v3192
      %v5831 = vpop.f32.mrf.mxu0
      %v5832 = vadd.f32 0.0, %v5831
      %v5833 = vpop.f32.mrf.mxu0
      %5834 = vdwg.mxu0
      %5835 = vmatprep.subr.mxu0 0.0
      %5836 = vmatpush1.msra.mxu0 0.0
      %5837 = vmatprep.subr.mxu0 0.0
      %5838 = vmatpush1.msra.mxu0 0.0
      %5839 = vmatprep.subr.mxu0 0.0
      %5840 = vmatpush1.msra.mxu0 0.0
      %5841 = vmatprep.subr.mxu0 0.0
      %5842 = vmatpush1.msra.mxu0 0.0
      %5843 = vmatprep.subr.mxu0 0.0
      %5844 = vmatpush1.msra.mxu0 0.0
      %5845 = vmatprep.subr.mxu0 0.0
      %5846 = vmatpush1.msra.mxu0 0.0
      %5847 = vmatprep.subr.mxu0 0.0
      %5848 = vmatpush1.msra.mxu0 0.0
      %5849 = vmatprep.subr.mxu0 0.0
      %5850 = vmatpush1.msra.mxu0 0.0
      %5851 = vmatprep.subr.mxu0 0.0
      %5852 = vmatpush1.msra.mxu0 0.0
      %5853 = vmatprep.subr.mxu0 0.0
      %5854 = vmatpush1.msra.mxu0 0.0
      %5855 = vmatprep.subr.mxu0 0.0
      %5856 = vmatpush1.msra.mxu0 0.0
      %5857 = vmatprep.subr.mxu0 0.0
      %5858 = vmatpush1.msra.mxu0 0.0
      %5859 = vmatprep.subr.mxu0 0.0
      %5860 = vmatpush1.msra.mxu0 0.0
      %5861 = vmatprep.subr.mxu0 0.0
      %5862 = vmatpush1.msra.mxu0 0.0
      %5863 = vmatprep.subr.mxu0 0.0
      %5864 = vmatpush1.msra.mxu0 %v2668
      %5865 = vmatprep.subr.mxu0 0.0
      %5866 = vmatpush1.msra.mxu0 %v2532
      %5867 = vmatprep.subr.mxu0 0.0
      %5868 = vmatpush2.msra.mxu0 0.0
      %5869 = vmatprep.subr.mxu0 0.0
      %5870 = vmatpush2.msra.mxu0 0.0
      %5871 = vmatprep.subr.mxu0 0.0
      %5872 = vmatpush2.msra.mxu0 0.0
      %5873 = vmatprep.subr.mxu0 0.0
      %5874 = vmatpush2.msra.mxu0 0.0
      %5875 = vmatprep.subr.mxu0 0.0
      %5876 = vmatpush2.msra.mxu0 0.0
      %5877 = vmatprep.subr.mxu0 0.0
      %5878 = vmatpush2.msra.mxu0 0.0
      %5879 = vmatprep.subr.mxu0 0.0
      %5880 = vmatpush2.msra.mxu0 0.0
      %5881 = vmatprep.subr.mxu0 0.0
      %5882 = vmatpush2.msra.mxu0 0.0
      %5883 = vmatprep.subr.mxu0 0.0
      %5884 = vmatpush2.msra.mxu0 0.0
      %5885 = vmatprep.subr.mxu0 0.0
      %5886 = vmatpush2.msra.mxu0 0.0
      %5887 = vmatprep.subr.mxu0 0.0
      %5888 = vmatpush2.msra.mxu0 0.0
      %5889 = vmatprep.subr.mxu0 0.0
      %5890 = vmatpush2.msra.mxu0 0.0
      %5891 = vmatprep.subr.mxu0 0.0
      %5892 = vmatpush2.msra.mxu0 0.0
      %5893 = vmatprep.subr.mxu0 0.0
      %5894 = vmatpush2.msra.mxu0 0.0
      %5895 = vmatprep.subr.mxu0 0.0
      %5896 = vmatpush2.msra.mxu0 0.0
      %5897 = vmatprep.subr.mxu0 0.0
      %5898 = vmatpush2.msra.mxu0 0.0
      %5899 = vmatprep.mubr.f32.mxu0 0.0
      %5900 = vmatmul.mubr.f32.gmra.mxu0 %v3265
      %v5901 = vpop.f32.mrf.mxu0
      %v5902 = vadd.f32 0.0, %v5901
      %v5903 = vpop.f32.mrf.mxu0
      %5904 = vdwg.mxu0
      %5905 = vmatprep.subr.mxu0 0.0
      %5906 = vmatpush1.msra.mxu0 0.0
      %5907 = vmatprep.subr.mxu0 0.0
      %5908 = vmatpush1.msra.mxu0 0.0
      %5909 = vmatprep.subr.mxu0 0.0
      %5910 = vmatpush1.msra.mxu0 0.0
      %5911 = vmatprep.subr.mxu0 0.0
      %5912 = vmatpush1.msra.mxu0 0.0
      %5913 = vmatprep.subr.mxu0 0.0
      %5914 = vmatpush1.msra.mxu0 0.0
      %5915 = vmatprep.subr.mxu0 0.0
      %5916 = vmatpush1.msra.mxu0 0.0
      %5917 = vmatprep.subr.mxu0 0.0
      %5918 = vmatpush1.msra.mxu0 0.0
      %5919 = vmatprep.subr.mxu0 0.0
      %5920 = vmatpush1.msra.mxu0 0.0
      %5921 = vmatprep.subr.mxu0 0.0
      %5922 = vmatpush1.msra.mxu0 0.0
      %5923 = vmatprep.subr.mxu0 0.0
      %5924 = vmatpush1.msra.mxu0 0.0
      %5925 = vmatprep.subr.mxu0 0.0
      %5926 = vmatpush1.msra.mxu0 0.0
      %5927 = vmatprep.subr.mxu0 0.0
      %5928 = vmatpush1.msra.mxu0 0.0
      %5929 = vmatprep.subr.mxu0 0.0
      %5930 = vmatpush1.msra.mxu0 0.0
      %5931 = vmatprep.subr.mxu0 0.0
      %5932 = vmatpush1.msra.mxu0 0.0
      %5933 = vmatprep.subr.mxu0 0.0
      %5934 = vmatpush1.msra.mxu0 %v2939
      %5935 = vmatprep.subr.mxu0 0.0
      %5936 = vmatpush1.msra.mxu0 %v2803
      %5937 = vmatprep.subr.mxu0 0.0
      %5938 = vmatpush2.msra.mxu0 0.0
      %5939 = vmatprep.subr.mxu0 0.0
      %5940 = vmatpush2.msra.mxu0 0.0
      %5941 = vmatprep.subr.mxu0 0.0
      %5942 = vmatpush2.msra.mxu0 0.0
      %5943 = vmatprep.subr.mxu0 0.0
      %5944 = vmatpush2.msra.mxu0 0.0
      %5945 = vmatprep.subr.mxu0 0.0
      %5946 = vmatpush2.msra.mxu0 0.0
      %5947 = vmatprep.subr.mxu0 0.0
      %5948 = vmatpush2.msra.mxu0 0.0
      %5949 = vmatprep.subr.mxu0 0.0
      %5950 = vmatpush2.msra.mxu0 0.0
      %5951 = vmatprep.subr.mxu0 0.0
      %5952 = vmatpush2.msra.mxu0 0.0
      %5953 = vmatprep.subr.mxu0 0.0
      %5954 = vmatpush2.msra.mxu0 0.0
      %5955 = vmatprep.subr.mxu0 0.0
      %5956 = vmatpush2.msra.mxu0 0.0
      %5957 = vmatprep.subr.mxu0 0.0
      %5958 = vmatpush2.msra.mxu0 0.0
      %5959 = vmatprep.subr.mxu0 0.0
      %5960 = vmatpush2.msra.mxu0 0.0
      %5961 = vmatprep.subr.mxu0 0.0
      %5962 = vmatpush2.msra.mxu0 0.0
      %5963 = vmatprep.subr.mxu0 0.0
      %5964 = vmatpush2.msra.mxu0 0.0
      %5965 = vmatprep.subr.mxu0 0.0
      %5966 = vmatpush2.msra.mxu0 0.0
      %5967 = vmatprep.subr.mxu0 0.0
      %5968 = vmatpush2.msra.mxu0 0.0
      %5969 = vmatprep.mubr.f32.mxu0 0.0
      %5970 = vmatmul.mubr.f32.gmra.mxu0 %v3338
      %v5971 = vpop.f32.mrf.mxu0
      %v5972 = vadd.f32 0.0, %v5971
      %v5973 = vpop.f32.mrf.mxu0
      %5974 = vdwg.mxu0
      %5975 = vmatprep.subr.mxu0 0.0
      %5976 = vmatpush1.msra.mxu0 0.0
      %5977 = vmatprep.subr.mxu0 0.0
      %5978 = vmatpush1.msra.mxu0 0.0
      %5979 = vmatprep.subr.mxu0 0.0
      %5980 = vmatpush1.msra.mxu0 0.0
      %5981 = vmatprep.subr.mxu0 0.0
      %5982 = vmatpush1.msra.mxu0 0.0
      %5983 = vmatprep.subr.mxu0 0.0
      %5984 = vmatpush1.msra.mxu0 0.0
      %5985 = vmatprep.subr.mxu0 0.0
      %5986 = vmatpush1.msra.mxu0 0.0
      %5987 = vmatprep.subr.mxu0 0.0
      %5988 = vmatpush1.msra.mxu0 0.0
      %5989 = vmatprep.subr.mxu0 0.0
      %5990 = vmatpush1.msra.mxu0 0.0
      %5991 = vmatprep.subr.mxu0 0.0
      %5992 = vmatpush1.msra.mxu0 0.0
      %5993 = vmatprep.subr.mxu0 0.0
      %5994 = vmatpush1.msra.mxu0 0.0
      %5995 = vmatprep.subr.mxu0 0.0
      %5996 = vmatpush1.msra.mxu0 0.0
      %5997 = vmatprep.subr.mxu0 0.0
      %5998 = vmatpush1.msra.mxu0 0.0
      %5999 = vmatprep.subr.mxu0 0.0
      %6000 = vmatpush1.msra.mxu0 0.0
      %6001 = vmatprep.subr.mxu0 0.0
      %6002 = vmatpush1.msra.mxu0 0.0
      %6003 = vmatprep.subr.mxu0 0.0
      %6004 = vmatpush1.msra.mxu0 %v3044
      %6005 = vmatprep.subr.mxu0 0.0
      %6006 = vmatpush1.msra.mxu0 %v2994
      %6007 = vmatprep.subr.mxu0 0.0
      %6008 = vmatpush2.msra.mxu0 0.0
      %6009 = vmatprep.subr.mxu0 0.0
      %6010 = vmatpush2.msra.mxu0 0.0
      %6011 = vmatprep.subr.mxu0 0.0
      %6012 = vmatpush2.msra.mxu0 0.0
      %6013 = vmatprep.subr.mxu0 0.0
      %6014 = vmatpush2.msra.mxu0 0.0
      %6015 = vmatprep.subr.mxu0 0.0
      %6016 = vmatpush2.msra.mxu0 0.0
      %6017 = vmatprep.subr.mxu0 0.0
      %6018 = vmatpush2.msra.mxu0 0.0
      %6019 = vmatprep.subr.mxu0 0.0
      %6020 = vmatpush2.msra.mxu0 0.0
      %6021 = vmatprep.subr.mxu0 0.0
      %6022 = vmatpush2.msra.mxu0 0.0
      %6023 = vmatprep.subr.mxu0 0.0
      %6024 = vmatpush2.msra.mxu0 0.0
      %6025 = vmatprep.subr.mxu0 0.0
      %6026 = vmatpush2.msra.mxu0 0.0
      %6027 = vmatprep.subr.mxu0 0.0
      %6028 = vmatpush2.msra.mxu0 0.0
      %6029 = vmatprep.subr.mxu0 0.0
      %6030 = vmatpush2.msra.mxu0 0.0
      %6031 = vmatprep.subr.mxu0 0.0
      %6032 = vmatpush2.msra.mxu0 0.0
      %6033 = vmatprep.subr.mxu0 0.0
      %6034 = vmatpush2.msra.mxu0 0.0
      %6035 = vmatprep.subr.mxu0 0.0
      %6036 = vmatpush2.msra.mxu0 0.0
      %6037 = vmatprep.subr.mxu0 0.0
      %6038 = vmatpush2.msra.mxu0 0.0
      %6039 = vmatprep.mubr.f32.mxu0 0.0
      %6040 = vmatmul.mubr.f32.gmra.mxu0 %v3411
      %v6041 = vpop.f32.mrf.mxu0
      %v6042 = vadd.f32 0.0, %v6041
      %v6043 = vpop.f32.mrf.mxu0
      %6044 = vdwg.mxu0
      %s6045 = scalar_lea.vmem %s224, 48
      %6046 = vst.msk [vmem:[%s6045] sm:$0x7f] %vm3483, %v5692
      %6047 = vst.msk [vmem:[%s6045 + $0x38] sm:$0x7f] %vm3483, %v5762
      %6048 = vst.msk [vmem:[%s6045 + $0x70] sm:$0x7f] %vm3483, %v5832
      %6049 = vst.msk [vmem:[%s6045 + $0xa8] sm:$0x7f] %vm3483, %v5902
      %6050 = vst.msk [vmem:[%s6045 + $0xe0] sm:$0x7f] %vm3483, %v5972
      %6051 = vst.msk [vmem:[%s6045 + $0x118] sm:$0x7f] %vm3483, %v6042
      %p6052 = scmp.lt.s32.totalorder %s21, 2
      %s6053 = scalar_select %p6052, %s21, 2
      %s6054 = smul.addr %s6053, 42
      %s6055 = smul.addr %s6054, 8
      %s6056 = scalar_lea.vmem %s4, %s6055
      // Predicated region
      $region33: #{tpu_custom_call.1} parent=31 // pred_check
        %p6057 = pneg %p119
      $region34: #{tpu_custom_call.1} parent=31 // pred_check_branch
        %6059 = sbr.rel (%p6057) target = $region36
      $region35: #{tpu_custom_call.1} parent=31 // pred_region
        _
      $region36: #{tpu_custom_call.1} parent=31 // pred_fallthru
        _
    $region32: #{tpu_custom_call.1} parent=5 // pred_fallthru
      _
    %p6060 = scmp.le.s32.totalorder 2, %s16
    // Predicated region
    $region37: #{tpu_custom_call.1} parent=5 // pred_check
      %p6061 = pneg %p6060
    $region38: #{tpu_custom_call.1} parent=5 // pred_check_branch
      %6063 = sbr.rel (%p6061) target = $region40
    $region39: #{tpu_custom_call.1} parent=5 // pred_region
      %s6064 = ssub.s32 %s16, 2
      // Predicated region
      $region41: #{tpu_custom_call.1} parent=39 // pred_check
        %p6065 = pneg %p125
      $region42: #{tpu_custom_call.1} parent=39 // pred_check_branch
        %6067 = sbr.rel (%p6065) target = $region44
      $region43: #{tpu_custom_call.1} parent=39 // pred_region
        %p6068 = scmp.lt.s32.totalorder %s22, 2
        %s6069 = scalar_select %p6068, %s22, 2
        %s6070 = smul.addr %s6069, 42
        %s6071 = smul.addr %s6070, 8
        %s6072 = scalar_lea.vmem %s4, %s6071
      $region44: #{tpu_custom_call.1} parent=39 // pred_fallthru
        _
    $region40: #{tpu_custom_call.1} parent=5 // pred_fallthru
      _
  $region6: #{tpu_custom_call.1} parent=0 // loop_footer
    %s20 = sadd.s32 1, %s16
  $region7: #{tpu_custom_call.1} parent=0 // loop_footer_branch
    %15 = sbr.rel target = $region3
  $region8: #{tpu_custom_call.1} parent=0 // loop_exit
    _

</llo_original>
